<compile_context>
chip_gen: v6e
topology: v6e:2x2x1
jax: 0.10.0
libtpu: 0.0.40
codegen_flags: <defaults>
</compile_context>

<pallas_src>
import numpy as np
import jax
import jax.numpy as jnp
from jax.experimental import pallas as pl
from jax.experimental.pallas import tpu as pltpu

# Match kernel / reference matmul precision (f32 everywhere).
jax.config.update("jax_default_matmul_precision", "highest")

# ---------------- configuration (small, deterministic) ----------------
N, C_IN, T, H, W = 2, 64, 4, 8, 8
POOL_KH = POOL_KW = 2                  # AvgPool3d kernel (1,2,2), stride (1,2,2)
H_P, W_P = H // POOL_KH, W // POOL_KW
HW, HW_P = H * W, H_P * W_P
THW, THW_P = T * HW, T * HW_P
NUM_CLASSES = 128                      # lane-dense output (multiple of 128)
DROPOUT_P = 0.5                        # eval mode -> identity


# ---------------- Pallas kernel ----------------
def head_kernel(x_ref, pool_ref, w_ref, b_ref, o_ref):
    # x_ref   : (1, THW, C_IN)       all timesteps of one batch, channels-last
    # pool_ref: (THW_P, THW)         block-diagonal 2x2 average-pooling matrix (lane-dense)
    # w_ref   : (C_IN, NUM_CLASSES)
    # b_ref   : (1, NUM_CLASSES)
    # o_ref   : (1, 1, NUM_CLASSES)  per-batch output row
    x = x_ref[0]                                                        # (THW, C_IN) = (256, 64)

    # Dropout: identity in eval mode.
    # TODO(synk): training-mode stochastic dropout (pltpu.prng_seed / prng_random_bits) not implemented.

    # Projection first (pool and Linear commute): one big MXU matmul, M = T*HW = 256.
    logits_full = jnp.dot(x, w_ref[...],
                          preferred_element_type=jnp.float32)           # (256, 128)

    # AvgPool3d((1,2,2)) over every timestep as one block-diagonal MXU matmul (K = 256).
    # Each pool row's weights sum to 1, so the bias can be added after pooling.
    logits = jnp.dot(pool_ref[...], logits_full,
                     preferred_element_type=jnp.float32) + b_ref[...]   # (THW_P, 128) = (64, 128)

    # Softmax over the class (lane) axis; divide via EUP reciprocal.
    m = jnp.max(logits, axis=-1, keepdims=True)
    e = jnp.exp(logits - m)
    probs = e * pl.reciprocal(jnp.sum(e, axis=-1, keepdims=True), approx=False)

    # Global spatio-temporal average (AdaptiveAvgPool3d(1)) over all T*HW_P positions + flatten.
    o_ref[0] = (jnp.sum(probs, axis=0, keepdims=True)
                * (1.0 / THW_P)).astype(o_ref.dtype)


# ---------------- forward pass ----------------
def resnet_basic_head(x_ncdhw, proj_w, proj_b):
    # NCDHW -> channels-last, flatten all T*H*W positions per batch.
    # TODO(synk): at production sizes this layout change should be fused into the producing
    # layer (it is an extra HBM round-trip of x); negligible at 128 KiB here.
    xt = (jnp.transpose(x_ncdhw, (0, 2, 3, 4, 1))
          .reshape(N, THW, C_IN).astype(jnp.float32))

    # Block-diagonal pooling matrix: row (t*HW_P + r) averages the 2x2 window of output
    # position r within timestep t. Last dim THW = 256 is lane-dense (multiple of 128).
    pmat = np.zeros((THW_P, THW), np.float32)
    for t in range(T):
        for ho in range(H_P):
            for wo in range(W_P):
                r = t * HW_P + ho * W_P + wo
                for dh in range(POOL_KH):
                    for dw in range(POOL_KW):
                        col = t * HW + (POOL_KH * ho + dh) * W + (POOL_KW * wo + dw)
                        pmat[r, col] = 1.0 / (POOL_KH * POOL_KW)
    pmat = jnp.asarray(pmat)

    # torch Linear weight is (out, in) -> transpose once in the wrapper.
    w_mat = jnp.transpose(proj_w).astype(jnp.float32)                   # (C_IN, NUM_CLASSES)
    b_row = proj_b.reshape(1, NUM_CLASSES).astype(jnp.float32)

    out = pl.pallas_call(
        head_kernel,
        out_shape=jax.ShapeDtypeStruct((N, 1, NUM_CLASSES), jnp.float32),
        grid=(N,),
        in_specs=[
            pl.BlockSpec((1, THW, C_IN), lambda n: (n, 0, 0)),
            pl.BlockSpec((THW_P, THW), lambda n: (0, 0)),
            pl.BlockSpec((C_IN, NUM_CLASSES), lambda n: (0, 0)),
            pl.BlockSpec((1, NUM_CLASSES), lambda n: (0, 0)),
        ],
        out_specs=pl.BlockSpec((1, 1, NUM_CLASSES), lambda n: (n, 0, 0)),
        compiler_params=pltpu.CompilerParams(
            dimension_semantics=("parallel",)),
    )(xt, pmat, w_mat, b_row)

    return out.reshape(N, NUM_CLASSES)


# ---------------- pure-JAX reference (correctness check) ----------------
def reference(x, proj_w, proj_b):
    # AvgPool3d((1,2,2), stride (1,2,2))
    y = x.reshape(N, C_IN, T, H_P, POOL_KH, W_P, POOL_KW).mean(axis=(4, 6))
    # dropout (eval) = identity
    # permute -> Linear -> permute back, then Softmax(dim=class)
    y = jnp.transpose(y, (0, 2, 3, 4, 1))            # (N, T, H_P, W_P, C_IN)
    y = y @ proj_w.T + proj_b                        # (N, T, H_P, W_P, NUM_CLASSES)
    y = jax.nn.softmax(y, axis=-1)
    # AdaptiveAvgPool3d(1) + view(N, -1)
    return y.mean(axis=(1, 2, 3))                    # (N, NUM_CLASSES)


if __name__ == "__main__":
    key = jax.random.PRNGKey(0)
    k1, k2, k3 = jax.random.split(key, 3)

    x = jax.random.normal(k1, (N, C_IN, T, H, W), jnp.float32)
    proj_w = 0.1 * jax.random.normal(k2, (NUM_CLASSES, C_IN), jnp.float32)   # torch Linear (out, in)
    proj_b = 0.1 * jax.random.normal(k3, (NUM_CLASSES,), jnp.float32)

    out = resnet_basic_head(x, proj_w, proj_b)
    out = jax.block_until_ready(out)

    ref = reference(x, proj_w, proj_b)
    assert out.shape == (N, NUM_CLASSES), out.shape
    np.testing.assert_allclose(np.asarray(out), np.asarray(ref), rtol=1e-4, atol=1e-5)

    print("KERNEL_OK")
</pallas_src>

<mosaic_0001>
module attributes {stable_mosaic.version = 11 : i64} {
  func.func @head_kernel(%arg0: i32, %arg1: memref<1x256x64xf32, #tpu.memory_space<vmem>>, %arg2: memref<64x256xf32, #tpu.memory_space<vmem>>, %arg3: memref<64x128xf32, #tpu.memory_space<vmem>>, %arg4: memref<1x128xf32, #tpu.memory_space<vmem>>, %arg5: memref<1x1x128xf32, #tpu.memory_space<vmem>>) attributes {dimension_semantics = [#tpu.dimension_semantics<parallel>], iteration_bounds = array<i64: 2>, scalar_prefetch = 0 : i64, scratch_operands = 0 : i64, tpu.core_type = #tpu.core_type<tc>, window_params = [{transform_indices = @transform_0, window_bounds = array<i64: 1, 256, 64>}, {pipeline_mode = #tpu.pipeline_mode<synchronous>, transform_indices = @transform_1, window_bounds = array<i64: 64, 256>}, {pipeline_mode = #tpu.pipeline_mode<synchronous>, transform_indices = @transform_2, window_bounds = array<i64: 64, 128>}, {pipeline_mode = #tpu.pipeline_mode<synchronous>, transform_indices = @transform_3, window_bounds = array<i64: 1, 128>}, {transform_indices = @transform_4, window_bounds = array<i64: 1, 1, 128>}]} {
    %c0 = arith.constant 0 : index
    %c0_0 = arith.constant 0 : index
    %c0_1 = arith.constant 0 : index
    %0 = vector.load %arg1[%c0, %c0_0, %c0_1] : memref<1x256x64xf32, #tpu.memory_space<vmem>>, vector<1x256x64xf32>
    %1 = vector.shape_cast %0 : vector<1x256x64xf32> to vector<256x64xf32>
    %c0_2 = arith.constant 0 : index
    %c0_3 = arith.constant 0 : index
    %2 = vector.load %arg3[%c0_2, %c0_3] : memref<64x128xf32, #tpu.memory_space<vmem>>, vector<64x128xf32>
    %cst = arith.constant dense<0.000000e+00> : vector<256x128xf32>
    %3 = tpu.matmul %1, %2, %cst {dimension_numbers = #tpu.dot_dimension_numbers<[1], [0], [0], [1], [0, 0, 1, 1], [], []>, precision = #tpu.contract_precision<fp32>} : vector<256x64xf32>, vector<64x128xf32>, vector<256x128xf32> -> vector<256x128xf32>
    %c0_4 = arith.constant 0 : index
    %c0_5 = arith.constant 0 : index
    %4 = vector.load %arg2[%c0_4, %c0_5] : memref<64x256xf32, #tpu.memory_space<vmem>>, vector<64x256xf32>
    %cst_6 = arith.constant dense<0.000000e+00> : vector<64x128xf32>
    %5 = tpu.matmul %4, %3, %cst_6 {dimension_numbers = #tpu.dot_dimension_numbers<[1], [0], [0], [1], [0, 0, 1, 1], [], []>, precision = #tpu.contract_precision<fp32>} : vector<64x256xf32>, vector<256x128xf32>, vector<64x128xf32> -> vector<64x128xf32>
    %c0_7 = arith.constant 0 : index
    %c0_8 = arith.constant 0 : index
    %6 = vector.load %arg4[%c0_7, %c0_8] : memref<1x128xf32, #tpu.memory_space<vmem>>, vector<1x128xf32>
    %7 = vector.broadcast %6 : vector<1x128xf32> to vector<64x128xf32>
    %8 = arith.addf %5, %7 : vector<64x128xf32>
    %cst_9 = arith.constant dense<0xFF800000> : vector<64xf32>
    %9 = vector.multi_reduction <maximumf>, %8, %cst_9 [1] : vector<64x128xf32> to vector<64xf32>
    %10 = vector.shape_cast %9 : vector<64xf32> to vector<64x1xf32>
    %11 = vector.broadcast %10 : vector<64x1xf32> to vector<64x128xf32>
    %12 = arith.subf %8, %11 : vector<64x128xf32>
    %13 = math.exp %12 : vector<64x128xf32>
    %cst_10 = arith.constant dense<0.000000e+00> : vector<64xf32>
    %14 = vector.multi_reduction <add>, %13, %cst_10 [1] : vector<64x128xf32> to vector<64xf32>
    %15 = vector.shape_cast %14 : vector<64xf32> to vector<64x1xf32>
    %16 = tpu.reciprocal %15 : vector<64x1xf32> -> vector<64x1xf32>
    %17 = vector.broadcast %16 : vector<64x1xf32> to vector<64x128xf32>
    %18 = arith.mulf %13, %17 : vector<64x128xf32>
    %cst_11 = arith.constant dense<0.000000e+00> : vector<128xf32>
    %19 = vector.multi_reduction <add>, %18, %cst_11 [0] : vector<64x128xf32> to vector<128xf32>
    %20 = vector.shape_cast %19 : vector<128xf32> to vector<1x128xf32>
    %cst_12 = arith.constant 1.562500e-02 : f32
    %21 = vector.broadcast %cst_12 : f32 to vector<1x128xf32>
    %22 = arith.mulf %20, %21 : vector<1x128xf32>
    %c0_13 = arith.constant 0 : index
    %c0_14 = arith.constant 0 : index
    %c0_15 = arith.constant 0 : index
    %23 = vector.load %arg5[%c0_13, %c0_14, %c0_15] : memref<1x1x128xf32, #tpu.memory_space<vmem>>, vector<1x1x128xf32>
    %24 = vector.shape_cast %23 : vector<1x1x128xf32> to vector<1x128xf32>
    %25 = vector.shape_cast %22 : vector<1x128xf32> to vector<1x1x128xf32>
    tpu.vector_store %arg5[%c0_13, %c0_14, %c0_15], %25 {strides = array<i32>} : memref<1x1x128xf32, #tpu.memory_space<vmem>>, vector<1x1x128xf32>,
    return
  }
  func.func @transform_0(%arg0: i32) -> (i32, i32, i32) {
    %c0_i32 = arith.constant 0 : i32
    %c0_i32_0 = arith.constant 0 : i32
    %c0_i32_1 = arith.constant 0 : i32
    return %arg0, %c0_i32, %c0_i32_0 : i32, i32, i32
  }
  func.func @transform_1(%arg0: i32) -> (i32, i32) {
    %c0_i32 = arith.constant 0 : i32
    %c0_i32_0 = arith.constant 0 : i32
    %c0_i32_1 = arith.constant 0 : i32
    return %c0_i32, %c0_i32_0 : i32, i32
  }
  func.func @transform_2(%arg0: i32) -> (i32, i32) {
    %c0_i32 = arith.constant 0 : i32
    %c0_i32_0 = arith.constant 0 : i32
    %c0_i32_1 = arith.constant 0 : i32
    return %c0_i32, %c0_i32_0 : i32, i32
  }
  func.func @transform_3(%arg0: i32) -> (i32, i32) {
    %c0_i32 = arith.constant 0 : i32
    %c0_i32_0 = arith.constant 0 : i32
    %c0_i32_1 = arith.constant 0 : i32
    return %c0_i32, %c0_i32_0 : i32, i32
  }
  func.func @transform_4(%arg0: i32) -> (i32, i32, i32) {
    %c0_i32 = arith.constant 0 : i32
    %c0_i32_0 = arith.constant 0 : i32
    %c0_i32_1 = arith.constant 0 : i32
    return %arg0, %c0_i32, %c0_i32_0 : i32, i32, i32
  }
}

</mosaic_0001>

<llo_original>
// kernel: tpu_custom_call.1
$region0: #{tpu_custom_call.1}
  #allocation0 [shape = 'u32[]', space=smem, size = 0x4, offset = 0x4, fixed_abs, tag = 'smem constant byte address 0x4 - core index']
  #allocation1 [shape = 'u32[144,128]{1,0:T(1,128)}', space=vmem, size = 0x12000, scoped, tag = 'internal scratch']
  %s0 = inlined_call_operand.vmem [shape: f32[2,256,64], index: 0, kind: input, shape index: {}]
  %s1 = inlined_call_operand.vmem [shape: f32[64,256], index: 1, kind: input, shape index: {}]
  %s2 = inlined_call_operand.vmem [shape: f32[64,128], index: 2, kind: input, shape index: {}]
  %s3 = inlined_call_operand.vmem [shape: f32[1,128], index: 3, kind: input, shape index: {}]
  %s4 = inlined_call_operand.hbm [shape: f32[2,1,128], index: 4, kind: output, shape index: {}]
  %s5 = sld [smem:[#allocation0]]
  $region49: #{tpu_custom_call.1} parent=0
    _
  %s7 = ssub.s32 1, %s5
  %s8 = scalar_select 0, %s7, %s5
  $region1: #{tpu_custom_call.1} parent=0
    #allocation2 [shape = 'u8[1024]{0}', space=vmem, size = 0x400, scoped, tag = 'output window, operand 0']
    #allocation3 [shape = 's32[2]{0}', space=sflag, size = 0x8, scoped, tag = 'scoped memory for tpu_custom_call.1']
    %9 = vsyncpa [#allocation3], 0
    %s10 = scalar_lea.sflag [#allocation3], 1
    %11 = vsyncpa %s10, 0
    loop: start=0, step=1, limit=4
    $region2: #{tpu_custom_call.1} parent=1 // loop_pre_header
      _
    $region3: #{tpu_custom_call.1} parent=1 // loop_header
      %s13 = sphi 0, %s17
      %p14 = scmp.ge.s32.totalorder %s13, 4
      %s23 = sphi 0, %s25
      %s26 = sphi 0, %s23
      %s27 = sphi 0, %s26
      %s43 = sphi 0, %s27
      %s47 = sphi 0, %s47
      %s49 = sphi 0, %s47
      %s50 = sphi 0, %s49
      %s64 = sphi 0, %s50
      %s68 = sphi 0, %s68
      %s70 = sphi 0, %s68
      %s71 = sphi 0, %s70
      %s85 = sphi 0, %s71
      %s89 = sphi 0, %s89
      %s91 = sphi 0, %s89
      %s92 = sphi 0, %s91
      %s106 = sphi 0, %s92
      %s112 = sphi 0, %s114
      %s115 = sphi 0, %s112
      %s116 = sphi 0, %s115
      %s132 = sphi 0, %s116
    $region4: #{tpu_custom_call.1} parent=1 // loop_header_branch
      %16 = sbr.rel (%p14) target = $region8
    $region5: #{tpu_custom_call.1} parent=1 // loop_body
      %s18 = ssub.s32 %s13, 1
      %s19 = ssub.s32 %s13, 2
      %s20 = sadd.s32 %s13, 1
      %s21 = ssub.s32 %s13, %s20
      %p22 = scmp.eq.s32.totalorder %s21, 0
      %s24 = sadd.s32 %s23, 1
      %s25 = scalar_select %p22, %s23, %s24
      %p28 = pneg %p22
      %p29 = scmp.eq.s32.totalorder %s13, 1
      %p30 = por %p28, %p29
      %p31 = scmp.ne.s32.totalorder %s23, %s26
      %p32 = scmp.eq.s32.totalorder %s13, 0
      %p33 = por %p31, %p32
      %p34 = scmp.ne.s32.totalorder %s23, %s26
      %p35 = scmp.eq.s32.totalorder %s18, 1
      %p36 = por %p34, %p35
      %p37 = scmp.ne.s32.totalorder %s26, %s27
      %p38 = scmp.eq.s32.totalorder %s18, 0
      %p39 = por %p37, %p38
      %p40 = scmp.ne.s32.totalorder %s26, %s27
      %p41 = scmp.eq.s32.totalorder %s19, 1
      %p42 = por %p40, %p41
      %p44 = scmp.ne.s32.totalorder %s27, %s43
      %p45 = scmp.eq.s32.totalorder %s19, 0
      %p46 = por %p44, %p45
      %s48 = sadd.s32 %s47, 1
      %p51 = scmp.eq.s32.totalorder %s13, 1
      %p52 = scmp.ne.s32.totalorder %s47, %s49
      %p53 = scmp.eq.s32.totalorder %s13, 0
      %p54 = por %p52, %p53
      %p55 = scmp.ne.s32.totalorder %s47, %s49
      %p56 = scmp.eq.s32.totalorder %s18, 1
      %p57 = por %p55, %p56
      %p58 = scmp.ne.s32.totalorder %s49, %s50
      %p59 = scmp.eq.s32.totalorder %s18, 0
      %p60 = por %p58, %p59
      %p61 = scmp.ne.s32.totalorder %s49, %s50
      %p62 = scmp.eq.s32.totalorder %s19, 1
      %p63 = por %p61, %p62
      %p65 = scmp.ne.s32.totalorder %s50, %s64
      %p66 = scmp.eq.s32.totalorder %s19, 0
      %p67 = por %p65, %p66
      %s69 = sadd.s32 %s68, 1
      %p72 = scmp.eq.s32.totalorder %s13, 1
      %p73 = scmp.ne.s32.totalorder %s68, %s70
      %p74 = scmp.eq.s32.totalorder %s13, 0
      %p75 = por %p73, %p74
      %p76 = scmp.ne.s32.totalorder %s68, %s70
      %p77 = scmp.eq.s32.totalorder %s18, 1
      %p78 = por %p76, %p77
      %p79 = scmp.ne.s32.totalorder %s70, %s71
      %p80 = scmp.eq.s32.totalorder %s18, 0
      %p81 = por %p79, %p80
      %p82 = scmp.ne.s32.totalorder %s70, %s71
      %p83 = scmp.eq.s32.totalorder %s19, 1
      %p84 = por %p82, %p83
      %p86 = scmp.ne.s32.totalorder %s71, %s85
      %p87 = scmp.eq.s32.totalorder %s19, 0
      %p88 = por %p86, %p87
      %s90 = sadd.s32 %s89, 1
      %p93 = scmp.eq.s32.totalorder %s13, 1
      %p94 = scmp.ne.s32.totalorder %s89, %s91
      %p95 = scmp.eq.s32.totalorder %s13, 0
      %p96 = por %p94, %p95
      %p97 = scmp.ne.s32.totalorder %s89, %s91
      %p98 = scmp.eq.s32.totalorder %s18, 1
      %p99 = por %p97, %p98
      %p100 = scmp.ne.s32.totalorder %s91, %s92
      %p101 = scmp.eq.s32.totalorder %s18, 0
      %p102 = por %p100, %p101
      %p103 = scmp.ne.s32.totalorder %s91, %s92
      %p104 = scmp.eq.s32.totalorder %s19, 1
      %p105 = por %p103, %p104
      %p107 = scmp.ne.s32.totalorder %s92, %s106
      %p108 = scmp.eq.s32.totalorder %s19, 0
      %p109 = por %p107, %p108
      %s110 = ssub.s32 %s13, %s20
      %p111 = scmp.eq.s32.totalorder %s110, 0
      %s113 = sadd.s32 %s112, 1
      %s114 = scalar_select %p111, %s112, %s113
      %p117 = pneg %p111
      %p118 = scmp.eq.s32.totalorder %s13, 1
      %p119 = por %p117, %p118
      %p120 = scmp.ne.s32.totalorder %s112, %s115
      %p121 = scmp.eq.s32.totalorder %s13, 0
      %p122 = por %p120, %p121
      %p123 = scmp.ne.s32.totalorder %s112, %s115
      %p124 = scmp.eq.s32.totalorder %s18, 1
      %p125 = por %p123, %p124
      %p126 = scmp.ne.s32.totalorder %s115, %s116
      %p127 = scmp.eq.s32.totalorder %s18, 0
      %p128 = por %p126, %p127
      %p129 = scmp.ne.s32.totalorder %s115, %s116
      %p130 = scmp.eq.s32.totalorder %s19, 1
      %p131 = por %p129, %p130
      %p133 = scmp.ne.s32.totalorder %s116, %s132
      %p134 = scmp.eq.s32.totalorder %s19, 0
      %p135 = por %p133, %p134
      %p136 = scmp.le.s32.totalorder 1, %s13
      %p137 = scmp.lt.s32.totalorder %s13, 3
      %p138 = pnand %p136, %p137
      %p139 = pneg %p138
      // Predicated region
      $region9: #{tpu_custom_call.1} parent=5 // pred_check
        _
      $region10: #{tpu_custom_call.1} parent=5 // pred_check_branch
        %141 = sbr.rel (%p138) target = $region12
      $region11: #{tpu_custom_call.1} parent=5 // pred_region
        %s142 = ssub.s32 %s13, 1
        // Predicated region
        $region13: #{tpu_custom_call.1} parent=11 // pred_check
          %p143 = pneg %p60
        $region14: #{tpu_custom_call.1} parent=11 // pred_check_branch
          %145 = sbr.rel (%p143) target = $region16
        $region15: #{tpu_custom_call.1} parent=11 // pred_region
          _
        $region16: #{tpu_custom_call.1} parent=11 // pred_fallthru
          _
        // Predicated region
        $region17: #{tpu_custom_call.1} parent=11 // pred_check
          %p146 = pneg %p81
        $region18: #{tpu_custom_call.1} parent=11 // pred_check_branch
          %148 = sbr.rel (%p146) target = $region20
        $region19: #{tpu_custom_call.1} parent=11 // pred_region
          _
        $region20: #{tpu_custom_call.1} parent=11 // pred_fallthru
          _
        // Predicated region
        $region21: #{tpu_custom_call.1} parent=11 // pred_check
          %p149 = pneg %p102
        $region22: #{tpu_custom_call.1} parent=11 // pred_check_branch
          %151 = sbr.rel (%p149) target = $region24
        $region23: #{tpu_custom_call.1} parent=11 // pred_region
          _
        $region24: #{tpu_custom_call.1} parent=11 // pred_fallthru
          _
      $region12: #{tpu_custom_call.1} parent=5 // pred_fallthru
        _
      %p152 = scmp.lt.s32.totalorder %s13, 2
      // Predicated region
      $region25: #{tpu_custom_call.1} parent=5 // pred_check
        %p153 = pneg %p152
      $region26: #{tpu_custom_call.1} parent=5 // pred_check_branch
        %155 = sbr.rel (%p153) target = $region28
      $region27: #{tpu_custom_call.1} parent=5 // pred_region
        // Predicated region
        $region29: #{tpu_custom_call.1} parent=27 // pred_check
          %p156 = pneg %p33
        $region30: #{tpu_custom_call.1} parent=27 // pred_check_branch
          %158 = sbr.rel (%p156) target = $region32
        $region31: #{tpu_custom_call.1} parent=27 // pred_region
          %p159 = scmp.lt.s32.totalorder %s13, 1
          %s160 = scalar_select %p159, %s13, 1
          %s161 = smul.addr %s160, 32
          %s162 = smul.addr %s161, 8
          %s163 = scalar_lea.vmem %s0, %s162
        $region32: #{tpu_custom_call.1} parent=27 // pred_fallthru
          _
      $region28: #{tpu_custom_call.1} parent=5 // pred_fallthru
        _
      %p164 = scmp.le.s32.totalorder 1, %s13
      %p165 = scmp.lt.s32.totalorder %s13, 3
      %p166 = pnand %p164, %p165
      %p167 = pneg %p166
      // Predicated region
      $region33: #{tpu_custom_call.1} parent=5 // pred_check
        _
      $region34: #{tpu_custom_call.1} parent=5 // pred_check_branch
        %169 = sbr.rel (%p166) target = $region36
      $region35: #{tpu_custom_call.1} parent=5 // pred_region
        %s170 = ssub.s32 %s13, 1
        %p171 = scmp.lt.s32.totalorder %s18, 1
        %s172 = scalar_select %p171, %s18, 1
        %s173 = smul.addr %s172, 32
        %s174 = smul.addr %s173, 8
        %s175 = scalar_lea.vmem %s0, %s174
        %p176 = pneg %p39
        %p177 = pneg %p36
        %p178 = pneg %p60
        %p179 = pneg %p57
        %p180 = pneg %p81
        %p181 = pneg %p78
        %p182 = pneg %p102
        %p183 = pneg %p99
        %p184 = pneg %p128
        %p185 = pneg %p125
        %s186 = sand.u32 %s115, 1
        %s187 = scalar_lea.sflag [#allocation3], %s186
        %s188 = sand.u32 %s115, 1
        %s189 = scalar_lea.vmem [#allocation2], %s188
        %p190 = scmp.lt.s32.totalorder %s18, 1
        %s191 = scalar_select %p190, %s18, 1
        %s192 = smul.addr %s191, 32
        %s193 = smul.addr %s192, 8
        %s194 = scalar_lea.vmem %s0, %s193
        %v195 = vld [vmem:[%s194] sm:$0xff]
        %v196 = vld [vmem:[%s194 + $0x8] sm:$0xff]
        %v197 = vld [vmem:[%s194 + $0x10] sm:$0xff]
        %v198 = vld [vmem:[%s194 + $0x18] sm:$0xff]
        %v199 = vld [vmem:[%s194 + $0x20] sm:$0xff]
        %v200 = vld [vmem:[%s194 + $0x28] sm:$0xff]
        %v201 = vld [vmem:[%s194 + $0x30] sm:$0xff]
        %v202 = vld [vmem:[%s194 + $0x38] sm:$0xff]
        %v203 = vld [vmem:[%s194 + $0x40] sm:$0xff]
        %v204 = vld [vmem:[%s194 + $0x48] sm:$0xff]
        %v205 = vld [vmem:[%s194 + $0x50] sm:$0xff]
        %v206 = vld [vmem:[%s194 + $0x58] sm:$0xff]
        %v207 = vld [vmem:[%s194 + $0x60] sm:$0xff]
        %v208 = vld [vmem:[%s194 + $0x68] sm:$0xff]
        %v209 = vld [vmem:[%s194 + $0x70] sm:$0xff]
        %v210 = vld [vmem:[%s194 + $0x78] sm:$0xff]
        %v211 = vld [vmem:[%s194 + $0x80] sm:$0xff]
        %v212 = vld [vmem:[%s194 + $0x88] sm:$0xff]
        %v213 = vld [vmem:[%s194 + $0x90] sm:$0xff]
        %v214 = vld [vmem:[%s194 + $0x98] sm:$0xff]
        %v215 = vld [vmem:[%s194 + $0xa0] sm:$0xff]
        %v216 = vld [vmem:[%s194 + $0xa8] sm:$0xff]
        %v217 = vld [vmem:[%s194 + $0xb0] sm:$0xff]
        %v218 = vld [vmem:[%s194 + $0xb8] sm:$0xff]
        %v219 = vld [vmem:[%s194 + $0xc0] sm:$0xff]
        %v220 = vld [vmem:[%s194 + $0xc8] sm:$0xff]
        %v221 = vld [vmem:[%s194 + $0xd0] sm:$0xff]
        %v222 = vld [vmem:[%s194 + $0xd8] sm:$0xff]
        %v223 = vld [vmem:[%s194 + $0xe0] sm:$0xff]
        %v224 = vld [vmem:[%s194 + $0xe8] sm:$0xff]
        %v225 = vld [vmem:[%s194 + $0xf0] sm:$0xff]
        %v226 = vld [vmem:[%s194 + $0xf8] sm:$0xff]
        %v227 = vld [vmem:[%s2] sm:$0xff]
        %v228 = vld [vmem:[%s2 + $0x8] sm:$0xff]
        %v229 = vld [vmem:[%s2 + $0x10] sm:$0xff]
        %v230 = vld [vmem:[%s2 + $0x18] sm:$0xff]
        %v231 = vld [vmem:[%s2 + $0x20] sm:$0xff]
        %v232 = vld [vmem:[%s2 + $0x28] sm:$0xff]
        %v233 = vld [vmem:[%s2 + $0x30] sm:$0xff]
        %v234 = vld [vmem:[%s2 + $0x38] sm:$0xff]
        %vm235 = vcmask 523264
        %v237 = vsel %vm235, %v195, 0
        %v240 = vsel %vm235, %v196, 0
        %v243 = vsel %vm235, %v197, 0
        %v246 = vsel %vm235, %v198, 0
        %v249 = vsel %vm235, %v199, 0
        %v252 = vsel %vm235, %v200, 0
        %v255 = vsel %vm235, %v201, 0
        %v258 = vsel %vm235, %v202, 0
        %v261 = vsel %vm235, %v203, 0
        %v264 = vsel %vm235, %v204, 0
        %v267 = vsel %vm235, %v205, 0
        %v270 = vsel %vm235, %v206, 0
        %v273 = vsel %vm235, %v207, 0
        %v276 = vsel %vm235, %v208, 0
        %v279 = vsel %vm235, %v209, 0
        %v282 = vsel %vm235, %v210, 0
        %v285 = vsel %vm235, %v211, 0
        %v288 = vsel %vm235, %v212, 0
        %v291 = vsel %vm235, %v213, 0
        %v294 = vsel %vm235, %v214, 0
        %v297 = vsel %vm235, %v215, 0
        %v300 = vsel %vm235, %v216, 0
        %v303 = vsel %vm235, %v217, 0
        %v306 = vsel %vm235, %v218, 0
        %v309 = vsel %vm235, %v219, 0
        %v312 = vsel %vm235, %v220, 0
        %v315 = vsel %vm235, %v221, 0
        %v318 = vsel %vm235, %v222, 0
        %v321 = vsel %vm235, %v223, 0
        %v324 = vsel %vm235, %v224, 0
        %v327 = vsel %vm235, %v225, 0
        %v330 = vsel %vm235, %v226, 0
        %332 = vmatprep.subr.mxu0 0.0
        %333 = vmatpush1.msra.mxu0 0.0
        %334 = vmatprep.subr.mxu0 0.0
        %335 = vmatpush1.msra.mxu0 0.0
        %336 = vmatprep.subr.mxu0 0.0
        %337 = vmatpush1.msra.mxu0 0.0
        %338 = vmatprep.subr.mxu0 0.0
        %339 = vmatpush1.msra.mxu0 0.0
        %340 = vmatprep.subr.mxu0 0.0
        %341 = vmatpush1.msra.mxu0 0.0
        %342 = vmatprep.subr.mxu0 0.0
        %343 = vmatpush1.msra.mxu0 0.0
        %344 = vmatprep.subr.mxu0 0.0
        %345 = vmatpush1.msra.mxu0 0.0
        %346 = vmatprep.subr.mxu0 0.0
        %347 = vmatpush1.msra.mxu0 0.0
        %348 = vmatprep.subr.mxu0 0.0
        %v349 = vand.u32 %v234, 4294901760
        %350 = vmatpush1.msra.mxu0 %v349
        %351 = vmatprep.subr.mxu0 0.0
        %v352 = vand.u32 %v233, 4294901760
        %353 = vmatpush1.msra.mxu0 %v352
        %354 = vmatprep.subr.mxu0 0.0
        %v355 = vand.u32 %v232, 4294901760
        %356 = vmatpush1.msra.mxu0 %v355
        %357 = vmatprep.subr.mxu0 0.0
        %v358 = vand.u32 %v231, 4294901760
        %359 = vmatpush1.msra.mxu0 %v358
        %360 = vmatprep.subr.mxu0 0.0
        %v361 = vand.u32 %v230, 4294901760
        %362 = vmatpush1.msra.mxu0 %v361
        %363 = vmatprep.subr.mxu0 0.0
        %v364 = vand.u32 %v229, 4294901760
        %365 = vmatpush1.msra.mxu0 %v364
        %366 = vmatprep.subr.mxu0 0.0
        %v367 = vand.u32 %v228, 4294901760
        %368 = vmatpush1.msra.mxu0 %v367
        %369 = vmatprep.subr.mxu0 0.0
        %v370 = vand.u32 %v227, 4294901760
        %371 = vmatpush1.msra.mxu0 %v370
        %372 = vmatprep.subr.mxu0 0.0
        %373 = vmatpush2.msra.mxu0 0.0
        %374 = vmatprep.subr.mxu0 0.0
        %375 = vmatpush2.msra.mxu0 0.0
        %376 = vmatprep.subr.mxu0 0.0
        %377 = vmatpush2.msra.mxu0 0.0
        %378 = vmatprep.subr.mxu0 0.0
        %379 = vmatpush2.msra.mxu0 0.0
        %380 = vmatprep.subr.mxu0 0.0
        %381 = vmatpush2.msra.mxu0 0.0
        %382 = vmatprep.subr.mxu0 0.0
        %383 = vmatpush2.msra.mxu0 0.0
        %384 = vmatprep.subr.mxu0 0.0
        %385 = vmatpush2.msra.mxu0 0.0
        %386 = vmatprep.subr.mxu0 0.0
        %387 = vmatpush2.msra.mxu0 0.0
        %388 = vmatprep.subr.mxu0 0.0
        %389 = vmatpush2.msra.mxu0 0.0
        %390 = vmatprep.subr.mxu0 0.0
        %391 = vmatpush2.msra.mxu0 0.0
        %392 = vmatprep.subr.mxu0 0.0
        %393 = vmatpush2.msra.mxu0 0.0
        %394 = vmatprep.subr.mxu0 0.0
        %395 = vmatpush2.msra.mxu0 0.0
        %396 = vmatprep.subr.mxu0 0.0
        %397 = vmatpush2.msra.mxu0 0.0
        %398 = vmatprep.subr.mxu0 0.0
        %399 = vmatpush2.msra.mxu0 0.0
        %400 = vmatprep.subr.mxu0 0.0
        %401 = vmatpush2.msra.mxu0 0.0
        %402 = vmatprep.subr.mxu0 0.0
        %403 = vmatpush2.msra.mxu0 0.0
        %404 = vmatprep.mubr.f32.mxu0 0.0
        %v405 = vand.u32 %v237, 4294901760
        %v406 = vsub.f32 %v237, %v405
        %v407 = vand.u32 %v406, 4294901760
        %v408 = vsub.f32 %v406, %v407
        %v409 = vand.u32 %v408, 4294901760
        %410 = vmatmul.mubr.f32.gmra.mxu0 %v409
        %v411 = vpop.f32.mrf.mxu0
        %v412 = vadd.f32 0.0, %v411
        %v413 = vpop.f32.mrf.mxu0
        %414 = vmatprep.mubr.f32.mxu0 0.0
        %v415 = vand.u32 %v240, 4294901760
        %v416 = vsub.f32 %v240, %v415
        %v417 = vand.u32 %v416, 4294901760
        %v418 = vsub.f32 %v416, %v417
        %v419 = vand.u32 %v418, 4294901760
        %420 = vmatmul.mubr.f32.gmra.mxu0 %v419
        %v421 = vpop.f32.mrf.mxu0
        %v422 = vadd.f32 0.0, %v421
        %v423 = vpop.f32.mrf.mxu0
        %424 = vmatprep.mubr.f32.mxu0 0.0
        %v425 = vand.u32 %v243, 4294901760
        %v426 = vsub.f32 %v243, %v425
        %v427 = vand.u32 %v426, 4294901760
        %v428 = vsub.f32 %v426, %v427
        %v429 = vand.u32 %v428, 4294901760
        %430 = vmatmul.mubr.f32.gmra.mxu0 %v429
        %v431 = vpop.f32.mrf.mxu0
        %v432 = vadd.f32 0.0, %v431
        %v433 = vpop.f32.mrf.mxu0
        %434 = vmatprep.mubr.f32.mxu0 0.0
        %v435 = vand.u32 %v246, 4294901760
        %v436 = vsub.f32 %v246, %v435
        %v437 = vand.u32 %v436, 4294901760
        %v438 = vsub.f32 %v436, %v437
        %v439 = vand.u32 %v438, 4294901760
        %440 = vmatmul.mubr.f32.gmra.mxu0 %v439
        %v441 = vpop.f32.mrf.mxu0
        %v442 = vadd.f32 0.0, %v441
        %v443 = vpop.f32.mrf.mxu0
        %444 = vmatprep.mubr.f32.mxu0 0.0
        %v445 = vand.u32 %v249, 4294901760
        %v446 = vsub.f32 %v249, %v445
        %v447 = vand.u32 %v446, 4294901760
        %v448 = vsub.f32 %v446, %v447
        %v449 = vand.u32 %v448, 4294901760
        %450 = vmatmul.mubr.f32.gmra.mxu0 %v449
        %v451 = vpop.f32.mrf.mxu0
        %v452 = vadd.f32 0.0, %v451
        %v453 = vpop.f32.mrf.mxu0
        %454 = vmatprep.mubr.f32.mxu0 0.0
        %v455 = vand.u32 %v252, 4294901760
        %v456 = vsub.f32 %v252, %v455
        %v457 = vand.u32 %v456, 4294901760
        %v458 = vsub.f32 %v456, %v457
        %v459 = vand.u32 %v458, 4294901760
        %460 = vmatmul.mubr.f32.gmra.mxu0 %v459
        %v461 = vpop.f32.mrf.mxu0
        %v462 = vadd.f32 0.0, %v461
        %v463 = vpop.f32.mrf.mxu0
        %464 = vmatprep.mubr.f32.mxu0 0.0
        %v465 = vand.u32 %v255, 4294901760
        %v466 = vsub.f32 %v255, %v465
        %v467 = vand.u32 %v466, 4294901760
        %v468 = vsub.f32 %v466, %v467
        %v469 = vand.u32 %v468, 4294901760
        %470 = vmatmul.mubr.f32.gmra.mxu0 %v469
        %v471 = vpop.f32.mrf.mxu0
        %v472 = vadd.f32 0.0, %v471
        %v473 = vpop.f32.mrf.mxu0
        %474 = vmatprep.mubr.f32.mxu0 0.0
        %v475 = vand.u32 %v258, 4294901760
        %v476 = vsub.f32 %v258, %v475
        %v477 = vand.u32 %v476, 4294901760
        %v478 = vsub.f32 %v476, %v477
        %v479 = vand.u32 %v478, 4294901760
        %480 = vmatmul.mubr.f32.gmra.mxu0 %v479
        %v481 = vpop.f32.mrf.mxu0
        %v482 = vadd.f32 0.0, %v481
        %v483 = vpop.f32.mrf.mxu0
        %484 = vmatprep.mubr.f32.mxu0 0.0
        %v485 = vand.u32 %v261, 4294901760
        %v486 = vsub.f32 %v261, %v485
        %v487 = vand.u32 %v486, 4294901760
        %v488 = vsub.f32 %v486, %v487
        %v489 = vand.u32 %v488, 4294901760
        %490 = vmatmul.mubr.f32.gmra.mxu0 %v489
        %v491 = vpop.f32.mrf.mxu0
        %v492 = vadd.f32 0.0, %v491
        %v493 = vpop.f32.mrf.mxu0
        %494 = vmatprep.mubr.f32.mxu0 0.0
        %v495 = vand.u32 %v264, 4294901760
        %v496 = vsub.f32 %v264, %v495
        %v497 = vand.u32 %v496, 4294901760
        %v498 = vsub.f32 %v496, %v497
        %v499 = vand.u32 %v498, 4294901760
        %500 = vmatmul.mubr.f32.gmra.mxu0 %v499
        %v501 = vpop.f32.mrf.mxu0
        %v502 = vadd.f32 0.0, %v501
        %v503 = vpop.f32.mrf.mxu0
        %504 = vmatprep.mubr.f32.mxu0 0.0
        %v505 = vand.u32 %v267, 4294901760
        %v506 = vsub.f32 %v267, %v505
        %v507 = vand.u32 %v506, 4294901760
        %v508 = vsub.f32 %v506, %v507
        %v509 = vand.u32 %v508, 4294901760
        %510 = vmatmul.mubr.f32.gmra.mxu0 %v509
        %v511 = vpop.f32.mrf.mxu0
        %v512 = vadd.f32 0.0, %v511
        %v513 = vpop.f32.mrf.mxu0
        %514 = vmatprep.mubr.f32.mxu0 0.0
        %v515 = vand.u32 %v270, 4294901760
        %v516 = vsub.f32 %v270, %v515
        %v517 = vand.u32 %v516, 4294901760
        %v518 = vsub.f32 %v516, %v517
        %v519 = vand.u32 %v518, 4294901760
        %520 = vmatmul.mubr.f32.gmra.mxu0 %v519
        %v521 = vpop.f32.mrf.mxu0
        %v522 = vadd.f32 0.0, %v521
        %v523 = vpop.f32.mrf.mxu0
        %524 = vmatprep.mubr.f32.mxu0 0.0
        %v525 = vand.u32 %v273, 4294901760
        %v526 = vsub.f32 %v273, %v525
        %v527 = vand.u32 %v526, 4294901760
        %v528 = vsub.f32 %v526, %v527
        %v529 = vand.u32 %v528, 4294901760
        %530 = vmatmul.mubr.f32.gmra.mxu0 %v529
        %v531 = vpop.f32.mrf.mxu0
        %v532 = vadd.f32 0.0, %v531
        %v533 = vpop.f32.mrf.mxu0
        %534 = vmatprep.mubr.f32.mxu0 0.0
        %v535 = vand.u32 %v276, 4294901760
        %v536 = vsub.f32 %v276, %v535
        %v537 = vand.u32 %v536, 4294901760
        %v538 = vsub.f32 %v536, %v537
        %v539 = vand.u32 %v538, 4294901760
        %540 = vmatmul.mubr.f32.gmra.mxu0 %v539
        %v541 = vpop.f32.mrf.mxu0
        %v542 = vadd.f32 0.0, %v541
        %v543 = vpop.f32.mrf.mxu0
        %544 = vmatprep.mubr.f32.mxu0 0.0
        %v545 = vand.u32 %v279, 4294901760
        %v546 = vsub.f32 %v279, %v545
        %v547 = vand.u32 %v546, 4294901760
        %v548 = vsub.f32 %v546, %v547
        %v549 = vand.u32 %v548, 4294901760
        %550 = vmatmul.mubr.f32.gmra.mxu0 %v549
        %v551 = vpop.f32.mrf.mxu0
        %v552 = vadd.f32 0.0, %v551
        %v553 = vpop.f32.mrf.mxu0
        %554 = vmatprep.mubr.f32.mxu0 0.0
        %v555 = vand.u32 %v282, 4294901760
        %v556 = vsub.f32 %v282, %v555
        %v557 = vand.u32 %v556, 4294901760
        %v558 = vsub.f32 %v556, %v557
        %v559 = vand.u32 %v558, 4294901760
        %560 = vmatmul.mubr.f32.gmra.mxu0 %v559
        %v561 = vpop.f32.mrf.mxu0
        %v562 = vadd.f32 0.0, %v561
        %v563 = vpop.f32.mrf.mxu0
        %564 = vmatprep.mubr.f32.mxu0 0.0
        %v565 = vand.u32 %v285, 4294901760
        %v566 = vsub.f32 %v285, %v565
        %v567 = vand.u32 %v566, 4294901760
        %v568 = vsub.f32 %v566, %v567
        %v569 = vand.u32 %v568, 4294901760
        %570 = vmatmul.mubr.f32.gmra.mxu0 %v569
        %v571 = vpop.f32.mrf.mxu0
        %v572 = vadd.f32 0.0, %v571
        %v573 = vpop.f32.mrf.mxu0
        %574 = vmatprep.mubr.f32.mxu0 0.0
        %v575 = vand.u32 %v288, 4294901760
        %v576 = vsub.f32 %v288, %v575
        %v577 = vand.u32 %v576, 4294901760
        %v578 = vsub.f32 %v576, %v577
        %v579 = vand.u32 %v578, 4294901760
        %580 = vmatmul.mubr.f32.gmra.mxu0 %v579
        %v581 = vpop.f32.mrf.mxu0
        %v582 = vadd.f32 0.0, %v581
        %v583 = vpop.f32.mrf.mxu0
        %584 = vmatprep.mubr.f32.mxu0 0.0
        %v585 = vand.u32 %v291, 4294901760
        %v586 = vsub.f32 %v291, %v585
        %v587 = vand.u32 %v586, 4294901760
        %v588 = vsub.f32 %v586, %v587
        %v589 = vand.u32 %v588, 4294901760
        %590 = vmatmul.mubr.f32.gmra.mxu0 %v589
        %v591 = vpop.f32.mrf.mxu0
        %v592 = vadd.f32 0.0, %v591
        %v593 = vpop.f32.mrf.mxu0
        %594 = vmatprep.mubr.f32.mxu0 0.0
        %v595 = vand.u32 %v294, 4294901760
        %v596 = vsub.f32 %v294, %v595
        %v597 = vand.u32 %v596, 4294901760
        %v598 = vsub.f32 %v596, %v597
        %v599 = vand.u32 %v598, 4294901760
        %600 = vmatmul.mubr.f32.gmra.mxu0 %v599
        %v601 = vpop.f32.mrf.mxu0
        %v602 = vadd.f32 0.0, %v601
        %v603 = vpop.f32.mrf.mxu0
        %604 = vmatprep.mubr.f32.mxu0 0.0
        %v605 = vand.u32 %v297, 4294901760
        %v606 = vsub.f32 %v297, %v605
        %v607 = vand.u32 %v606, 4294901760
        %v608 = vsub.f32 %v606, %v607
        %v609 = vand.u32 %v608, 4294901760
        %610 = vmatmul.mubr.f32.gmra.mxu0 %v609
        %v611 = vpop.f32.mrf.mxu0
        %v612 = vadd.f32 0.0, %v611
        %v613 = vpop.f32.mrf.mxu0
        %614 = vmatprep.mubr.f32.mxu0 0.0
        %v615 = vand.u32 %v300, 4294901760
        %v616 = vsub.f32 %v300, %v615
        %v617 = vand.u32 %v616, 4294901760
        %v618 = vsub.f32 %v616, %v617
        %v619 = vand.u32 %v618, 4294901760
        %620 = vmatmul.mubr.f32.gmra.mxu0 %v619
        %v621 = vpop.f32.mrf.mxu0
        %v622 = vadd.f32 0.0, %v621
        %v623 = vpop.f32.mrf.mxu0
        %624 = vmatprep.mubr.f32.mxu0 0.0
        %v625 = vand.u32 %v303, 4294901760
        %v626 = vsub.f32 %v303, %v625
        %v627 = vand.u32 %v626, 4294901760
        %v628 = vsub.f32 %v626, %v627
        %v629 = vand.u32 %v628, 4294901760
        %630 = vmatmul.mubr.f32.gmra.mxu0 %v629
        %v631 = vpop.f32.mrf.mxu0
        %v632 = vadd.f32 0.0, %v631
        %v633 = vpop.f32.mrf.mxu0
        %634 = vmatprep.mubr.f32.mxu0 0.0
        %v635 = vand.u32 %v306, 4294901760
        %v636 = vsub.f32 %v306, %v635
        %v637 = vand.u32 %v636, 4294901760
        %v638 = vsub.f32 %v636, %v637
        %v639 = vand.u32 %v638, 4294901760
        %640 = vmatmul.mubr.f32.gmra.mxu0 %v639
        %v641 = vpop.f32.mrf.mxu0
        %v642 = vadd.f32 0.0, %v641
        %v643 = vpop.f32.mrf.mxu0
        %644 = vmatprep.mubr.f32.mxu0 0.0
        %v645 = vand.u32 %v309, 4294901760
        %v646 = vsub.f32 %v309, %v645
        %v647 = vand.u32 %v646, 4294901760
        %v648 = vsub.f32 %v646, %v647
        %v649 = vand.u32 %v648, 4294901760
        %650 = vmatmul.mubr.f32.gmra.mxu0 %v649
        %v651 = vpop.f32.mrf.mxu0
        %v652 = vadd.f32 0.0, %v651
        %v653 = vpop.f32.mrf.mxu0
        %654 = vmatprep.mubr.f32.mxu0 0.0
        %v655 = vand.u32 %v312, 4294901760
        %v656 = vsub.f32 %v312, %v655
        %v657 = vand.u32 %v656, 4294901760
        %v658 = vsub.f32 %v656, %v657
        %v659 = vand.u32 %v658, 4294901760
        %660 = vmatmul.mubr.f32.gmra.mxu0 %v659
        %v661 = vpop.f32.mrf.mxu0
        %v662 = vadd.f32 0.0, %v661
        %v663 = vpop.f32.mrf.mxu0
        %664 = vmatprep.mubr.f32.mxu0 0.0
        %v665 = vand.u32 %v315, 4294901760
        %v666 = vsub.f32 %v315, %v665
        %v667 = vand.u32 %v666, 4294901760
        %v668 = vsub.f32 %v666, %v667
        %v669 = vand.u32 %v668, 4294901760
        %670 = vmatmul.mubr.f32.gmra.mxu0 %v669
        %v671 = vpop.f32.mrf.mxu0
        %v672 = vadd.f32 0.0, %v671
        %v673 = vpop.f32.mrf.mxu0
        %674 = vmatprep.mubr.f32.mxu0 0.0
        %v675 = vand.u32 %v318, 4294901760
        %v676 = vsub.f32 %v318, %v675
        %v677 = vand.u32 %v676, 4294901760
        %v678 = vsub.f32 %v676, %v677
        %v679 = vand.u32 %v678, 4294901760
        %680 = vmatmul.mubr.f32.gmra.mxu0 %v679
        %v681 = vpop.f32.mrf.mxu0
        %v682 = vadd.f32 0.0, %v681
        %v683 = vpop.f32.mrf.mxu0
        %684 = vmatprep.mubr.f32.mxu0 0.0
        %v685 = vand.u32 %v321, 4294901760
        %v686 = vsub.f32 %v321, %v685
        %v687 = vand.u32 %v686, 4294901760
        %v688 = vsub.f32 %v686, %v687
        %v689 = vand.u32 %v688, 4294901760
        %690 = vmatmul.mubr.f32.gmra.mxu0 %v689
        %v691 = vpop.f32.mrf.mxu0
        %v692 = vadd.f32 0.0, %v691
        %v693 = vpop.f32.mrf.mxu0
        %694 = vmatprep.mubr.f32.mxu0 0.0
        %v695 = vand.u32 %v324, 4294901760
        %v696 = vsub.f32 %v324, %v695
        %v697 = vand.u32 %v696, 4294901760
        %v698 = vsub.f32 %v696, %v697
        %v699 = vand.u32 %v698, 4294901760
        %700 = vmatmul.mubr.f32.gmra.mxu0 %v699
        %v701 = vpop.f32.mrf.mxu0
        %v702 = vadd.f32 0.0, %v701
        %v703 = vpop.f32.mrf.mxu0
        %704 = vmatprep.mubr.f32.mxu0 0.0
        %v705 = vand.u32 %v327, 4294901760
        %v706 = vsub.f32 %v327, %v705
        %v707 = vand.u32 %v706, 4294901760
        %v708 = vsub.f32 %v706, %v707
        %v709 = vand.u32 %v708, 4294901760
        %710 = vmatmul.mubr.f32.gmra.mxu0 %v709
        %v711 = vpop.f32.mrf.mxu0
        %v712 = vadd.f32 0.0, %v711
        %v713 = vpop.f32.mrf.mxu0
        %714 = vmatprep.mubr.f32.mxu0 0.0
        %v715 = vand.u32 %v330, 4294901760
        %v716 = vsub.f32 %v330, %v715
        %v717 = vand.u32 %v716, 4294901760
        %v718 = vsub.f32 %v716, %v717
        %v719 = vand.u32 %v718, 4294901760
        %720 = vmatmul.mubr.f32.gmra.mxu0 %v719
        %v721 = vpop.f32.mrf.mxu0
        %v722 = vadd.f32 0.0, %v721
        %v723 = vpop.f32.mrf.mxu0
        %724 = vdwg.mxu0
        %725 = vmatprep.subr.mxu0 0.0
        %726 = vmatpush1.msra.mxu0 0.0
        %727 = vmatprep.subr.mxu0 0.0
        %728 = vmatpush1.msra.mxu0 0.0
        %729 = vmatprep.subr.mxu0 0.0
        %730 = vmatpush1.msra.mxu0 0.0
        %731 = vmatprep.subr.mxu0 0.0
        %732 = vmatpush1.msra.mxu0 0.0
        %733 = vmatprep.subr.mxu0 0.0
        %734 = vmatpush1.msra.mxu0 0.0
        %735 = vmatprep.subr.mxu0 0.0
        %736 = vmatpush1.msra.mxu0 0.0
        %737 = vmatprep.subr.mxu0 0.0
        %738 = vmatpush1.msra.mxu0 0.0
        %739 = vmatprep.subr.mxu0 0.0
        %740 = vmatpush1.msra.mxu0 0.0
        %741 = vmatprep.subr.mxu0 0.0
        %v742 = vand.u32 %v234, 4294901760
        %v743 = vsub.f32 %v234, %v742
        %v744 = vand.u32 %v743, 4294901760
        %v745 = vsub.f32 %v743, %v744
        %v746 = vand.u32 %v745, 4294901760
        %747 = vmatpush1.msra.mxu0 %v746
        %748 = vmatprep.subr.mxu0 0.0
        %v749 = vand.u32 %v233, 4294901760
        %v750 = vsub.f32 %v233, %v749
        %v751 = vand.u32 %v750, 4294901760
        %v752 = vsub.f32 %v750, %v751
        %v753 = vand.u32 %v752, 4294901760
        %754 = vmatpush1.msra.mxu0 %v753
        %755 = vmatprep.subr.mxu0 0.0
        %v756 = vand.u32 %v232, 4294901760
        %v757 = vsub.f32 %v232, %v756
        %v758 = vand.u32 %v757, 4294901760
        %v759 = vsub.f32 %v757, %v758
        %v760 = vand.u32 %v759, 4294901760
        %761 = vmatpush1.msra.mxu0 %v760
        %762 = vmatprep.subr.mxu0 0.0
        %v763 = vand.u32 %v231, 4294901760
        %v764 = vsub.f32 %v231, %v763
        %v765 = vand.u32 %v764, 4294901760
        %v766 = vsub.f32 %v764, %v765
        %v767 = vand.u32 %v766, 4294901760
        %768 = vmatpush1.msra.mxu0 %v767
        %769 = vmatprep.subr.mxu0 0.0
        %v770 = vand.u32 %v230, 4294901760
        %v771 = vsub.f32 %v230, %v770
        %v772 = vand.u32 %v771, 4294901760
        %v773 = vsub.f32 %v771, %v772
        %v774 = vand.u32 %v773, 4294901760
        %775 = vmatpush1.msra.mxu0 %v774
        %776 = vmatprep.subr.mxu0 0.0
        %v777 = vand.u32 %v229, 4294901760
        %v778 = vsub.f32 %v229, %v777
        %v779 = vand.u32 %v778, 4294901760
        %v780 = vsub.f32 %v778, %v779
        %v781 = vand.u32 %v780, 4294901760
        %782 = vmatpush1.msra.mxu0 %v781
        %783 = vmatprep.subr.mxu0 0.0
        %v784 = vand.u32 %v228, 4294901760
        %v785 = vsub.f32 %v228, %v784
        %v786 = vand.u32 %v785, 4294901760
        %v787 = vsub.f32 %v785, %v786
        %v788 = vand.u32 %v787, 4294901760
        %789 = vmatpush1.msra.mxu0 %v788
        %790 = vmatprep.subr.mxu0 0.0
        %v791 = vand.u32 %v227, 4294901760
        %v792 = vsub.f32 %v227, %v791
        %v793 = vand.u32 %v792, 4294901760
        %v794 = vsub.f32 %v792, %v793
        %v795 = vand.u32 %v794, 4294901760
        %796 = vmatpush1.msra.mxu0 %v795
        %797 = vmatprep.subr.mxu0 0.0
        %798 = vmatpush2.msra.mxu0 0.0
        %799 = vmatprep.subr.mxu0 0.0
        %800 = vmatpush2.msra.mxu0 0.0
        %801 = vmatprep.subr.mxu0 0.0
        %802 = vmatpush2.msra.mxu0 0.0
        %803 = vmatprep.subr.mxu0 0.0
        %804 = vmatpush2.msra.mxu0 0.0
        %805 = vmatprep.subr.mxu0 0.0
        %806 = vmatpush2.msra.mxu0 0.0
        %807 = vmatprep.subr.mxu0 0.0
        %808 = vmatpush2.msra.mxu0 0.0
        %809 = vmatprep.subr.mxu0 0.0
        %810 = vmatpush2.msra.mxu0 0.0
        %811 = vmatprep.subr.mxu0 0.0
        %812 = vmatpush2.msra.mxu0 0.0
        %813 = vmatprep.subr.mxu0 0.0
        %814 = vmatpush2.msra.mxu0 0.0
        %815 = vmatprep.subr.mxu0 0.0
        %816 = vmatpush2.msra.mxu0 0.0
        %817 = vmatprep.subr.mxu0 0.0
        %818 = vmatpush2.msra.mxu0 0.0
        %819 = vmatprep.subr.mxu0 0.0
        %820 = vmatpush2.msra.mxu0 0.0
        %821 = vmatprep.subr.mxu0 0.0
        %822 = vmatpush2.msra.mxu0 0.0
        %823 = vmatprep.subr.mxu0 0.0
        %824 = vmatpush2.msra.mxu0 0.0
        %825 = vmatprep.subr.mxu0 0.0
        %826 = vmatpush2.msra.mxu0 0.0
        %827 = vmatprep.subr.mxu0 0.0
        %828 = vmatpush2.msra.mxu0 0.0
        %829 = vmatprep.mubr.f32.mxu0 0.0
        %v830 = vand.u32 %v237, 4294901760
        %831 = vmatmul.mubr.f32.gmra.mxu0 %v830
        %v832 = vpop.f32.mrf.mxu0
        %v833 = vadd.f32 %v412, %v832
        %v834 = vpop.f32.mrf.mxu0
        %835 = vmatprep.mubr.f32.mxu0 0.0
        %v836 = vand.u32 %v240, 4294901760
        %837 = vmatmul.mubr.f32.gmra.mxu0 %v836
        %v838 = vpop.f32.mrf.mxu0
        %v839 = vadd.f32 %v422, %v838
        %v840 = vpop.f32.mrf.mxu0
        %841 = vmatprep.mubr.f32.mxu0 0.0
        %v842 = vand.u32 %v243, 4294901760
        %843 = vmatmul.mubr.f32.gmra.mxu0 %v842
        %v844 = vpop.f32.mrf.mxu0
        %v845 = vadd.f32 %v432, %v844
        %v846 = vpop.f32.mrf.mxu0
        %847 = vmatprep.mubr.f32.mxu0 0.0
        %v848 = vand.u32 %v246, 4294901760
        %849 = vmatmul.mubr.f32.gmra.mxu0 %v848
        %v850 = vpop.f32.mrf.mxu0
        %v851 = vadd.f32 %v442, %v850
        %v852 = vpop.f32.mrf.mxu0
        %853 = vmatprep.mubr.f32.mxu0 0.0
        %v854 = vand.u32 %v249, 4294901760
        %855 = vmatmul.mubr.f32.gmra.mxu0 %v854
        %v856 = vpop.f32.mrf.mxu0
        %v857 = vadd.f32 %v452, %v856
        %v858 = vpop.f32.mrf.mxu0
        %859 = vmatprep.mubr.f32.mxu0 0.0
        %v860 = vand.u32 %v252, 4294901760
        %861 = vmatmul.mubr.f32.gmra.mxu0 %v860
        %v862 = vpop.f32.mrf.mxu0
        %v863 = vadd.f32 %v462, %v862
        %v864 = vpop.f32.mrf.mxu0
        %865 = vmatprep.mubr.f32.mxu0 0.0
        %v866 = vand.u32 %v255, 4294901760
        %867 = vmatmul.mubr.f32.gmra.mxu0 %v866
        %v868 = vpop.f32.mrf.mxu0
        %v869 = vadd.f32 %v472, %v868
        %v870 = vpop.f32.mrf.mxu0
        %871 = vmatprep.mubr.f32.mxu0 0.0
        %v872 = vand.u32 %v258, 4294901760
        %873 = vmatmul.mubr.f32.gmra.mxu0 %v872
        %v874 = vpop.f32.mrf.mxu0
        %v875 = vadd.f32 %v482, %v874
        %v876 = vpop.f32.mrf.mxu0
        %877 = vmatprep.mubr.f32.mxu0 0.0
        %v878 = vand.u32 %v261, 4294901760
        %879 = vmatmul.mubr.f32.gmra.mxu0 %v878
        %v880 = vpop.f32.mrf.mxu0
        %v881 = vadd.f32 %v492, %v880
        %v882 = vpop.f32.mrf.mxu0
        %883 = vmatprep.mubr.f32.mxu0 0.0
        %v884 = vand.u32 %v264, 4294901760
        %885 = vmatmul.mubr.f32.gmra.mxu0 %v884
        %v886 = vpop.f32.mrf.mxu0
        %v887 = vadd.f32 %v502, %v886
        %v888 = vpop.f32.mrf.mxu0
        %889 = vmatprep.mubr.f32.mxu0 0.0
        %v890 = vand.u32 %v267, 4294901760
        %891 = vmatmul.mubr.f32.gmra.mxu0 %v890
        %v892 = vpop.f32.mrf.mxu0
        %v893 = vadd.f32 %v512, %v892
        %v894 = vpop.f32.mrf.mxu0
        %895 = vmatprep.mubr.f32.mxu0 0.0
        %v896 = vand.u32 %v270, 4294901760
        %897 = vmatmul.mubr.f32.gmra.mxu0 %v896
        %v898 = vpop.f32.mrf.mxu0
        %v899 = vadd.f32 %v522, %v898
        %v900 = vpop.f32.mrf.mxu0
        %901 = vmatprep.mubr.f32.mxu0 0.0
        %v902 = vand.u32 %v273, 4294901760
        %903 = vmatmul.mubr.f32.gmra.mxu0 %v902
        %v904 = vpop.f32.mrf.mxu0
        %v905 = vadd.f32 %v532, %v904
        %v906 = vpop.f32.mrf.mxu0
        %907 = vmatprep.mubr.f32.mxu0 0.0
        %v908 = vand.u32 %v276, 4294901760
        %909 = vmatmul.mubr.f32.gmra.mxu0 %v908
        %v910 = vpop.f32.mrf.mxu0
        %v911 = vadd.f32 %v542, %v910
        %v912 = vpop.f32.mrf.mxu0
        %913 = vmatprep.mubr.f32.mxu0 0.0
        %v914 = vand.u32 %v279, 4294901760
        %915 = vmatmul.mubr.f32.gmra.mxu0 %v914
        %v916 = vpop.f32.mrf.mxu0
        %v917 = vadd.f32 %v552, %v916
        %v918 = vpop.f32.mrf.mxu0
        %919 = vmatprep.mubr.f32.mxu0 0.0
        %v920 = vand.u32 %v282, 4294901760
        %921 = vmatmul.mubr.f32.gmra.mxu0 %v920
        %v922 = vpop.f32.mrf.mxu0
        %v923 = vadd.f32 %v562, %v922
        %v924 = vpop.f32.mrf.mxu0
        %925 = vmatprep.mubr.f32.mxu0 0.0
        %v926 = vand.u32 %v285, 4294901760
        %927 = vmatmul.mubr.f32.gmra.mxu0 %v926
        %v928 = vpop.f32.mrf.mxu0
        %v929 = vadd.f32 %v572, %v928
        %v930 = vpop.f32.mrf.mxu0
        %931 = vmatprep.mubr.f32.mxu0 0.0
        %v932 = vand.u32 %v288, 4294901760
        %933 = vmatmul.mubr.f32.gmra.mxu0 %v932
        %v934 = vpop.f32.mrf.mxu0
        %v935 = vadd.f32 %v582, %v934
        %v936 = vpop.f32.mrf.mxu0
        %937 = vmatprep.mubr.f32.mxu0 0.0
        %v938 = vand.u32 %v291, 4294901760
        %939 = vmatmul.mubr.f32.gmra.mxu0 %v938
        %v940 = vpop.f32.mrf.mxu0
        %v941 = vadd.f32 %v592, %v940
        %v942 = vpop.f32.mrf.mxu0
        %943 = vmatprep.mubr.f32.mxu0 0.0
        %v944 = vand.u32 %v294, 4294901760
        %945 = vmatmul.mubr.f32.gmra.mxu0 %v944
        %v946 = vpop.f32.mrf.mxu0
        %v947 = vadd.f32 %v602, %v946
        %v948 = vpop.f32.mrf.mxu0
        %949 = vmatprep.mubr.f32.mxu0 0.0
        %v950 = vand.u32 %v297, 4294901760
        %951 = vmatmul.mubr.f32.gmra.mxu0 %v950
        %v952 = vpop.f32.mrf.mxu0
        %v953 = vadd.f32 %v612, %v952
        %v954 = vpop.f32.mrf.mxu0
        %955 = vmatprep.mubr.f32.mxu0 0.0
        %v956 = vand.u32 %v300, 4294901760
        %957 = vmatmul.mubr.f32.gmra.mxu0 %v956
        %v958 = vpop.f32.mrf.mxu0
        %v959 = vadd.f32 %v622, %v958
        %v960 = vpop.f32.mrf.mxu0
        %961 = vmatprep.mubr.f32.mxu0 0.0
        %v962 = vand.u32 %v303, 4294901760
        %963 = vmatmul.mubr.f32.gmra.mxu0 %v962
        %v964 = vpop.f32.mrf.mxu0
        %v965 = vadd.f32 %v632, %v964
        %v966 = vpop.f32.mrf.mxu0
        %967 = vmatprep.mubr.f32.mxu0 0.0
        %v968 = vand.u32 %v306, 4294901760
        %969 = vmatmul.mubr.f32.gmra.mxu0 %v968
        %v970 = vpop.f32.mrf.mxu0
        %v971 = vadd.f32 %v642, %v970
        %v972 = vpop.f32.mrf.mxu0
        %973 = vmatprep.mubr.f32.mxu0 0.0
        %v974 = vand.u32 %v309, 4294901760
        %975 = vmatmul.mubr.f32.gmra.mxu0 %v974
        %v976 = vpop.f32.mrf.mxu0
        %v977 = vadd.f32 %v652, %v976
        %v978 = vpop.f32.mrf.mxu0
        %979 = vmatprep.mubr.f32.mxu0 0.0
        %v980 = vand.u32 %v312, 4294901760
        %981 = vmatmul.mubr.f32.gmra.mxu0 %v980
        %v982 = vpop.f32.mrf.mxu0
        %v983 = vadd.f32 %v662, %v982
        %v984 = vpop.f32.mrf.mxu0
        %985 = vmatprep.mubr.f32.mxu0 0.0
        %v986 = vand.u32 %v315, 4294901760
        %987 = vmatmul.mubr.f32.gmra.mxu0 %v986
        %v988 = vpop.f32.mrf.mxu0
        %v989 = vadd.f32 %v672, %v988
        %v990 = vpop.f32.mrf.mxu0
        %991 = vmatprep.mubr.f32.mxu0 0.0
        %v992 = vand.u32 %v318, 4294901760
        %993 = vmatmul.mubr.f32.gmra.mxu0 %v992
        %v994 = vpop.f32.mrf.mxu0
        %v995 = vadd.f32 %v682, %v994
        %v996 = vpop.f32.mrf.mxu0
        %997 = vmatprep.mubr.f32.mxu0 0.0
        %v998 = vand.u32 %v321, 4294901760
        %999 = vmatmul.mubr.f32.gmra.mxu0 %v998
        %v1000 = vpop.f32.mrf.mxu0
        %v1001 = vadd.f32 %v692, %v1000
        %v1002 = vpop.f32.mrf.mxu0
        %1003 = vmatprep.mubr.f32.mxu0 0.0
        %v1004 = vand.u32 %v324, 4294901760
        %1005 = vmatmul.mubr.f32.gmra.mxu0 %v1004
        %v1006 = vpop.f32.mrf.mxu0
        %v1007 = vadd.f32 %v702, %v1006
        %v1008 = vpop.f32.mrf.mxu0
        %1009 = vmatprep.mubr.f32.mxu0 0.0
        %v1010 = vand.u32 %v327, 4294901760
        %1011 = vmatmul.mubr.f32.gmra.mxu0 %v1010
        %v1012 = vpop.f32.mrf.mxu0
        %v1013 = vadd.f32 %v712, %v1012
        %v1014 = vpop.f32.mrf.mxu0
        %1015 = vmatprep.mubr.f32.mxu0 0.0
        %v1016 = vand.u32 %v330, 4294901760
        %1017 = vmatmul.mubr.f32.gmra.mxu0 %v1016
        %v1018 = vpop.f32.mrf.mxu0
        %v1019 = vadd.f32 %v722, %v1018
        %v1020 = vpop.f32.mrf.mxu0
        %1021 = vdwg.mxu0
        %1022 = vmatprep.subr.mxu0 0.0
        %1023 = vmatpush1.msra.mxu0 0.0
        %1024 = vmatprep.subr.mxu0 0.0
        %1025 = vmatpush1.msra.mxu0 0.0
        %1026 = vmatprep.subr.mxu0 0.0
        %1027 = vmatpush1.msra.mxu0 0.0
        %1028 = vmatprep.subr.mxu0 0.0
        %1029 = vmatpush1.msra.mxu0 0.0
        %1030 = vmatprep.subr.mxu0 0.0
        %1031 = vmatpush1.msra.mxu0 0.0
        %1032 = vmatprep.subr.mxu0 0.0
        %1033 = vmatpush1.msra.mxu0 0.0
        %1034 = vmatprep.subr.mxu0 0.0
        %1035 = vmatpush1.msra.mxu0 0.0
        %1036 = vmatprep.subr.mxu0 0.0
        %1037 = vmatpush1.msra.mxu0 0.0
        %1038 = vmatprep.subr.mxu0 0.0
        %v1039 = vand.u32 %v234, 4294901760
        %v1040 = vsub.f32 %v234, %v1039
        %1041 = vmatpush1.msra.mxu0 %v1040
        %1042 = vmatprep.subr.mxu0 0.0
        %v1043 = vand.u32 %v233, 4294901760
        %v1044 = vsub.f32 %v233, %v1043
        %1045 = vmatpush1.msra.mxu0 %v1044
        %1046 = vmatprep.subr.mxu0 0.0
        %v1047 = vand.u32 %v232, 4294901760
        %v1048 = vsub.f32 %v232, %v1047
        %1049 = vmatpush1.msra.mxu0 %v1048
        %1050 = vmatprep.subr.mxu0 0.0
        %v1051 = vand.u32 %v231, 4294901760
        %v1052 = vsub.f32 %v231, %v1051
        %1053 = vmatpush1.msra.mxu0 %v1052
        %1054 = vmatprep.subr.mxu0 0.0
        %v1055 = vand.u32 %v230, 4294901760
        %v1056 = vsub.f32 %v230, %v1055
        %1057 = vmatpush1.msra.mxu0 %v1056
        %1058 = vmatprep.subr.mxu0 0.0
        %v1059 = vand.u32 %v229, 4294901760
        %v1060 = vsub.f32 %v229, %v1059
        %1061 = vmatpush1.msra.mxu0 %v1060
        %1062 = vmatprep.subr.mxu0 0.0
        %v1063 = vand.u32 %v228, 4294901760
        %v1064 = vsub.f32 %v228, %v1063
        %1065 = vmatpush1.msra.mxu0 %v1064
        %1066 = vmatprep.subr.mxu0 0.0
        %v1067 = vand.u32 %v227, 4294901760
        %v1068 = vsub.f32 %v227, %v1067
        %1069 = vmatpush1.msra.mxu0 %v1068
        %1070 = vmatprep.subr.mxu0 0.0
        %1071 = vmatpush2.msra.mxu0 0.0
        %1072 = vmatprep.subr.mxu0 0.0
        %1073 = vmatpush2.msra.mxu0 0.0
        %1074 = vmatprep.subr.mxu0 0.0
        %1075 = vmatpush2.msra.mxu0 0.0
        %1076 = vmatprep.subr.mxu0 0.0
        %1077 = vmatpush2.msra.mxu0 0.0
        %1078 = vmatprep.subr.mxu0 0.0
        %1079 = vmatpush2.msra.mxu0 0.0
        %1080 = vmatprep.subr.mxu0 0.0
        %1081 = vmatpush2.msra.mxu0 0.0
        %1082 = vmatprep.subr.mxu0 0.0
        %1083 = vmatpush2.msra.mxu0 0.0
        %1084 = vmatprep.subr.mxu0 0.0
        %1085 = vmatpush2.msra.mxu0 0.0
        %1086 = vmatprep.subr.mxu0 0.0
        %1087 = vmatpush2.msra.mxu0 0.0
        %1088 = vmatprep.subr.mxu0 0.0
        %1089 = vmatpush2.msra.mxu0 0.0
        %1090 = vmatprep.subr.mxu0 0.0
        %1091 = vmatpush2.msra.mxu0 0.0
        %1092 = vmatprep.subr.mxu0 0.0
        %1093 = vmatpush2.msra.mxu0 0.0
        %1094 = vmatprep.subr.mxu0 0.0
        %1095 = vmatpush2.msra.mxu0 0.0
        %1096 = vmatprep.subr.mxu0 0.0
        %1097 = vmatpush2.msra.mxu0 0.0
        %1098 = vmatprep.subr.mxu0 0.0
        %1099 = vmatpush2.msra.mxu0 0.0
        %1100 = vmatprep.subr.mxu0 0.0
        %1101 = vmatpush2.msra.mxu0 0.0
        %1102 = vmatprep.mubr.f32.mxu0 0.0
        %v1103 = vand.u32 %v237, 4294901760
        %v1104 = vsub.f32 %v237, %v1103
        %1105 = vmatmul.mubr.f32.gmra.mxu0 %v1104
        %v1106 = vpop.f32.mrf.mxu0
        %v1107 = vadd.f32 %v833, %v1106
        %v1108 = vpop.f32.mrf.mxu0
        %1109 = vmatprep.mubr.f32.mxu0 0.0
        %v1110 = vand.u32 %v240, 4294901760
        %v1111 = vsub.f32 %v240, %v1110
        %1112 = vmatmul.mubr.f32.gmra.mxu0 %v1111
        %v1113 = vpop.f32.mrf.mxu0
        %v1114 = vadd.f32 %v839, %v1113
        %v1115 = vpop.f32.mrf.mxu0
        %1116 = vmatprep.mubr.f32.mxu0 0.0
        %v1117 = vand.u32 %v243, 4294901760
        %v1118 = vsub.f32 %v243, %v1117
        %1119 = vmatmul.mubr.f32.gmra.mxu0 %v1118
        %v1120 = vpop.f32.mrf.mxu0
        %v1121 = vadd.f32 %v845, %v1120
        %v1122 = vpop.f32.mrf.mxu0
        %1123 = vmatprep.mubr.f32.mxu0 0.0
        %v1124 = vand.u32 %v246, 4294901760
        %v1125 = vsub.f32 %v246, %v1124
        %1126 = vmatmul.mubr.f32.gmra.mxu0 %v1125
        %v1127 = vpop.f32.mrf.mxu0
        %v1128 = vadd.f32 %v851, %v1127
        %v1129 = vpop.f32.mrf.mxu0
        %1130 = vmatprep.mubr.f32.mxu0 0.0
        %v1131 = vand.u32 %v249, 4294901760
        %v1132 = vsub.f32 %v249, %v1131
        %1133 = vmatmul.mubr.f32.gmra.mxu0 %v1132
        %v1134 = vpop.f32.mrf.mxu0
        %v1135 = vadd.f32 %v857, %v1134
        %v1136 = vpop.f32.mrf.mxu0
        %1137 = vmatprep.mubr.f32.mxu0 0.0
        %v1138 = vand.u32 %v252, 4294901760
        %v1139 = vsub.f32 %v252, %v1138
        %1140 = vmatmul.mubr.f32.gmra.mxu0 %v1139
        %v1141 = vpop.f32.mrf.mxu0
        %v1142 = vadd.f32 %v863, %v1141
        %v1143 = vpop.f32.mrf.mxu0
        %1144 = vmatprep.mubr.f32.mxu0 0.0
        %v1145 = vand.u32 %v255, 4294901760
        %v1146 = vsub.f32 %v255, %v1145
        %1147 = vmatmul.mubr.f32.gmra.mxu0 %v1146
        %v1148 = vpop.f32.mrf.mxu0
        %v1149 = vadd.f32 %v869, %v1148
        %v1150 = vpop.f32.mrf.mxu0
        %1151 = vmatprep.mubr.f32.mxu0 0.0
        %v1152 = vand.u32 %v258, 4294901760
        %v1153 = vsub.f32 %v258, %v1152
        %1154 = vmatmul.mubr.f32.gmra.mxu0 %v1153
        %v1155 = vpop.f32.mrf.mxu0
        %v1156 = vadd.f32 %v875, %v1155
        %v1157 = vpop.f32.mrf.mxu0
        %1158 = vmatprep.mubr.f32.mxu0 0.0
        %v1159 = vand.u32 %v261, 4294901760
        %v1160 = vsub.f32 %v261, %v1159
        %1161 = vmatmul.mubr.f32.gmra.mxu0 %v1160
        %v1162 = vpop.f32.mrf.mxu0
        %v1163 = vadd.f32 %v881, %v1162
        %v1164 = vpop.f32.mrf.mxu0
        %1165 = vmatprep.mubr.f32.mxu0 0.0
        %v1166 = vand.u32 %v264, 4294901760
        %v1167 = vsub.f32 %v264, %v1166
        %1168 = vmatmul.mubr.f32.gmra.mxu0 %v1167
        %v1169 = vpop.f32.mrf.mxu0
        %v1170 = vadd.f32 %v887, %v1169
        %v1171 = vpop.f32.mrf.mxu0
        %1172 = vmatprep.mubr.f32.mxu0 0.0
        %v1173 = vand.u32 %v267, 4294901760
        %v1174 = vsub.f32 %v267, %v1173
        %1175 = vmatmul.mubr.f32.gmra.mxu0 %v1174
        %v1176 = vpop.f32.mrf.mxu0
        %v1177 = vadd.f32 %v893, %v1176
        %v1178 = vpop.f32.mrf.mxu0
        %1179 = vmatprep.mubr.f32.mxu0 0.0
        %v1180 = vand.u32 %v270, 4294901760
        %v1181 = vsub.f32 %v270, %v1180
        %1182 = vmatmul.mubr.f32.gmra.mxu0 %v1181
        %v1183 = vpop.f32.mrf.mxu0
        %v1184 = vadd.f32 %v899, %v1183
        %v1185 = vpop.f32.mrf.mxu0
        %1186 = vmatprep.mubr.f32.mxu0 0.0
        %v1187 = vand.u32 %v273, 4294901760
        %v1188 = vsub.f32 %v273, %v1187
        %1189 = vmatmul.mubr.f32.gmra.mxu0 %v1188
        %v1190 = vpop.f32.mrf.mxu0
        %v1191 = vadd.f32 %v905, %v1190
        %v1192 = vpop.f32.mrf.mxu0
        %1193 = vmatprep.mubr.f32.mxu0 0.0
        %v1194 = vand.u32 %v276, 4294901760
        %v1195 = vsub.f32 %v276, %v1194
        %1196 = vmatmul.mubr.f32.gmra.mxu0 %v1195
        %v1197 = vpop.f32.mrf.mxu0
        %v1198 = vadd.f32 %v911, %v1197
        %v1199 = vpop.f32.mrf.mxu0
        %1200 = vmatprep.mubr.f32.mxu0 0.0
        %v1201 = vand.u32 %v279, 4294901760
        %v1202 = vsub.f32 %v279, %v1201
        %1203 = vmatmul.mubr.f32.gmra.mxu0 %v1202
        %v1204 = vpop.f32.mrf.mxu0
        %v1205 = vadd.f32 %v917, %v1204
        %v1206 = vpop.f32.mrf.mxu0
        %1207 = vmatprep.mubr.f32.mxu0 0.0
        %v1208 = vand.u32 %v282, 4294901760
        %v1209 = vsub.f32 %v282, %v1208
        %1210 = vmatmul.mubr.f32.gmra.mxu0 %v1209
        %v1211 = vpop.f32.mrf.mxu0
        %v1212 = vadd.f32 %v923, %v1211
        %v1213 = vpop.f32.mrf.mxu0
        %1214 = vmatprep.mubr.f32.mxu0 0.0
        %v1215 = vand.u32 %v285, 4294901760
        %v1216 = vsub.f32 %v285, %v1215
        %1217 = vmatmul.mubr.f32.gmra.mxu0 %v1216
        %v1218 = vpop.f32.mrf.mxu0
        %v1219 = vadd.f32 %v929, %v1218
        %v1220 = vpop.f32.mrf.mxu0
        %1221 = vmatprep.mubr.f32.mxu0 0.0
        %v1222 = vand.u32 %v288, 4294901760
        %v1223 = vsub.f32 %v288, %v1222
        %1224 = vmatmul.mubr.f32.gmra.mxu0 %v1223
        %v1225 = vpop.f32.mrf.mxu0
        %v1226 = vadd.f32 %v935, %v1225
        %v1227 = vpop.f32.mrf.mxu0
        %1228 = vmatprep.mubr.f32.mxu0 0.0
        %v1229 = vand.u32 %v291, 4294901760
        %v1230 = vsub.f32 %v291, %v1229
        %1231 = vmatmul.mubr.f32.gmra.mxu0 %v1230
        %v1232 = vpop.f32.mrf.mxu0
        %v1233 = vadd.f32 %v941, %v1232
        %v1234 = vpop.f32.mrf.mxu0
        %1235 = vmatprep.mubr.f32.mxu0 0.0
        %v1236 = vand.u32 %v294, 4294901760
        %v1237 = vsub.f32 %v294, %v1236
        %1238 = vmatmul.mubr.f32.gmra.mxu0 %v1237
        %v1239 = vpop.f32.mrf.mxu0
        %v1240 = vadd.f32 %v947, %v1239
        %v1241 = vpop.f32.mrf.mxu0
        %1242 = vmatprep.mubr.f32.mxu0 0.0
        %v1243 = vand.u32 %v297, 4294901760
        %v1244 = vsub.f32 %v297, %v1243
        %1245 = vmatmul.mubr.f32.gmra.mxu0 %v1244
        %v1246 = vpop.f32.mrf.mxu0
        %v1247 = vadd.f32 %v953, %v1246
        %v1248 = vpop.f32.mrf.mxu0
        %1249 = vmatprep.mubr.f32.mxu0 0.0
        %v1250 = vand.u32 %v300, 4294901760
        %v1251 = vsub.f32 %v300, %v1250
        %1252 = vmatmul.mubr.f32.gmra.mxu0 %v1251
        %v1253 = vpop.f32.mrf.mxu0
        %v1254 = vadd.f32 %v959, %v1253
        %v1255 = vpop.f32.mrf.mxu0
        %1256 = vmatprep.mubr.f32.mxu0 0.0
        %v1257 = vand.u32 %v303, 4294901760
        %v1258 = vsub.f32 %v303, %v1257
        %1259 = vmatmul.mubr.f32.gmra.mxu0 %v1258
        %v1260 = vpop.f32.mrf.mxu0
        %v1261 = vadd.f32 %v965, %v1260
        %v1262 = vpop.f32.mrf.mxu0
        %1263 = vmatprep.mubr.f32.mxu0 0.0
        %v1264 = vand.u32 %v306, 4294901760
        %v1265 = vsub.f32 %v306, %v1264
        %1266 = vmatmul.mubr.f32.gmra.mxu0 %v1265
        %v1267 = vpop.f32.mrf.mxu0
        %v1268 = vadd.f32 %v971, %v1267
        %v1269 = vpop.f32.mrf.mxu0
        %1270 = vmatprep.mubr.f32.mxu0 0.0
        %v1271 = vand.u32 %v309, 4294901760
        %v1272 = vsub.f32 %v309, %v1271
        %1273 = vmatmul.mubr.f32.gmra.mxu0 %v1272
        %v1274 = vpop.f32.mrf.mxu0
        %v1275 = vadd.f32 %v977, %v1274
        %v1276 = vpop.f32.mrf.mxu0
        %1277 = vmatprep.mubr.f32.mxu0 0.0
        %v1278 = vand.u32 %v312, 4294901760
        %v1279 = vsub.f32 %v312, %v1278
        %1280 = vmatmul.mubr.f32.gmra.mxu0 %v1279
        %v1281 = vpop.f32.mrf.mxu0
        %v1282 = vadd.f32 %v983, %v1281
        %v1283 = vpop.f32.mrf.mxu0
        %1284 = vmatprep.mubr.f32.mxu0 0.0
        %v1285 = vand.u32 %v315, 4294901760
        %v1286 = vsub.f32 %v315, %v1285
        %1287 = vmatmul.mubr.f32.gmra.mxu0 %v1286
        %v1288 = vpop.f32.mrf.mxu0
        %v1289 = vadd.f32 %v989, %v1288
        %v1290 = vpop.f32.mrf.mxu0
        %1291 = vmatprep.mubr.f32.mxu0 0.0
        %v1292 = vand.u32 %v318, 4294901760
        %v1293 = vsub.f32 %v318, %v1292
        %1294 = vmatmul.mubr.f32.gmra.mxu0 %v1293
        %v1295 = vpop.f32.mrf.mxu0
        %v1296 = vadd.f32 %v995, %v1295
        %v1297 = vpop.f32.mrf.mxu0
        %1298 = vmatprep.mubr.f32.mxu0 0.0
        %v1299 = vand.u32 %v321, 4294901760
        %v1300 = vsub.f32 %v321, %v1299
        %1301 = vmatmul.mubr.f32.gmra.mxu0 %v1300
        %v1302 = vpop.f32.mrf.mxu0
        %v1303 = vadd.f32 %v1001, %v1302
        %v1304 = vpop.f32.mrf.mxu0
        %1305 = vmatprep.mubr.f32.mxu0 0.0
        %v1306 = vand.u32 %v324, 4294901760
        %v1307 = vsub.f32 %v324, %v1306
        %1308 = vmatmul.mubr.f32.gmra.mxu0 %v1307
        %v1309 = vpop.f32.mrf.mxu0
        %v1310 = vadd.f32 %v1007, %v1309
        %v1311 = vpop.f32.mrf.mxu0
        %1312 = vmatprep.mubr.f32.mxu0 0.0
        %v1313 = vand.u32 %v327, 4294901760
        %v1314 = vsub.f32 %v327, %v1313
        %1315 = vmatmul.mubr.f32.gmra.mxu0 %v1314
        %v1316 = vpop.f32.mrf.mxu0
        %v1317 = vadd.f32 %v1013, %v1316
        %v1318 = vpop.f32.mrf.mxu0
        %1319 = vmatprep.mubr.f32.mxu0 0.0
        %v1320 = vand.u32 %v330, 4294901760
        %v1321 = vsub.f32 %v330, %v1320
        %1322 = vmatmul.mubr.f32.gmra.mxu0 %v1321
        %v1323 = vpop.f32.mrf.mxu0
        %v1324 = vadd.f32 %v1019, %v1323
        %v1325 = vpop.f32.mrf.mxu0
        %1326 = vdwg.mxu0
        %1327 = vmatprep.subr.mxu0 0.0
        %1328 = vmatpush1.msra.mxu0 0.0
        %1329 = vmatprep.subr.mxu0 0.0
        %1330 = vmatpush1.msra.mxu0 0.0
        %1331 = vmatprep.subr.mxu0 0.0
        %1332 = vmatpush1.msra.mxu0 0.0
        %1333 = vmatprep.subr.mxu0 0.0
        %1334 = vmatpush1.msra.mxu0 0.0
        %1335 = vmatprep.subr.mxu0 0.0
        %1336 = vmatpush1.msra.mxu0 0.0
        %1337 = vmatprep.subr.mxu0 0.0
        %1338 = vmatpush1.msra.mxu0 0.0
        %1339 = vmatprep.subr.mxu0 0.0
        %1340 = vmatpush1.msra.mxu0 0.0
        %1341 = vmatprep.subr.mxu0 0.0
        %1342 = vmatpush1.msra.mxu0 0.0
        %1343 = vmatprep.subr.mxu0 0.0
        %v1344 = vand.u32 %v234, 4294901760
        %1345 = vmatpush1.msra.mxu0 %v1344
        %1346 = vmatprep.subr.mxu0 0.0
        %v1347 = vand.u32 %v233, 4294901760
        %1348 = vmatpush1.msra.mxu0 %v1347
        %1349 = vmatprep.subr.mxu0 0.0
        %v1350 = vand.u32 %v232, 4294901760
        %1351 = vmatpush1.msra.mxu0 %v1350
        %1352 = vmatprep.subr.mxu0 0.0
        %v1353 = vand.u32 %v231, 4294901760
        %1354 = vmatpush1.msra.mxu0 %v1353
        %1355 = vmatprep.subr.mxu0 0.0
        %v1356 = vand.u32 %v230, 4294901760
        %1357 = vmatpush1.msra.mxu0 %v1356
        %1358 = vmatprep.subr.mxu0 0.0
        %v1359 = vand.u32 %v229, 4294901760
        %1360 = vmatpush1.msra.mxu0 %v1359
        %1361 = vmatprep.subr.mxu0 0.0
        %v1362 = vand.u32 %v228, 4294901760
        %1363 = vmatpush1.msra.mxu0 %v1362
        %1364 = vmatprep.subr.mxu0 0.0
        %v1365 = vand.u32 %v227, 4294901760
        %1366 = vmatpush1.msra.mxu0 %v1365
        %1367 = vmatprep.subr.mxu0 0.0
        %1368 = vmatpush2.msra.mxu0 0.0
        %1369 = vmatprep.subr.mxu0 0.0
        %1370 = vmatpush2.msra.mxu0 0.0
        %1371 = vmatprep.subr.mxu0 0.0
        %1372 = vmatpush2.msra.mxu0 0.0
        %1373 = vmatprep.subr.mxu0 0.0
        %1374 = vmatpush2.msra.mxu0 0.0
        %1375 = vmatprep.subr.mxu0 0.0
        %1376 = vmatpush2.msra.mxu0 0.0
        %1377 = vmatprep.subr.mxu0 0.0
        %1378 = vmatpush2.msra.mxu0 0.0
        %1379 = vmatprep.subr.mxu0 0.0
        %1380 = vmatpush2.msra.mxu0 0.0
        %1381 = vmatprep.subr.mxu0 0.0
        %1382 = vmatpush2.msra.mxu0 0.0
        %1383 = vmatprep.subr.mxu0 0.0
        %1384 = vmatpush2.msra.mxu0 0.0
        %1385 = vmatprep.subr.mxu0 0.0
        %1386 = vmatpush2.msra.mxu0 0.0
        %1387 = vmatprep.subr.mxu0 0.0
        %1388 = vmatpush2.msra.mxu0 0.0
        %1389 = vmatprep.subr.mxu0 0.0
        %1390 = vmatpush2.msra.mxu0 0.0
        %1391 = vmatprep.subr.mxu0 0.0
        %1392 = vmatpush2.msra.mxu0 0.0
        %1393 = vmatprep.subr.mxu0 0.0
        %1394 = vmatpush2.msra.mxu0 0.0
        %1395 = vmatprep.subr.mxu0 0.0
        %1396 = vmatpush2.msra.mxu0 0.0
        %1397 = vmatprep.subr.mxu0 0.0
        %1398 = vmatpush2.msra.mxu0 0.0
        %1399 = vmatprep.mubr.f32.mxu0 0.0
        %v1400 = vand.u32 %v237, 4294901760
        %v1401 = vsub.f32 %v237, %v1400
        %v1402 = vand.u32 %v1401, 4294901760
        %1403 = vmatmul.mubr.f32.gmra.mxu0 %v1402
        %v1404 = vpop.f32.mrf.mxu0
        %v1405 = vadd.f32 %v1107, %v1404
        %v1406 = vpop.f32.mrf.mxu0
        %1407 = vmatprep.mubr.f32.mxu0 0.0
        %v1408 = vand.u32 %v240, 4294901760
        %v1409 = vsub.f32 %v240, %v1408
        %v1410 = vand.u32 %v1409, 4294901760
        %1411 = vmatmul.mubr.f32.gmra.mxu0 %v1410
        %v1412 = vpop.f32.mrf.mxu0
        %v1413 = vadd.f32 %v1114, %v1412
        %v1414 = vpop.f32.mrf.mxu0
        %1415 = vmatprep.mubr.f32.mxu0 0.0
        %v1416 = vand.u32 %v243, 4294901760
        %v1417 = vsub.f32 %v243, %v1416
        %v1418 = vand.u32 %v1417, 4294901760
        %1419 = vmatmul.mubr.f32.gmra.mxu0 %v1418
        %v1420 = vpop.f32.mrf.mxu0
        %v1421 = vadd.f32 %v1121, %v1420
        %v1422 = vpop.f32.mrf.mxu0
        %1423 = vmatprep.mubr.f32.mxu0 0.0
        %v1424 = vand.u32 %v246, 4294901760
        %v1425 = vsub.f32 %v246, %v1424
        %v1426 = vand.u32 %v1425, 4294901760
        %1427 = vmatmul.mubr.f32.gmra.mxu0 %v1426
        %v1428 = vpop.f32.mrf.mxu0
        %v1429 = vadd.f32 %v1128, %v1428
        %v1430 = vpop.f32.mrf.mxu0
        %1431 = vmatprep.mubr.f32.mxu0 0.0
        %v1432 = vand.u32 %v249, 4294901760
        %v1433 = vsub.f32 %v249, %v1432
        %v1434 = vand.u32 %v1433, 4294901760
        %1435 = vmatmul.mubr.f32.gmra.mxu0 %v1434
        %v1436 = vpop.f32.mrf.mxu0
        %v1437 = vadd.f32 %v1135, %v1436
        %v1438 = vpop.f32.mrf.mxu0
        %1439 = vmatprep.mubr.f32.mxu0 0.0
        %v1440 = vand.u32 %v252, 4294901760
        %v1441 = vsub.f32 %v252, %v1440
        %v1442 = vand.u32 %v1441, 4294901760
        %1443 = vmatmul.mubr.f32.gmra.mxu0 %v1442
        %v1444 = vpop.f32.mrf.mxu0
        %v1445 = vadd.f32 %v1142, %v1444
        %v1446 = vpop.f32.mrf.mxu0
        %1447 = vmatprep.mubr.f32.mxu0 0.0
        %v1448 = vand.u32 %v255, 4294901760
        %v1449 = vsub.f32 %v255, %v1448
        %v1450 = vand.u32 %v1449, 4294901760
        %1451 = vmatmul.mubr.f32.gmra.mxu0 %v1450
        %v1452 = vpop.f32.mrf.mxu0
        %v1453 = vadd.f32 %v1149, %v1452
        %v1454 = vpop.f32.mrf.mxu0
        %1455 = vmatprep.mubr.f32.mxu0 0.0
        %v1456 = vand.u32 %v258, 4294901760
        %v1457 = vsub.f32 %v258, %v1456
        %v1458 = vand.u32 %v1457, 4294901760
        %1459 = vmatmul.mubr.f32.gmra.mxu0 %v1458
        %v1460 = vpop.f32.mrf.mxu0
        %v1461 = vadd.f32 %v1156, %v1460
        %v1462 = vpop.f32.mrf.mxu0
        %1463 = vmatprep.mubr.f32.mxu0 0.0
        %v1464 = vand.u32 %v261, 4294901760
        %v1465 = vsub.f32 %v261, %v1464
        %v1466 = vand.u32 %v1465, 4294901760
        %1467 = vmatmul.mubr.f32.gmra.mxu0 %v1466
        %v1468 = vpop.f32.mrf.mxu0
        %v1469 = vadd.f32 %v1163, %v1468
        %v1470 = vpop.f32.mrf.mxu0
        %1471 = vmatprep.mubr.f32.mxu0 0.0
        %v1472 = vand.u32 %v264, 4294901760
        %v1473 = vsub.f32 %v264, %v1472
        %v1474 = vand.u32 %v1473, 4294901760
        %1475 = vmatmul.mubr.f32.gmra.mxu0 %v1474
        %v1476 = vpop.f32.mrf.mxu0
        %v1477 = vadd.f32 %v1170, %v1476
        %v1478 = vpop.f32.mrf.mxu0
        %1479 = vmatprep.mubr.f32.mxu0 0.0
        %v1480 = vand.u32 %v267, 4294901760
        %v1481 = vsub.f32 %v267, %v1480
        %v1482 = vand.u32 %v1481, 4294901760
        %1483 = vmatmul.mubr.f32.gmra.mxu0 %v1482
        %v1484 = vpop.f32.mrf.mxu0
        %v1485 = vadd.f32 %v1177, %v1484
        %v1486 = vpop.f32.mrf.mxu0
        %1487 = vmatprep.mubr.f32.mxu0 0.0
        %v1488 = vand.u32 %v270, 4294901760
        %v1489 = vsub.f32 %v270, %v1488
        %v1490 = vand.u32 %v1489, 4294901760
        %1491 = vmatmul.mubr.f32.gmra.mxu0 %v1490
        %v1492 = vpop.f32.mrf.mxu0
        %v1493 = vadd.f32 %v1184, %v1492
        %v1494 = vpop.f32.mrf.mxu0
        %1495 = vmatprep.mubr.f32.mxu0 0.0
        %v1496 = vand.u32 %v273, 4294901760
        %v1497 = vsub.f32 %v273, %v1496
        %v1498 = vand.u32 %v1497, 4294901760
        %1499 = vmatmul.mubr.f32.gmra.mxu0 %v1498
        %v1500 = vpop.f32.mrf.mxu0
        %v1501 = vadd.f32 %v1191, %v1500
        %v1502 = vpop.f32.mrf.mxu0
        %1503 = vmatprep.mubr.f32.mxu0 0.0
        %v1504 = vand.u32 %v276, 4294901760
        %v1505 = vsub.f32 %v276, %v1504
        %v1506 = vand.u32 %v1505, 4294901760
        %1507 = vmatmul.mubr.f32.gmra.mxu0 %v1506
        %v1508 = vpop.f32.mrf.mxu0
        %v1509 = vadd.f32 %v1198, %v1508
        %v1510 = vpop.f32.mrf.mxu0
        %1511 = vmatprep.mubr.f32.mxu0 0.0
        %v1512 = vand.u32 %v279, 4294901760
        %v1513 = vsub.f32 %v279, %v1512
        %v1514 = vand.u32 %v1513, 4294901760
        %1515 = vmatmul.mubr.f32.gmra.mxu0 %v1514
        %v1516 = vpop.f32.mrf.mxu0
        %v1517 = vadd.f32 %v1205, %v1516
        %v1518 = vpop.f32.mrf.mxu0
        %1519 = vmatprep.mubr.f32.mxu0 0.0
        %v1520 = vand.u32 %v282, 4294901760
        %v1521 = vsub.f32 %v282, %v1520
        %v1522 = vand.u32 %v1521, 4294901760
        %1523 = vmatmul.mubr.f32.gmra.mxu0 %v1522
        %v1524 = vpop.f32.mrf.mxu0
        %v1525 = vadd.f32 %v1212, %v1524
        %v1526 = vpop.f32.mrf.mxu0
        %1527 = vmatprep.mubr.f32.mxu0 0.0
        %v1528 = vand.u32 %v285, 4294901760
        %v1529 = vsub.f32 %v285, %v1528
        %v1530 = vand.u32 %v1529, 4294901760
        %1531 = vmatmul.mubr.f32.gmra.mxu0 %v1530
        %v1532 = vpop.f32.mrf.mxu0
        %v1533 = vadd.f32 %v1219, %v1532
        %v1534 = vpop.f32.mrf.mxu0
        %1535 = vmatprep.mubr.f32.mxu0 0.0
        %v1536 = vand.u32 %v288, 4294901760
        %v1537 = vsub.f32 %v288, %v1536
        %v1538 = vand.u32 %v1537, 4294901760
        %1539 = vmatmul.mubr.f32.gmra.mxu0 %v1538
        %v1540 = vpop.f32.mrf.mxu0
        %v1541 = vadd.f32 %v1226, %v1540
        %v1542 = vpop.f32.mrf.mxu0
        %1543 = vmatprep.mubr.f32.mxu0 0.0
        %v1544 = vand.u32 %v291, 4294901760
        %v1545 = vsub.f32 %v291, %v1544
        %v1546 = vand.u32 %v1545, 4294901760
        %1547 = vmatmul.mubr.f32.gmra.mxu0 %v1546
        %v1548 = vpop.f32.mrf.mxu0
        %v1549 = vadd.f32 %v1233, %v1548
        %v1550 = vpop.f32.mrf.mxu0
        %1551 = vmatprep.mubr.f32.mxu0 0.0
        %v1552 = vand.u32 %v294, 4294901760
        %v1553 = vsub.f32 %v294, %v1552
        %v1554 = vand.u32 %v1553, 4294901760
        %1555 = vmatmul.mubr.f32.gmra.mxu0 %v1554
        %v1556 = vpop.f32.mrf.mxu0
        %v1557 = vadd.f32 %v1240, %v1556
        %v1558 = vpop.f32.mrf.mxu0
        %1559 = vmatprep.mubr.f32.mxu0 0.0
        %v1560 = vand.u32 %v297, 4294901760
        %v1561 = vsub.f32 %v297, %v1560
        %v1562 = vand.u32 %v1561, 4294901760
        %1563 = vmatmul.mubr.f32.gmra.mxu0 %v1562
        %v1564 = vpop.f32.mrf.mxu0
        %v1565 = vadd.f32 %v1247, %v1564
        %v1566 = vpop.f32.mrf.mxu0
        %1567 = vmatprep.mubr.f32.mxu0 0.0
        %v1568 = vand.u32 %v300, 4294901760
        %v1569 = vsub.f32 %v300, %v1568
        %v1570 = vand.u32 %v1569, 4294901760
        %1571 = vmatmul.mubr.f32.gmra.mxu0 %v1570
        %v1572 = vpop.f32.mrf.mxu0
        %v1573 = vadd.f32 %v1254, %v1572
        %v1574 = vpop.f32.mrf.mxu0
        %1575 = vmatprep.mubr.f32.mxu0 0.0
        %v1576 = vand.u32 %v303, 4294901760
        %v1577 = vsub.f32 %v303, %v1576
        %v1578 = vand.u32 %v1577, 4294901760
        %1579 = vmatmul.mubr.f32.gmra.mxu0 %v1578
        %v1580 = vpop.f32.mrf.mxu0
        %v1581 = vadd.f32 %v1261, %v1580
        %v1582 = vpop.f32.mrf.mxu0
        %1583 = vmatprep.mubr.f32.mxu0 0.0
        %v1584 = vand.u32 %v306, 4294901760
        %v1585 = vsub.f32 %v306, %v1584
        %v1586 = vand.u32 %v1585, 4294901760
        %1587 = vmatmul.mubr.f32.gmra.mxu0 %v1586
        %v1588 = vpop.f32.mrf.mxu0
        %v1589 = vadd.f32 %v1268, %v1588
        %v1590 = vpop.f32.mrf.mxu0
        %1591 = vmatprep.mubr.f32.mxu0 0.0
        %v1592 = vand.u32 %v309, 4294901760
        %v1593 = vsub.f32 %v309, %v1592
        %v1594 = vand.u32 %v1593, 4294901760
        %1595 = vmatmul.mubr.f32.gmra.mxu0 %v1594
        %v1596 = vpop.f32.mrf.mxu0
        %v1597 = vadd.f32 %v1275, %v1596
        %v1598 = vpop.f32.mrf.mxu0
        %1599 = vmatprep.mubr.f32.mxu0 0.0
        %v1600 = vand.u32 %v312, 4294901760
        %v1601 = vsub.f32 %v312, %v1600
        %v1602 = vand.u32 %v1601, 4294901760
        %1603 = vmatmul.mubr.f32.gmra.mxu0 %v1602
        %v1604 = vpop.f32.mrf.mxu0
        %v1605 = vadd.f32 %v1282, %v1604
        %v1606 = vpop.f32.mrf.mxu0
        %1607 = vmatprep.mubr.f32.mxu0 0.0
        %v1608 = vand.u32 %v315, 4294901760
        %v1609 = vsub.f32 %v315, %v1608
        %v1610 = vand.u32 %v1609, 4294901760
        %1611 = vmatmul.mubr.f32.gmra.mxu0 %v1610
        %v1612 = vpop.f32.mrf.mxu0
        %v1613 = vadd.f32 %v1289, %v1612
        %v1614 = vpop.f32.mrf.mxu0
        %1615 = vmatprep.mubr.f32.mxu0 0.0
        %v1616 = vand.u32 %v318, 4294901760
        %v1617 = vsub.f32 %v318, %v1616
        %v1618 = vand.u32 %v1617, 4294901760
        %1619 = vmatmul.mubr.f32.gmra.mxu0 %v1618
        %v1620 = vpop.f32.mrf.mxu0
        %v1621 = vadd.f32 %v1296, %v1620
        %v1622 = vpop.f32.mrf.mxu0
        %1623 = vmatprep.mubr.f32.mxu0 0.0
        %v1624 = vand.u32 %v321, 4294901760
        %v1625 = vsub.f32 %v321, %v1624
        %v1626 = vand.u32 %v1625, 4294901760
        %1627 = vmatmul.mubr.f32.gmra.mxu0 %v1626
        %v1628 = vpop.f32.mrf.mxu0
        %v1629 = vadd.f32 %v1303, %v1628
        %v1630 = vpop.f32.mrf.mxu0
        %1631 = vmatprep.mubr.f32.mxu0 0.0
        %v1632 = vand.u32 %v324, 4294901760
        %v1633 = vsub.f32 %v324, %v1632
        %v1634 = vand.u32 %v1633, 4294901760
        %1635 = vmatmul.mubr.f32.gmra.mxu0 %v1634
        %v1636 = vpop.f32.mrf.mxu0
        %v1637 = vadd.f32 %v1310, %v1636
        %v1638 = vpop.f32.mrf.mxu0
        %1639 = vmatprep.mubr.f32.mxu0 0.0
        %v1640 = vand.u32 %v327, 4294901760
        %v1641 = vsub.f32 %v327, %v1640
        %v1642 = vand.u32 %v1641, 4294901760
        %1643 = vmatmul.mubr.f32.gmra.mxu0 %v1642
        %v1644 = vpop.f32.mrf.mxu0
        %v1645 = vadd.f32 %v1317, %v1644
        %v1646 = vpop.f32.mrf.mxu0
        %1647 = vmatprep.mubr.f32.mxu0 0.0
        %v1648 = vand.u32 %v330, 4294901760
        %v1649 = vsub.f32 %v330, %v1648
        %v1650 = vand.u32 %v1649, 4294901760
        %1651 = vmatmul.mubr.f32.gmra.mxu0 %v1650
        %v1652 = vpop.f32.mrf.mxu0
        %v1653 = vadd.f32 %v1324, %v1652
        %v1654 = vpop.f32.mrf.mxu0
        %1655 = vdwg.mxu0
        %1656 = vmatprep.subr.mxu0 0.0
        %1657 = vmatpush1.msra.mxu0 0.0
        %1658 = vmatprep.subr.mxu0 0.0
        %1659 = vmatpush1.msra.mxu0 0.0
        %1660 = vmatprep.subr.mxu0 0.0
        %1661 = vmatpush1.msra.mxu0 0.0
        %1662 = vmatprep.subr.mxu0 0.0
        %1663 = vmatpush1.msra.mxu0 0.0
        %1664 = vmatprep.subr.mxu0 0.0
        %1665 = vmatpush1.msra.mxu0 0.0
        %1666 = vmatprep.subr.mxu0 0.0
        %1667 = vmatpush1.msra.mxu0 0.0
        %1668 = vmatprep.subr.mxu0 0.0
        %1669 = vmatpush1.msra.mxu0 0.0
        %1670 = vmatprep.subr.mxu0 0.0
        %1671 = vmatpush1.msra.mxu0 0.0
        %1672 = vmatprep.subr.mxu0 0.0
        %v1673 = vand.u32 %v234, 4294901760
        %v1674 = vsub.f32 %v234, %v1673
        %v1675 = vand.u32 %v1674, 4294901760
        %1676 = vmatpush1.msra.mxu0 %v1675
        %1677 = vmatprep.subr.mxu0 0.0
        %v1678 = vand.u32 %v233, 4294901760
        %v1679 = vsub.f32 %v233, %v1678
        %v1680 = vand.u32 %v1679, 4294901760
        %1681 = vmatpush1.msra.mxu0 %v1680
        %1682 = vmatprep.subr.mxu0 0.0
        %v1683 = vand.u32 %v232, 4294901760
        %v1684 = vsub.f32 %v232, %v1683
        %v1685 = vand.u32 %v1684, 4294901760
        %1686 = vmatpush1.msra.mxu0 %v1685
        %1687 = vmatprep.subr.mxu0 0.0
        %v1688 = vand.u32 %v231, 4294901760
        %v1689 = vsub.f32 %v231, %v1688
        %v1690 = vand.u32 %v1689, 4294901760
        %1691 = vmatpush1.msra.mxu0 %v1690
        %1692 = vmatprep.subr.mxu0 0.0
        %v1693 = vand.u32 %v230, 4294901760
        %v1694 = vsub.f32 %v230, %v1693
        %v1695 = vand.u32 %v1694, 4294901760
        %1696 = vmatpush1.msra.mxu0 %v1695
        %1697 = vmatprep.subr.mxu0 0.0
        %v1698 = vand.u32 %v229, 4294901760
        %v1699 = vsub.f32 %v229, %v1698
        %v1700 = vand.u32 %v1699, 4294901760
        %1701 = vmatpush1.msra.mxu0 %v1700
        %1702 = vmatprep.subr.mxu0 0.0
        %v1703 = vand.u32 %v228, 4294901760
        %v1704 = vsub.f32 %v228, %v1703
        %v1705 = vand.u32 %v1704, 4294901760
        %1706 = vmatpush1.msra.mxu0 %v1705
        %1707 = vmatprep.subr.mxu0 0.0
        %v1708 = vand.u32 %v227, 4294901760
        %v1709 = vsub.f32 %v227, %v1708
        %v1710 = vand.u32 %v1709, 4294901760
        %1711 = vmatpush1.msra.mxu0 %v1710
        %1712 = vmatprep.subr.mxu0 0.0
        %1713 = vmatpush2.msra.mxu0 0.0
        %1714 = vmatprep.subr.mxu0 0.0
        %1715 = vmatpush2.msra.mxu0 0.0
        %1716 = vmatprep.subr.mxu0 0.0
        %1717 = vmatpush2.msra.mxu0 0.0
        %1718 = vmatprep.subr.mxu0 0.0
        %1719 = vmatpush2.msra.mxu0 0.0
        %1720 = vmatprep.subr.mxu0 0.0
        %1721 = vmatpush2.msra.mxu0 0.0
        %1722 = vmatprep.subr.mxu0 0.0
        %1723 = vmatpush2.msra.mxu0 0.0
        %1724 = vmatprep.subr.mxu0 0.0
        %1725 = vmatpush2.msra.mxu0 0.0
        %1726 = vmatprep.subr.mxu0 0.0
        %1727 = vmatpush2.msra.mxu0 0.0
        %1728 = vmatprep.subr.mxu0 0.0
        %1729 = vmatpush2.msra.mxu0 0.0
        %1730 = vmatprep.subr.mxu0 0.0
        %1731 = vmatpush2.msra.mxu0 0.0
        %1732 = vmatprep.subr.mxu0 0.0
        %1733 = vmatpush2.msra.mxu0 0.0
        %1734 = vmatprep.subr.mxu0 0.0
        %1735 = vmatpush2.msra.mxu0 0.0
        %1736 = vmatprep.subr.mxu0 0.0
        %1737 = vmatpush2.msra.mxu0 0.0
        %1738 = vmatprep.subr.mxu0 0.0
        %1739 = vmatpush2.msra.mxu0 0.0
        %1740 = vmatprep.subr.mxu0 0.0
        %1741 = vmatpush2.msra.mxu0 0.0
        %1742 = vmatprep.subr.mxu0 0.0
        %1743 = vmatpush2.msra.mxu0 0.0
        %1744 = vmatprep.mubr.f32.mxu0 0.0
        %v1745 = vand.u32 %v237, 4294901760
        %1746 = vmatmul.mubr.f32.gmra.mxu0 %v1745
        %v1747 = vpop.f32.mrf.mxu0
        %v1748 = vadd.f32 %v1405, %v1747
        %v1749 = vpop.f32.mrf.mxu0
        %1750 = vmatprep.mubr.f32.mxu0 0.0
        %v1751 = vand.u32 %v240, 4294901760
        %1752 = vmatmul.mubr.f32.gmra.mxu0 %v1751
        %v1753 = vpop.f32.mrf.mxu0
        %v1754 = vadd.f32 %v1413, %v1753
        %v1755 = vpop.f32.mrf.mxu0
        %1756 = vmatprep.mubr.f32.mxu0 0.0
        %v1757 = vand.u32 %v243, 4294901760
        %1758 = vmatmul.mubr.f32.gmra.mxu0 %v1757
        %v1759 = vpop.f32.mrf.mxu0
        %v1760 = vadd.f32 %v1421, %v1759
        %v1761 = vpop.f32.mrf.mxu0
        %1762 = vmatprep.mubr.f32.mxu0 0.0
        %v1763 = vand.u32 %v246, 4294901760
        %1764 = vmatmul.mubr.f32.gmra.mxu0 %v1763
        %v1765 = vpop.f32.mrf.mxu0
        %v1766 = vadd.f32 %v1429, %v1765
        %v1767 = vpop.f32.mrf.mxu0
        %1768 = vmatprep.mubr.f32.mxu0 0.0
        %v1769 = vand.u32 %v249, 4294901760
        %1770 = vmatmul.mubr.f32.gmra.mxu0 %v1769
        %v1771 = vpop.f32.mrf.mxu0
        %v1772 = vadd.f32 %v1437, %v1771
        %v1773 = vpop.f32.mrf.mxu0
        %1774 = vmatprep.mubr.f32.mxu0 0.0
        %v1775 = vand.u32 %v252, 4294901760
        %1776 = vmatmul.mubr.f32.gmra.mxu0 %v1775
        %v1777 = vpop.f32.mrf.mxu0
        %v1778 = vadd.f32 %v1445, %v1777
        %v1779 = vpop.f32.mrf.mxu0
        %1780 = vmatprep.mubr.f32.mxu0 0.0
        %v1781 = vand.u32 %v255, 4294901760
        %1782 = vmatmul.mubr.f32.gmra.mxu0 %v1781
        %v1783 = vpop.f32.mrf.mxu0
        %v1784 = vadd.f32 %v1453, %v1783
        %v1785 = vpop.f32.mrf.mxu0
        %1786 = vmatprep.mubr.f32.mxu0 0.0
        %v1787 = vand.u32 %v258, 4294901760
        %1788 = vmatmul.mubr.f32.gmra.mxu0 %v1787
        %v1789 = vpop.f32.mrf.mxu0
        %v1790 = vadd.f32 %v1461, %v1789
        %v1791 = vpop.f32.mrf.mxu0
        %1792 = vmatprep.mubr.f32.mxu0 0.0
        %v1793 = vand.u32 %v261, 4294901760
        %1794 = vmatmul.mubr.f32.gmra.mxu0 %v1793
        %v1795 = vpop.f32.mrf.mxu0
        %v1796 = vadd.f32 %v1469, %v1795
        %v1797 = vpop.f32.mrf.mxu0
        %1798 = vmatprep.mubr.f32.mxu0 0.0
        %v1799 = vand.u32 %v264, 4294901760
        %1800 = vmatmul.mubr.f32.gmra.mxu0 %v1799
        %v1801 = vpop.f32.mrf.mxu0
        %v1802 = vadd.f32 %v1477, %v1801
        %v1803 = vpop.f32.mrf.mxu0
        %1804 = vmatprep.mubr.f32.mxu0 0.0
        %v1805 = vand.u32 %v267, 4294901760
        %1806 = vmatmul.mubr.f32.gmra.mxu0 %v1805
        %v1807 = vpop.f32.mrf.mxu0
        %v1808 = vadd.f32 %v1485, %v1807
        %v1809 = vpop.f32.mrf.mxu0
        %1810 = vmatprep.mubr.f32.mxu0 0.0
        %v1811 = vand.u32 %v270, 4294901760
        %1812 = vmatmul.mubr.f32.gmra.mxu0 %v1811
        %v1813 = vpop.f32.mrf.mxu0
        %v1814 = vadd.f32 %v1493, %v1813
        %v1815 = vpop.f32.mrf.mxu0
        %1816 = vmatprep.mubr.f32.mxu0 0.0
        %v1817 = vand.u32 %v273, 4294901760
        %1818 = vmatmul.mubr.f32.gmra.mxu0 %v1817
        %v1819 = vpop.f32.mrf.mxu0
        %v1820 = vadd.f32 %v1501, %v1819
        %v1821 = vpop.f32.mrf.mxu0
        %1822 = vmatprep.mubr.f32.mxu0 0.0
        %v1823 = vand.u32 %v276, 4294901760
        %1824 = vmatmul.mubr.f32.gmra.mxu0 %v1823
        %v1825 = vpop.f32.mrf.mxu0
        %v1826 = vadd.f32 %v1509, %v1825
        %v1827 = vpop.f32.mrf.mxu0
        %1828 = vmatprep.mubr.f32.mxu0 0.0
        %v1829 = vand.u32 %v279, 4294901760
        %1830 = vmatmul.mubr.f32.gmra.mxu0 %v1829
        %v1831 = vpop.f32.mrf.mxu0
        %v1832 = vadd.f32 %v1517, %v1831
        %v1833 = vpop.f32.mrf.mxu0
        %1834 = vmatprep.mubr.f32.mxu0 0.0
        %v1835 = vand.u32 %v282, 4294901760
        %1836 = vmatmul.mubr.f32.gmra.mxu0 %v1835
        %v1837 = vpop.f32.mrf.mxu0
        %v1838 = vadd.f32 %v1525, %v1837
        %v1839 = vpop.f32.mrf.mxu0
        %1840 = vmatprep.mubr.f32.mxu0 0.0
        %v1841 = vand.u32 %v285, 4294901760
        %1842 = vmatmul.mubr.f32.gmra.mxu0 %v1841
        %v1843 = vpop.f32.mrf.mxu0
        %v1844 = vadd.f32 %v1533, %v1843
        %v1845 = vpop.f32.mrf.mxu0
        %1846 = vmatprep.mubr.f32.mxu0 0.0
        %v1847 = vand.u32 %v288, 4294901760
        %1848 = vmatmul.mubr.f32.gmra.mxu0 %v1847
        %v1849 = vpop.f32.mrf.mxu0
        %v1850 = vadd.f32 %v1541, %v1849
        %v1851 = vpop.f32.mrf.mxu0
        %1852 = vmatprep.mubr.f32.mxu0 0.0
        %v1853 = vand.u32 %v291, 4294901760
        %1854 = vmatmul.mubr.f32.gmra.mxu0 %v1853
        %v1855 = vpop.f32.mrf.mxu0
        %v1856 = vadd.f32 %v1549, %v1855
        %v1857 = vpop.f32.mrf.mxu0
        %1858 = vmatprep.mubr.f32.mxu0 0.0
        %v1859 = vand.u32 %v294, 4294901760
        %1860 = vmatmul.mubr.f32.gmra.mxu0 %v1859
        %v1861 = vpop.f32.mrf.mxu0
        %v1862 = vadd.f32 %v1557, %v1861
        %v1863 = vpop.f32.mrf.mxu0
        %1864 = vmatprep.mubr.f32.mxu0 0.0
        %v1865 = vand.u32 %v297, 4294901760
        %1866 = vmatmul.mubr.f32.gmra.mxu0 %v1865
        %v1867 = vpop.f32.mrf.mxu0
        %v1868 = vadd.f32 %v1565, %v1867
        %v1869 = vpop.f32.mrf.mxu0
        %1870 = vmatprep.mubr.f32.mxu0 0.0
        %v1871 = vand.u32 %v300, 4294901760
        %1872 = vmatmul.mubr.f32.gmra.mxu0 %v1871
        %v1873 = vpop.f32.mrf.mxu0
        %v1874 = vadd.f32 %v1573, %v1873
        %v1875 = vpop.f32.mrf.mxu0
        %1876 = vmatprep.mubr.f32.mxu0 0.0
        %v1877 = vand.u32 %v303, 4294901760
        %1878 = vmatmul.mubr.f32.gmra.mxu0 %v1877
        %v1879 = vpop.f32.mrf.mxu0
        %v1880 = vadd.f32 %v1581, %v1879
        %v1881 = vpop.f32.mrf.mxu0
        %1882 = vmatprep.mubr.f32.mxu0 0.0
        %v1883 = vand.u32 %v306, 4294901760
        %1884 = vmatmul.mubr.f32.gmra.mxu0 %v1883
        %v1885 = vpop.f32.mrf.mxu0
        %v1886 = vadd.f32 %v1589, %v1885
        %v1887 = vpop.f32.mrf.mxu0
        %1888 = vmatprep.mubr.f32.mxu0 0.0
        %v1889 = vand.u32 %v309, 4294901760
        %1890 = vmatmul.mubr.f32.gmra.mxu0 %v1889
        %v1891 = vpop.f32.mrf.mxu0
        %v1892 = vadd.f32 %v1597, %v1891
        %v1893 = vpop.f32.mrf.mxu0
        %1894 = vmatprep.mubr.f32.mxu0 0.0
        %v1895 = vand.u32 %v312, 4294901760
        %1896 = vmatmul.mubr.f32.gmra.mxu0 %v1895
        %v1897 = vpop.f32.mrf.mxu0
        %v1898 = vadd.f32 %v1605, %v1897
        %v1899 = vpop.f32.mrf.mxu0
        %1900 = vmatprep.mubr.f32.mxu0 0.0
        %v1901 = vand.u32 %v315, 4294901760
        %1902 = vmatmul.mubr.f32.gmra.mxu0 %v1901
        %v1903 = vpop.f32.mrf.mxu0
        %v1904 = vadd.f32 %v1613, %v1903
        %v1905 = vpop.f32.mrf.mxu0
        %1906 = vmatprep.mubr.f32.mxu0 0.0
        %v1907 = vand.u32 %v318, 4294901760
        %1908 = vmatmul.mubr.f32.gmra.mxu0 %v1907
        %v1909 = vpop.f32.mrf.mxu0
        %v1910 = vadd.f32 %v1621, %v1909
        %v1911 = vpop.f32.mrf.mxu0
        %1912 = vmatprep.mubr.f32.mxu0 0.0
        %v1913 = vand.u32 %v321, 4294901760
        %1914 = vmatmul.mubr.f32.gmra.mxu0 %v1913
        %v1915 = vpop.f32.mrf.mxu0
        %v1916 = vadd.f32 %v1629, %v1915
        %v1917 = vpop.f32.mrf.mxu0
        %1918 = vmatprep.mubr.f32.mxu0 0.0
        %v1919 = vand.u32 %v324, 4294901760
        %1920 = vmatmul.mubr.f32.gmra.mxu0 %v1919
        %v1921 = vpop.f32.mrf.mxu0
        %v1922 = vadd.f32 %v1637, %v1921
        %v1923 = vpop.f32.mrf.mxu0
        %1924 = vmatprep.mubr.f32.mxu0 0.0
        %v1925 = vand.u32 %v327, 4294901760
        %1926 = vmatmul.mubr.f32.gmra.mxu0 %v1925
        %v1927 = vpop.f32.mrf.mxu0
        %v1928 = vadd.f32 %v1645, %v1927
        %v1929 = vpop.f32.mrf.mxu0
        %1930 = vmatprep.mubr.f32.mxu0 0.0
        %v1931 = vand.u32 %v330, 4294901760
        %1932 = vmatmul.mubr.f32.gmra.mxu0 %v1931
        %v1933 = vpop.f32.mrf.mxu0
        %v1934 = vadd.f32 %v1653, %v1933
        %v1935 = vpop.f32.mrf.mxu0
        %1936 = vdwg.mxu0
        %1937 = vmatprep.subr.mxu0 0.0
        %1938 = vmatpush1.msra.mxu0 0.0
        %1939 = vmatprep.subr.mxu0 0.0
        %1940 = vmatpush1.msra.mxu0 0.0
        %1941 = vmatprep.subr.mxu0 0.0
        %1942 = vmatpush1.msra.mxu0 0.0
        %1943 = vmatprep.subr.mxu0 0.0
        %1944 = vmatpush1.msra.mxu0 0.0
        %1945 = vmatprep.subr.mxu0 0.0
        %1946 = vmatpush1.msra.mxu0 0.0
        %1947 = vmatprep.subr.mxu0 0.0
        %1948 = vmatpush1.msra.mxu0 0.0
        %1949 = vmatprep.subr.mxu0 0.0
        %1950 = vmatpush1.msra.mxu0 0.0
        %1951 = vmatprep.subr.mxu0 0.0
        %1952 = vmatpush1.msra.mxu0 0.0
        %1953 = vmatprep.subr.mxu0 0.0
        %v1954 = vand.u32 %v234, 4294901760
        %1955 = vmatpush1.msra.mxu0 %v1954
        %1956 = vmatprep.subr.mxu0 0.0
        %v1957 = vand.u32 %v233, 4294901760
        %1958 = vmatpush1.msra.mxu0 %v1957
        %1959 = vmatprep.subr.mxu0 0.0
        %v1960 = vand.u32 %v232, 4294901760
        %1961 = vmatpush1.msra.mxu0 %v1960
        %1962 = vmatprep.subr.mxu0 0.0
        %v1963 = vand.u32 %v231, 4294901760
        %1964 = vmatpush1.msra.mxu0 %v1963
        %1965 = vmatprep.subr.mxu0 0.0
        %v1966 = vand.u32 %v230, 4294901760
        %1967 = vmatpush1.msra.mxu0 %v1966
        %1968 = vmatprep.subr.mxu0 0.0
        %v1969 = vand.u32 %v229, 4294901760
        %1970 = vmatpush1.msra.mxu0 %v1969
        %1971 = vmatprep.subr.mxu0 0.0
        %v1972 = vand.u32 %v228, 4294901760
        %1973 = vmatpush1.msra.mxu0 %v1972
        %1974 = vmatprep.subr.mxu0 0.0
        %v1975 = vand.u32 %v227, 4294901760
        %1976 = vmatpush1.msra.mxu0 %v1975
        %1977 = vmatprep.subr.mxu0 0.0
        %1978 = vmatpush2.msra.mxu0 0.0
        %1979 = vmatprep.subr.mxu0 0.0
        %1980 = vmatpush2.msra.mxu0 0.0
        %1981 = vmatprep.subr.mxu0 0.0
        %1982 = vmatpush2.msra.mxu0 0.0
        %1983 = vmatprep.subr.mxu0 0.0
        %1984 = vmatpush2.msra.mxu0 0.0
        %1985 = vmatprep.subr.mxu0 0.0
        %1986 = vmatpush2.msra.mxu0 0.0
        %1987 = vmatprep.subr.mxu0 0.0
        %1988 = vmatpush2.msra.mxu0 0.0
        %1989 = vmatprep.subr.mxu0 0.0
        %1990 = vmatpush2.msra.mxu0 0.0
        %1991 = vmatprep.subr.mxu0 0.0
        %1992 = vmatpush2.msra.mxu0 0.0
        %1993 = vmatprep.subr.mxu0 0.0
        %1994 = vmatpush2.msra.mxu0 0.0
        %1995 = vmatprep.subr.mxu0 0.0
        %1996 = vmatpush2.msra.mxu0 0.0
        %1997 = vmatprep.subr.mxu0 0.0
        %1998 = vmatpush2.msra.mxu0 0.0
        %1999 = vmatprep.subr.mxu0 0.0
        %2000 = vmatpush2.msra.mxu0 0.0
        %2001 = vmatprep.subr.mxu0 0.0
        %2002 = vmatpush2.msra.mxu0 0.0
        %2003 = vmatprep.subr.mxu0 0.0
        %2004 = vmatpush2.msra.mxu0 0.0
        %2005 = vmatprep.subr.mxu0 0.0
        %2006 = vmatpush2.msra.mxu0 0.0
        %2007 = vmatprep.subr.mxu0 0.0
        %2008 = vmatpush2.msra.mxu0 0.0
        %2009 = vmatprep.mubr.f32.mxu0 0.0
        %v2010 = vand.u32 %v237, 4294901760
        %2011 = vmatmul.mubr.f32.gmra.mxu0 %v2010
        %v2012 = vpop.f32.mrf.mxu0
        %v2013 = vadd.f32 %v1748, %v2012
        %v2014 = vpop.f32.mrf.mxu0
        %2015 = vmatprep.mubr.f32.mxu0 0.0
        %v2016 = vand.u32 %v240, 4294901760
        %2017 = vmatmul.mubr.f32.gmra.mxu0 %v2016
        %v2018 = vpop.f32.mrf.mxu0
        %v2019 = vadd.f32 %v1754, %v2018
        %v2020 = vpop.f32.mrf.mxu0
        %2021 = vmatprep.mubr.f32.mxu0 0.0
        %v2022 = vand.u32 %v243, 4294901760
        %2023 = vmatmul.mubr.f32.gmra.mxu0 %v2022
        %v2024 = vpop.f32.mrf.mxu0
        %v2025 = vadd.f32 %v1760, %v2024
        %v2026 = vpop.f32.mrf.mxu0
        %2027 = vmatprep.mubr.f32.mxu0 0.0
        %v2028 = vand.u32 %v246, 4294901760
        %2029 = vmatmul.mubr.f32.gmra.mxu0 %v2028
        %v2030 = vpop.f32.mrf.mxu0
        %v2031 = vadd.f32 %v1766, %v2030
        %v2032 = vpop.f32.mrf.mxu0
        %2033 = vmatprep.mubr.f32.mxu0 0.0
        %v2034 = vand.u32 %v249, 4294901760
        %2035 = vmatmul.mubr.f32.gmra.mxu0 %v2034
        %v2036 = vpop.f32.mrf.mxu0
        %v2037 = vadd.f32 %v1772, %v2036
        %v2038 = vpop.f32.mrf.mxu0
        %2039 = vmatprep.mubr.f32.mxu0 0.0
        %v2040 = vand.u32 %v252, 4294901760
        %2041 = vmatmul.mubr.f32.gmra.mxu0 %v2040
        %v2042 = vpop.f32.mrf.mxu0
        %v2043 = vadd.f32 %v1778, %v2042
        %v2044 = vpop.f32.mrf.mxu0
        %2045 = vmatprep.mubr.f32.mxu0 0.0
        %v2046 = vand.u32 %v255, 4294901760
        %2047 = vmatmul.mubr.f32.gmra.mxu0 %v2046
        %v2048 = vpop.f32.mrf.mxu0
        %v2049 = vadd.f32 %v1784, %v2048
        %v2050 = vpop.f32.mrf.mxu0
        %2051 = vmatprep.mubr.f32.mxu0 0.0
        %v2052 = vand.u32 %v258, 4294901760
        %2053 = vmatmul.mubr.f32.gmra.mxu0 %v2052
        %v2054 = vpop.f32.mrf.mxu0
        %v2055 = vadd.f32 %v1790, %v2054
        %v2056 = vpop.f32.mrf.mxu0
        %2057 = vmatprep.mubr.f32.mxu0 0.0
        %v2058 = vand.u32 %v261, 4294901760
        %2059 = vmatmul.mubr.f32.gmra.mxu0 %v2058
        %v2060 = vpop.f32.mrf.mxu0
        %v2061 = vadd.f32 %v1796, %v2060
        %v2062 = vpop.f32.mrf.mxu0
        %2063 = vmatprep.mubr.f32.mxu0 0.0
        %v2064 = vand.u32 %v264, 4294901760
        %2065 = vmatmul.mubr.f32.gmra.mxu0 %v2064
        %v2066 = vpop.f32.mrf.mxu0
        %v2067 = vadd.f32 %v1802, %v2066
        %v2068 = vpop.f32.mrf.mxu0
        %2069 = vmatprep.mubr.f32.mxu0 0.0
        %v2070 = vand.u32 %v267, 4294901760
        %2071 = vmatmul.mubr.f32.gmra.mxu0 %v2070
        %v2072 = vpop.f32.mrf.mxu0
        %v2073 = vadd.f32 %v1808, %v2072
        %v2074 = vpop.f32.mrf.mxu0
        %2075 = vmatprep.mubr.f32.mxu0 0.0
        %v2076 = vand.u32 %v270, 4294901760
        %2077 = vmatmul.mubr.f32.gmra.mxu0 %v2076
        %v2078 = vpop.f32.mrf.mxu0
        %v2079 = vadd.f32 %v1814, %v2078
        %v2080 = vpop.f32.mrf.mxu0
        %2081 = vmatprep.mubr.f32.mxu0 0.0
        %v2082 = vand.u32 %v273, 4294901760
        %2083 = vmatmul.mubr.f32.gmra.mxu0 %v2082
        %v2084 = vpop.f32.mrf.mxu0
        %v2085 = vadd.f32 %v1820, %v2084
        %v2086 = vpop.f32.mrf.mxu0
        %2087 = vmatprep.mubr.f32.mxu0 0.0
        %v2088 = vand.u32 %v276, 4294901760
        %2089 = vmatmul.mubr.f32.gmra.mxu0 %v2088
        %v2090 = vpop.f32.mrf.mxu0
        %v2091 = vadd.f32 %v1826, %v2090
        %v2092 = vpop.f32.mrf.mxu0
        %2093 = vmatprep.mubr.f32.mxu0 0.0
        %v2094 = vand.u32 %v279, 4294901760
        %2095 = vmatmul.mubr.f32.gmra.mxu0 %v2094
        %v2096 = vpop.f32.mrf.mxu0
        %v2097 = vadd.f32 %v1832, %v2096
        %v2098 = vpop.f32.mrf.mxu0
        %2099 = vmatprep.mubr.f32.mxu0 0.0
        %v2100 = vand.u32 %v282, 4294901760
        %2101 = vmatmul.mubr.f32.gmra.mxu0 %v2100
        %v2102 = vpop.f32.mrf.mxu0
        %v2103 = vadd.f32 %v1838, %v2102
        %v2104 = vpop.f32.mrf.mxu0
        %2105 = vmatprep.mubr.f32.mxu0 0.0
        %v2106 = vand.u32 %v285, 4294901760
        %2107 = vmatmul.mubr.f32.gmra.mxu0 %v2106
        %v2108 = vpop.f32.mrf.mxu0
        %v2109 = vadd.f32 %v1844, %v2108
        %v2110 = vpop.f32.mrf.mxu0
        %2111 = vmatprep.mubr.f32.mxu0 0.0
        %v2112 = vand.u32 %v288, 4294901760
        %2113 = vmatmul.mubr.f32.gmra.mxu0 %v2112
        %v2114 = vpop.f32.mrf.mxu0
        %v2115 = vadd.f32 %v1850, %v2114
        %v2116 = vpop.f32.mrf.mxu0
        %2117 = vmatprep.mubr.f32.mxu0 0.0
        %v2118 = vand.u32 %v291, 4294901760
        %2119 = vmatmul.mubr.f32.gmra.mxu0 %v2118
        %v2120 = vpop.f32.mrf.mxu0
        %v2121 = vadd.f32 %v1856, %v2120
        %v2122 = vpop.f32.mrf.mxu0
        %2123 = vmatprep.mubr.f32.mxu0 0.0
        %v2124 = vand.u32 %v294, 4294901760
        %2125 = vmatmul.mubr.f32.gmra.mxu0 %v2124
        %v2126 = vpop.f32.mrf.mxu0
        %v2127 = vadd.f32 %v1862, %v2126
        %v2128 = vpop.f32.mrf.mxu0
        %2129 = vmatprep.mubr.f32.mxu0 0.0
        %v2130 = vand.u32 %v297, 4294901760
        %2131 = vmatmul.mubr.f32.gmra.mxu0 %v2130
        %v2132 = vpop.f32.mrf.mxu0
        %v2133 = vadd.f32 %v1868, %v2132
        %v2134 = vpop.f32.mrf.mxu0
        %2135 = vmatprep.mubr.f32.mxu0 0.0
        %v2136 = vand.u32 %v300, 4294901760
        %2137 = vmatmul.mubr.f32.gmra.mxu0 %v2136
        %v2138 = vpop.f32.mrf.mxu0
        %v2139 = vadd.f32 %v1874, %v2138
        %v2140 = vpop.f32.mrf.mxu0
        %2141 = vmatprep.mubr.f32.mxu0 0.0
        %v2142 = vand.u32 %v303, 4294901760
        %2143 = vmatmul.mubr.f32.gmra.mxu0 %v2142
        %v2144 = vpop.f32.mrf.mxu0
        %v2145 = vadd.f32 %v1880, %v2144
        %v2146 = vpop.f32.mrf.mxu0
        %2147 = vmatprep.mubr.f32.mxu0 0.0
        %v2148 = vand.u32 %v306, 4294901760
        %2149 = vmatmul.mubr.f32.gmra.mxu0 %v2148
        %v2150 = vpop.f32.mrf.mxu0
        %v2151 = vadd.f32 %v1886, %v2150
        %v2152 = vpop.f32.mrf.mxu0
        %2153 = vmatprep.mubr.f32.mxu0 0.0
        %v2154 = vand.u32 %v309, 4294901760
        %2155 = vmatmul.mubr.f32.gmra.mxu0 %v2154
        %v2156 = vpop.f32.mrf.mxu0
        %v2157 = vadd.f32 %v1892, %v2156
        %v2158 = vpop.f32.mrf.mxu0
        %2159 = vmatprep.mubr.f32.mxu0 0.0
        %v2160 = vand.u32 %v312, 4294901760
        %2161 = vmatmul.mubr.f32.gmra.mxu0 %v2160
        %v2162 = vpop.f32.mrf.mxu0
        %v2163 = vadd.f32 %v1898, %v2162
        %v2164 = vpop.f32.mrf.mxu0
        %2165 = vmatprep.mubr.f32.mxu0 0.0
        %v2166 = vand.u32 %v315, 4294901760
        %2167 = vmatmul.mubr.f32.gmra.mxu0 %v2166
        %v2168 = vpop.f32.mrf.mxu0
        %v2169 = vadd.f32 %v1904, %v2168
        %v2170 = vpop.f32.mrf.mxu0
        %2171 = vmatprep.mubr.f32.mxu0 0.0
        %v2172 = vand.u32 %v318, 4294901760
        %2173 = vmatmul.mubr.f32.gmra.mxu0 %v2172
        %v2174 = vpop.f32.mrf.mxu0
        %v2175 = vadd.f32 %v1910, %v2174
        %v2176 = vpop.f32.mrf.mxu0
        %2177 = vmatprep.mubr.f32.mxu0 0.0
        %v2178 = vand.u32 %v321, 4294901760
        %2179 = vmatmul.mubr.f32.gmra.mxu0 %v2178
        %v2180 = vpop.f32.mrf.mxu0
        %v2181 = vadd.f32 %v1916, %v2180
        %v2182 = vpop.f32.mrf.mxu0
        %2183 = vmatprep.mubr.f32.mxu0 0.0
        %v2184 = vand.u32 %v324, 4294901760
        %2185 = vmatmul.mubr.f32.gmra.mxu0 %v2184
        %v2186 = vpop.f32.mrf.mxu0
        %v2187 = vadd.f32 %v1922, %v2186
        %v2188 = vpop.f32.mrf.mxu0
        %2189 = vmatprep.mubr.f32.mxu0 0.0
        %v2190 = vand.u32 %v327, 4294901760
        %2191 = vmatmul.mubr.f32.gmra.mxu0 %v2190
        %v2192 = vpop.f32.mrf.mxu0
        %v2193 = vadd.f32 %v1928, %v2192
        %v2194 = vpop.f32.mrf.mxu0
        %2195 = vmatprep.mubr.f32.mxu0 0.0
        %v2196 = vand.u32 %v330, 4294901760
        %2197 = vmatmul.mubr.f32.gmra.mxu0 %v2196
        %v2198 = vpop.f32.mrf.mxu0
        %v2199 = vadd.f32 %v1934, %v2198
        %v2200 = vpop.f32.mrf.mxu0
        %2201 = vdwg.mxu0
        %v2202 = vld [vmem:[%s1] sm:$0xff]
        %v2203 = vld [vmem:[%s1 + $0x8] sm:$0xff]
        %v2204 = vld [vmem:[%s1 + $0x10] sm:$0xff]
        %v2205 = vld [vmem:[%s1 + $0x18] sm:$0xff]
        %v2206 = vld [vmem:[%s1 + $0x20] sm:$0xff]
        %v2207 = vld [vmem:[%s1 + $0x28] sm:$0xff]
        %v2208 = vld [vmem:[%s1 + $0x30] sm:$0xff]
        %v2209 = vld [vmem:[%s1 + $0x38] sm:$0xff]
        %v2210 = vld [vmem:[%s1 + $0x40] sm:$0xff]
        %v2211 = vld [vmem:[%s1 + $0x48] sm:$0xff]
        %v2212 = vld [vmem:[%s1 + $0x50] sm:$0xff]
        %v2213 = vld [vmem:[%s1 + $0x58] sm:$0xff]
        %v2214 = vld [vmem:[%s1 + $0x60] sm:$0xff]
        %v2215 = vld [vmem:[%s1 + $0x68] sm:$0xff]
        %v2216 = vld [vmem:[%s1 + $0x70] sm:$0xff]
        %v2217 = vld [vmem:[%s1 + $0x78] sm:$0xff]
        %v2218 = vld [vmem:[%s3] sm:$0x1]
        %v2220 = vlaneseq
        %v2221 = vshrl.u32 %v2220, 7
        %v2222 = vsub.s32 0, %v2221
        %v2223 = vrot.slane %v2218, %v2222
        %2225 = vmatprep.subr.mxu0 0.0
        %v2226 = vand.u32 %v2103, 4294901760
        %2227 = vmatpush1.msra.mxu0 %v2226
        %2228 = vmatprep.subr.mxu0 0.0
        %v2229 = vand.u32 %v2097, 4294901760
        %2230 = vmatpush1.msra.mxu0 %v2229
        %2231 = vmatprep.subr.mxu0 0.0
        %v2232 = vand.u32 %v2091, 4294901760
        %2233 = vmatpush1.msra.mxu0 %v2232
        %2234 = vmatprep.subr.mxu0 0.0
        %v2235 = vand.u32 %v2085, 4294901760
        %2236 = vmatpush1.msra.mxu0 %v2235
        %2237 = vmatprep.subr.mxu0 0.0
        %v2238 = vand.u32 %v2079, 4294901760
        %2239 = vmatpush1.msra.mxu0 %v2238
        %2240 = vmatprep.subr.mxu0 0.0
        %v2241 = vand.u32 %v2073, 4294901760
        %2242 = vmatpush1.msra.mxu0 %v2241
        %2243 = vmatprep.subr.mxu0 0.0
        %v2244 = vand.u32 %v2067, 4294901760
        %2245 = vmatpush1.msra.mxu0 %v2244
        %2246 = vmatprep.subr.mxu0 0.0
        %v2247 = vand.u32 %v2061, 4294901760
        %2248 = vmatpush1.msra.mxu0 %v2247
        %2249 = vmatprep.subr.mxu0 0.0
        %v2250 = vand.u32 %v2055, 4294901760
        %2251 = vmatpush1.msra.mxu0 %v2250
        %2252 = vmatprep.subr.mxu0 0.0
        %v2253 = vand.u32 %v2049, 4294901760
        %2254 = vmatpush1.msra.mxu0 %v2253
        %2255 = vmatprep.subr.mxu0 0.0
        %v2256 = vand.u32 %v2043, 4294901760
        %2257 = vmatpush1.msra.mxu0 %v2256
        %2258 = vmatprep.subr.mxu0 0.0
        %v2259 = vand.u32 %v2037, 4294901760
        %2260 = vmatpush1.msra.mxu0 %v2259
        %2261 = vmatprep.subr.mxu0 0.0
        %v2262 = vand.u32 %v2031, 4294901760
        %2263 = vmatpush1.msra.mxu0 %v2262
        %2264 = vmatprep.subr.mxu0 0.0
        %v2265 = vand.u32 %v2025, 4294901760
        %2266 = vmatpush1.msra.mxu0 %v2265
        %2267 = vmatprep.subr.mxu0 0.0
        %v2268 = vand.u32 %v2019, 4294901760
        %2269 = vmatpush1.msra.mxu0 %v2268
        %2270 = vmatprep.subr.mxu0 0.0
        %v2271 = vand.u32 %v2013, 4294901760
        %2272 = vmatpush1.msra.mxu0 %v2271
        %2273 = vmatprep.subr.mxu0 0.0
        %v2274 = vand.u32 %v2199, 4294901760
        %2275 = vmatpush2.msra.mxu0 %v2274
        %2276 = vmatprep.subr.mxu0 0.0
        %v2277 = vand.u32 %v2193, 4294901760
        %2278 = vmatpush2.msra.mxu0 %v2277
        %2279 = vmatprep.subr.mxu0 0.0
        %v2280 = vand.u32 %v2187, 4294901760
        %2281 = vmatpush2.msra.mxu0 %v2280
        %2282 = vmatprep.subr.mxu0 0.0
        %v2283 = vand.u32 %v2181, 4294901760
        %2284 = vmatpush2.msra.mxu0 %v2283
        %2285 = vmatprep.subr.mxu0 0.0
        %v2286 = vand.u32 %v2175, 4294901760
        %2287 = vmatpush2.msra.mxu0 %v2286
        %2288 = vmatprep.subr.mxu0 0.0
        %v2289 = vand.u32 %v2169, 4294901760
        %2290 = vmatpush2.msra.mxu0 %v2289
        %2291 = vmatprep.subr.mxu0 0.0
        %v2292 = vand.u32 %v2163, 4294901760
        %2293 = vmatpush2.msra.mxu0 %v2292
        %2294 = vmatprep.subr.mxu0 0.0
        %v2295 = vand.u32 %v2157, 4294901760
        %2296 = vmatpush2.msra.mxu0 %v2295
        %2297 = vmatprep.subr.mxu0 0.0
        %v2298 = vand.u32 %v2151, 4294901760
        %2299 = vmatpush2.msra.mxu0 %v2298
        %2300 = vmatprep.subr.mxu0 0.0
        %v2301 = vand.u32 %v2145, 4294901760
        %2302 = vmatpush2.msra.mxu0 %v2301
        %2303 = vmatprep.subr.mxu0 0.0
        %v2304 = vand.u32 %v2139, 4294901760
        %2305 = vmatpush2.msra.mxu0 %v2304
        %2306 = vmatprep.subr.mxu0 0.0
        %v2307 = vand.u32 %v2133, 4294901760
        %2308 = vmatpush2.msra.mxu0 %v2307
        %2309 = vmatprep.subr.mxu0 0.0
        %v2310 = vand.u32 %v2127, 4294901760
        %2311 = vmatpush2.msra.mxu0 %v2310
        %2312 = vmatprep.subr.mxu0 0.0
        %v2313 = vand.u32 %v2121, 4294901760
        %2314 = vmatpush2.msra.mxu0 %v2313
        %2315 = vmatprep.subr.mxu0 0.0
        %v2316 = vand.u32 %v2115, 4294901760
        %2317 = vmatpush2.msra.mxu0 %v2316
        %2318 = vmatprep.subr.mxu0 0.0
        %v2319 = vand.u32 %v2109, 4294901760
        %2320 = vmatpush2.msra.mxu0 %v2319
        %v2321 = vand.u32 %v2203, 4294901760
        %v2322 = vsub.f32 %v2203, %v2321
        %v2323 = vand.u32 %v2322, 4294901760
        %v2324 = vsub.f32 %v2322, %v2323
        %v2325 = vand.u32 %v2324, 4294901760
        %2326 = vmatprep.mubr.f32.mxu0 %v2325
        %v2327 = vand.u32 %v2202, 4294901760
        %v2328 = vsub.f32 %v2202, %v2327
        %v2329 = vand.u32 %v2328, 4294901760
        %v2330 = vsub.f32 %v2328, %v2329
        %v2331 = vand.u32 %v2330, 4294901760
        %2332 = vmatmul.mubr.f32.gmra.mxu0 %v2331
        %v2333 = vpop.f32.mrf.mxu0
        %v2334 = vadd.f32 %v2223, %v2333
        %v2335 = vpop.f32.mrf.mxu0
        %v2336 = vand.u32 %v2205, 4294901760
        %v2337 = vsub.f32 %v2205, %v2336
        %v2338 = vand.u32 %v2337, 4294901760
        %v2339 = vsub.f32 %v2337, %v2338
        %v2340 = vand.u32 %v2339, 4294901760
        %2341 = vmatprep.mubr.f32.mxu0 %v2340
        %v2342 = vand.u32 %v2204, 4294901760
        %v2343 = vsub.f32 %v2204, %v2342
        %v2344 = vand.u32 %v2343, 4294901760
        %v2345 = vsub.f32 %v2343, %v2344
        %v2346 = vand.u32 %v2345, 4294901760
        %2347 = vmatmul.mubr.f32.gmra.mxu0 %v2346
        %v2348 = vpop.f32.mrf.mxu0
        %v2349 = vadd.f32 %v2223, %v2348
        %v2350 = vpop.f32.mrf.mxu0
        %v2351 = vand.u32 %v2207, 4294901760
        %v2352 = vsub.f32 %v2207, %v2351
        %v2353 = vand.u32 %v2352, 4294901760
        %v2354 = vsub.f32 %v2352, %v2353
        %v2355 = vand.u32 %v2354, 4294901760
        %2356 = vmatprep.mubr.f32.mxu0 %v2355
        %v2357 = vand.u32 %v2206, 4294901760
        %v2358 = vsub.f32 %v2206, %v2357
        %v2359 = vand.u32 %v2358, 4294901760
        %v2360 = vsub.f32 %v2358, %v2359
        %v2361 = vand.u32 %v2360, 4294901760
        %2362 = vmatmul.mubr.f32.gmra.mxu0 %v2361
        %v2363 = vpop.f32.mrf.mxu0
        %v2364 = vadd.f32 %v2223, %v2363
        %v2365 = vpop.f32.mrf.mxu0
        %v2366 = vand.u32 %v2209, 4294901760
        %v2367 = vsub.f32 %v2209, %v2366
        %v2368 = vand.u32 %v2367, 4294901760
        %v2369 = vsub.f32 %v2367, %v2368
        %v2370 = vand.u32 %v2369, 4294901760
        %2371 = vmatprep.mubr.f32.mxu0 %v2370
        %v2372 = vand.u32 %v2208, 4294901760
        %v2373 = vsub.f32 %v2208, %v2372
        %v2374 = vand.u32 %v2373, 4294901760
        %v2375 = vsub.f32 %v2373, %v2374
        %v2376 = vand.u32 %v2375, 4294901760
        %2377 = vmatmul.mubr.f32.gmra.mxu0 %v2376
        %v2378 = vpop.f32.mrf.mxu0
        %v2379 = vadd.f32 %v2223, %v2378
        %v2380 = vpop.f32.mrf.mxu0
        %v2381 = vand.u32 %v2211, 4294901760
        %v2382 = vsub.f32 %v2211, %v2381
        %v2383 = vand.u32 %v2382, 4294901760
        %v2384 = vsub.f32 %v2382, %v2383
        %v2385 = vand.u32 %v2384, 4294901760
        %2386 = vmatprep.mubr.f32.mxu0 %v2385
        %v2387 = vand.u32 %v2210, 4294901760
        %v2388 = vsub.f32 %v2210, %v2387
        %v2389 = vand.u32 %v2388, 4294901760
        %v2390 = vsub.f32 %v2388, %v2389
        %v2391 = vand.u32 %v2390, 4294901760
        %2392 = vmatmul.mubr.f32.gmra.mxu0 %v2391
        %v2393 = vpop.f32.mrf.mxu0
        %v2394 = vadd.f32 %v2223, %v2393
        %v2395 = vpop.f32.mrf.mxu0
        %v2396 = vand.u32 %v2213, 4294901760
        %v2397 = vsub.f32 %v2213, %v2396
        %v2398 = vand.u32 %v2397, 4294901760
        %v2399 = vsub.f32 %v2397, %v2398
        %v2400 = vand.u32 %v2399, 4294901760
        %2401 = vmatprep.mubr.f32.mxu0 %v2400
        %v2402 = vand.u32 %v2212, 4294901760
        %v2403 = vsub.f32 %v2212, %v2402
        %v2404 = vand.u32 %v2403, 4294901760
        %v2405 = vsub.f32 %v2403, %v2404
        %v2406 = vand.u32 %v2405, 4294901760
        %2407 = vmatmul.mubr.f32.gmra.mxu0 %v2406
        %v2408 = vpop.f32.mrf.mxu0
        %v2409 = vadd.f32 %v2223, %v2408
        %v2410 = vpop.f32.mrf.mxu0
        %v2411 = vand.u32 %v2215, 4294901760
        %v2412 = vsub.f32 %v2215, %v2411
        %v2413 = vand.u32 %v2412, 4294901760
        %v2414 = vsub.f32 %v2412, %v2413
        %v2415 = vand.u32 %v2414, 4294901760
        %2416 = vmatprep.mubr.f32.mxu0 %v2415
        %v2417 = vand.u32 %v2214, 4294901760
        %v2418 = vsub.f32 %v2214, %v2417
        %v2419 = vand.u32 %v2418, 4294901760
        %v2420 = vsub.f32 %v2418, %v2419
        %v2421 = vand.u32 %v2420, 4294901760
        %2422 = vmatmul.mubr.f32.gmra.mxu0 %v2421
        %v2423 = vpop.f32.mrf.mxu0
        %v2424 = vadd.f32 %v2223, %v2423
        %v2425 = vpop.f32.mrf.mxu0
        %v2426 = vand.u32 %v2217, 4294901760
        %v2427 = vsub.f32 %v2217, %v2426
        %v2428 = vand.u32 %v2427, 4294901760
        %v2429 = vsub.f32 %v2427, %v2428
        %v2430 = vand.u32 %v2429, 4294901760
        %2431 = vmatprep.mubr.f32.mxu0 %v2430
        %v2432 = vand.u32 %v2216, 4294901760
        %v2433 = vsub.f32 %v2216, %v2432
        %v2434 = vand.u32 %v2433, 4294901760
        %v2435 = vsub.f32 %v2433, %v2434
        %v2436 = vand.u32 %v2435, 4294901760
        %2437 = vmatmul.mubr.f32.gmra.mxu0 %v2436
        %v2438 = vpop.f32.mrf.mxu0
        %v2439 = vadd.f32 %v2223, %v2438
        %v2440 = vpop.f32.mrf.mxu0
        %2441 = vdwg.mxu0
        %2442 = vmatprep.subr.mxu0 0.0
        %v2443 = vand.u32 %v2103, 4294901760
        %v2444 = vsub.f32 %v2103, %v2443
        %v2445 = vand.u32 %v2444, 4294901760
        %v2446 = vsub.f32 %v2444, %v2445
        %v2447 = vand.u32 %v2446, 4294901760
        %2448 = vmatpush1.msra.mxu0 %v2447
        %2449 = vmatprep.subr.mxu0 0.0
        %v2450 = vand.u32 %v2097, 4294901760
        %v2451 = vsub.f32 %v2097, %v2450
        %v2452 = vand.u32 %v2451, 4294901760
        %v2453 = vsub.f32 %v2451, %v2452
        %v2454 = vand.u32 %v2453, 4294901760
        %2455 = vmatpush1.msra.mxu0 %v2454
        %2456 = vmatprep.subr.mxu0 0.0
        %v2457 = vand.u32 %v2091, 4294901760
        %v2458 = vsub.f32 %v2091, %v2457
        %v2459 = vand.u32 %v2458, 4294901760
        %v2460 = vsub.f32 %v2458, %v2459
        %v2461 = vand.u32 %v2460, 4294901760
        %2462 = vmatpush1.msra.mxu0 %v2461
        %2463 = vmatprep.subr.mxu0 0.0
        %v2464 = vand.u32 %v2085, 4294901760
        %v2465 = vsub.f32 %v2085, %v2464
        %v2466 = vand.u32 %v2465, 4294901760
        %v2467 = vsub.f32 %v2465, %v2466
        %v2468 = vand.u32 %v2467, 4294901760
        %2469 = vmatpush1.msra.mxu0 %v2468
        %2470 = vmatprep.subr.mxu0 0.0
        %v2471 = vand.u32 %v2079, 4294901760
        %v2472 = vsub.f32 %v2079, %v2471
        %v2473 = vand.u32 %v2472, 4294901760
        %v2474 = vsub.f32 %v2472, %v2473
        %v2475 = vand.u32 %v2474, 4294901760
        %2476 = vmatpush1.msra.mxu0 %v2475
        %2477 = vmatprep.subr.mxu0 0.0
        %v2478 = vand.u32 %v2073, 4294901760
        %v2479 = vsub.f32 %v2073, %v2478
        %v2480 = vand.u32 %v2479, 4294901760
        %v2481 = vsub.f32 %v2479, %v2480
        %v2482 = vand.u32 %v2481, 4294901760
        %2483 = vmatpush1.msra.mxu0 %v2482
        %2484 = vmatprep.subr.mxu0 0.0
        %v2485 = vand.u32 %v2067, 4294901760
        %v2486 = vsub.f32 %v2067, %v2485
        %v2487 = vand.u32 %v2486, 4294901760
        %v2488 = vsub.f32 %v2486, %v2487
        %v2489 = vand.u32 %v2488, 4294901760
        %2490 = vmatpush1.msra.mxu0 %v2489
        %2491 = vmatprep.subr.mxu0 0.0
        %v2492 = vand.u32 %v2061, 4294901760
        %v2493 = vsub.f32 %v2061, %v2492
        %v2494 = vand.u32 %v2493, 4294901760
        %v2495 = vsub.f32 %v2493, %v2494
        %v2496 = vand.u32 %v2495, 4294901760
        %2497 = vmatpush1.msra.mxu0 %v2496
        %2498 = vmatprep.subr.mxu0 0.0
        %v2499 = vand.u32 %v2055, 4294901760
        %v2500 = vsub.f32 %v2055, %v2499
        %v2501 = vand.u32 %v2500, 4294901760
        %v2502 = vsub.f32 %v2500, %v2501
        %v2503 = vand.u32 %v2502, 4294901760
        %2504 = vmatpush1.msra.mxu0 %v2503
        %2505 = vmatprep.subr.mxu0 0.0
        %v2506 = vand.u32 %v2049, 4294901760
        %v2507 = vsub.f32 %v2049, %v2506
        %v2508 = vand.u32 %v2507, 4294901760
        %v2509 = vsub.f32 %v2507, %v2508
        %v2510 = vand.u32 %v2509, 4294901760
        %2511 = vmatpush1.msra.mxu0 %v2510
        %2512 = vmatprep.subr.mxu0 0.0
        %v2513 = vand.u32 %v2043, 4294901760
        %v2514 = vsub.f32 %v2043, %v2513
        %v2515 = vand.u32 %v2514, 4294901760
        %v2516 = vsub.f32 %v2514, %v2515
        %v2517 = vand.u32 %v2516, 4294901760
        %2518 = vmatpush1.msra.mxu0 %v2517
        %2519 = vmatprep.subr.mxu0 0.0
        %v2520 = vand.u32 %v2037, 4294901760
        %v2521 = vsub.f32 %v2037, %v2520
        %v2522 = vand.u32 %v2521, 4294901760
        %v2523 = vsub.f32 %v2521, %v2522
        %v2524 = vand.u32 %v2523, 4294901760
        %2525 = vmatpush1.msra.mxu0 %v2524
        %2526 = vmatprep.subr.mxu0 0.0
        %v2527 = vand.u32 %v2031, 4294901760
        %v2528 = vsub.f32 %v2031, %v2527
        %v2529 = vand.u32 %v2528, 4294901760
        %v2530 = vsub.f32 %v2528, %v2529
        %v2531 = vand.u32 %v2530, 4294901760
        %2532 = vmatpush1.msra.mxu0 %v2531
        %2533 = vmatprep.subr.mxu0 0.0
        %v2534 = vand.u32 %v2025, 4294901760
        %v2535 = vsub.f32 %v2025, %v2534
        %v2536 = vand.u32 %v2535, 4294901760
        %v2537 = vsub.f32 %v2535, %v2536
        %v2538 = vand.u32 %v2537, 4294901760
        %2539 = vmatpush1.msra.mxu0 %v2538
        %2540 = vmatprep.subr.mxu0 0.0
        %v2541 = vand.u32 %v2019, 4294901760
        %v2542 = vsub.f32 %v2019, %v2541
        %v2543 = vand.u32 %v2542, 4294901760
        %v2544 = vsub.f32 %v2542, %v2543
        %v2545 = vand.u32 %v2544, 4294901760
        %2546 = vmatpush1.msra.mxu0 %v2545
        %2547 = vmatprep.subr.mxu0 0.0
        %v2548 = vand.u32 %v2013, 4294901760
        %v2549 = vsub.f32 %v2013, %v2548
        %v2550 = vand.u32 %v2549, 4294901760
        %v2551 = vsub.f32 %v2549, %v2550
        %v2552 = vand.u32 %v2551, 4294901760
        %2553 = vmatpush1.msra.mxu0 %v2552
        %2554 = vmatprep.subr.mxu0 0.0
        %v2555 = vand.u32 %v2199, 4294901760
        %v2556 = vsub.f32 %v2199, %v2555
        %v2557 = vand.u32 %v2556, 4294901760
        %v2558 = vsub.f32 %v2556, %v2557
        %v2559 = vand.u32 %v2558, 4294901760
        %2560 = vmatpush2.msra.mxu0 %v2559
        %2561 = vmatprep.subr.mxu0 0.0
        %v2562 = vand.u32 %v2193, 4294901760
        %v2563 = vsub.f32 %v2193, %v2562
        %v2564 = vand.u32 %v2563, 4294901760
        %v2565 = vsub.f32 %v2563, %v2564
        %v2566 = vand.u32 %v2565, 4294901760
        %2567 = vmatpush2.msra.mxu0 %v2566
        %2568 = vmatprep.subr.mxu0 0.0
        %v2569 = vand.u32 %v2187, 4294901760
        %v2570 = vsub.f32 %v2187, %v2569
        %v2571 = vand.u32 %v2570, 4294901760
        %v2572 = vsub.f32 %v2570, %v2571
        %v2573 = vand.u32 %v2572, 4294901760
        %2574 = vmatpush2.msra.mxu0 %v2573
        %2575 = vmatprep.subr.mxu0 0.0
        %v2576 = vand.u32 %v2181, 4294901760
        %v2577 = vsub.f32 %v2181, %v2576
        %v2578 = vand.u32 %v2577, 4294901760
        %v2579 = vsub.f32 %v2577, %v2578
        %v2580 = vand.u32 %v2579, 4294901760
        %2581 = vmatpush2.msra.mxu0 %v2580
        %2582 = vmatprep.subr.mxu0 0.0
        %v2583 = vand.u32 %v2175, 4294901760
        %v2584 = vsub.f32 %v2175, %v2583
        %v2585 = vand.u32 %v2584, 4294901760
        %v2586 = vsub.f32 %v2584, %v2585
        %v2587 = vand.u32 %v2586, 4294901760
        %2588 = vmatpush2.msra.mxu0 %v2587
        %2589 = vmatprep.subr.mxu0 0.0
        %v2590 = vand.u32 %v2169, 4294901760
        %v2591 = vsub.f32 %v2169, %v2590
        %v2592 = vand.u32 %v2591, 4294901760
        %v2593 = vsub.f32 %v2591, %v2592
        %v2594 = vand.u32 %v2593, 4294901760
        %2595 = vmatpush2.msra.mxu0 %v2594
        %2596 = vmatprep.subr.mxu0 0.0
        %v2597 = vand.u32 %v2163, 4294901760
        %v2598 = vsub.f32 %v2163, %v2597
        %v2599 = vand.u32 %v2598, 4294901760
        %v2600 = vsub.f32 %v2598, %v2599
        %v2601 = vand.u32 %v2600, 4294901760
        %2602 = vmatpush2.msra.mxu0 %v2601
        %2603 = vmatprep.subr.mxu0 0.0
        %v2604 = vand.u32 %v2157, 4294901760
        %v2605 = vsub.f32 %v2157, %v2604
        %v2606 = vand.u32 %v2605, 4294901760
        %v2607 = vsub.f32 %v2605, %v2606
        %v2608 = vand.u32 %v2607, 4294901760
        %2609 = vmatpush2.msra.mxu0 %v2608
        %2610 = vmatprep.subr.mxu0 0.0
        %v2611 = vand.u32 %v2151, 4294901760
        %v2612 = vsub.f32 %v2151, %v2611
        %v2613 = vand.u32 %v2612, 4294901760
        %v2614 = vsub.f32 %v2612, %v2613
        %v2615 = vand.u32 %v2614, 4294901760
        %2616 = vmatpush2.msra.mxu0 %v2615
        %2617 = vmatprep.subr.mxu0 0.0
        %v2618 = vand.u32 %v2145, 4294901760
        %v2619 = vsub.f32 %v2145, %v2618
        %v2620 = vand.u32 %v2619, 4294901760
        %v2621 = vsub.f32 %v2619, %v2620
        %v2622 = vand.u32 %v2621, 4294901760
        %2623 = vmatpush2.msra.mxu0 %v2622
        %2624 = vmatprep.subr.mxu0 0.0
        %v2625 = vand.u32 %v2139, 4294901760
        %v2626 = vsub.f32 %v2139, %v2625
        %v2627 = vand.u32 %v2626, 4294901760
        %v2628 = vsub.f32 %v2626, %v2627
        %v2629 = vand.u32 %v2628, 4294901760
        %2630 = vmatpush2.msra.mxu0 %v2629
        %2631 = vmatprep.subr.mxu0 0.0
        %v2632 = vand.u32 %v2133, 4294901760
        %v2633 = vsub.f32 %v2133, %v2632
        %v2634 = vand.u32 %v2633, 4294901760
        %v2635 = vsub.f32 %v2633, %v2634
        %v2636 = vand.u32 %v2635, 4294901760
        %2637 = vmatpush2.msra.mxu0 %v2636
        %2638 = vmatprep.subr.mxu0 0.0
        %v2639 = vand.u32 %v2127, 4294901760
        %v2640 = vsub.f32 %v2127, %v2639
        %v2641 = vand.u32 %v2640, 4294901760
        %v2642 = vsub.f32 %v2640, %v2641
        %v2643 = vand.u32 %v2642, 4294901760
        %2644 = vmatpush2.msra.mxu0 %v2643
        %2645 = vmatprep.subr.mxu0 0.0
        %v2646 = vand.u32 %v2121, 4294901760
        %v2647 = vsub.f32 %v2121, %v2646
        %v2648 = vand.u32 %v2647, 4294901760
        %v2649 = vsub.f32 %v2647, %v2648
        %v2650 = vand.u32 %v2649, 4294901760
        %2651 = vmatpush2.msra.mxu0 %v2650
        %2652 = vmatprep.subr.mxu0 0.0
        %v2653 = vand.u32 %v2115, 4294901760
        %v2654 = vsub.f32 %v2115, %v2653
        %v2655 = vand.u32 %v2654, 4294901760
        %v2656 = vsub.f32 %v2654, %v2655
        %v2657 = vand.u32 %v2656, 4294901760
        %2658 = vmatpush2.msra.mxu0 %v2657
        %2659 = vmatprep.subr.mxu0 0.0
        %v2660 = vand.u32 %v2109, 4294901760
        %v2661 = vsub.f32 %v2109, %v2660
        %v2662 = vand.u32 %v2661, 4294901760
        %v2663 = vsub.f32 %v2661, %v2662
        %v2664 = vand.u32 %v2663, 4294901760
        %2665 = vmatpush2.msra.mxu0 %v2664
        %v2666 = vand.u32 %v2203, 4294901760
        %2667 = vmatprep.mubr.f32.mxu0 %v2666
        %v2668 = vand.u32 %v2202, 4294901760
        %2669 = vmatmul.mubr.f32.gmra.mxu0 %v2668
        %v2670 = vpop.f32.mrf.mxu0
        %v2671 = vadd.f32 %v2334, %v2670
        %v2672 = vpop.f32.mrf.mxu0
        %v2673 = vand.u32 %v2205, 4294901760
        %2674 = vmatprep.mubr.f32.mxu0 %v2673
        %v2675 = vand.u32 %v2204, 4294901760
        %2676 = vmatmul.mubr.f32.gmra.mxu0 %v2675
        %v2677 = vpop.f32.mrf.mxu0
        %v2678 = vadd.f32 %v2349, %v2677
        %v2679 = vpop.f32.mrf.mxu0
        %v2680 = vand.u32 %v2207, 4294901760
        %2681 = vmatprep.mubr.f32.mxu0 %v2680
        %v2682 = vand.u32 %v2206, 4294901760
        %2683 = vmatmul.mubr.f32.gmra.mxu0 %v2682
        %v2684 = vpop.f32.mrf.mxu0
        %v2685 = vadd.f32 %v2364, %v2684
        %v2686 = vpop.f32.mrf.mxu0
        %v2687 = vand.u32 %v2209, 4294901760
        %2688 = vmatprep.mubr.f32.mxu0 %v2687
        %v2689 = vand.u32 %v2208, 4294901760
        %2690 = vmatmul.mubr.f32.gmra.mxu0 %v2689
        %v2691 = vpop.f32.mrf.mxu0
        %v2692 = vadd.f32 %v2379, %v2691
        %v2693 = vpop.f32.mrf.mxu0
        %v2694 = vand.u32 %v2211, 4294901760
        %2695 = vmatprep.mubr.f32.mxu0 %v2694
        %v2696 = vand.u32 %v2210, 4294901760
        %2697 = vmatmul.mubr.f32.gmra.mxu0 %v2696
        %v2698 = vpop.f32.mrf.mxu0
        %v2699 = vadd.f32 %v2394, %v2698
        %v2700 = vpop.f32.mrf.mxu0
        %v2701 = vand.u32 %v2213, 4294901760
        %2702 = vmatprep.mubr.f32.mxu0 %v2701
        %v2703 = vand.u32 %v2212, 4294901760
        %2704 = vmatmul.mubr.f32.gmra.mxu0 %v2703
        %v2705 = vpop.f32.mrf.mxu0
        %v2706 = vadd.f32 %v2409, %v2705
        %v2707 = vpop.f32.mrf.mxu0
        %v2708 = vand.u32 %v2215, 4294901760
        %2709 = vmatprep.mubr.f32.mxu0 %v2708
        %v2710 = vand.u32 %v2214, 4294901760
        %2711 = vmatmul.mubr.f32.gmra.mxu0 %v2710
        %v2712 = vpop.f32.mrf.mxu0
        %v2713 = vadd.f32 %v2424, %v2712
        %v2714 = vpop.f32.mrf.mxu0
        %v2715 = vand.u32 %v2217, 4294901760
        %2716 = vmatprep.mubr.f32.mxu0 %v2715
        %v2717 = vand.u32 %v2216, 4294901760
        %2718 = vmatmul.mubr.f32.gmra.mxu0 %v2717
        %v2719 = vpop.f32.mrf.mxu0
        %v2720 = vadd.f32 %v2439, %v2719
        %v2721 = vpop.f32.mrf.mxu0
        %2722 = vdwg.mxu0
        %2723 = vmatprep.subr.mxu0 0.0
        %v2724 = vand.u32 %v2103, 4294901760
        %v2725 = vsub.f32 %v2103, %v2724
        %2726 = vmatpush1.msra.mxu0 %v2725
        %2727 = vmatprep.subr.mxu0 0.0
        %v2728 = vand.u32 %v2097, 4294901760
        %v2729 = vsub.f32 %v2097, %v2728
        %2730 = vmatpush1.msra.mxu0 %v2729
        %2731 = vmatprep.subr.mxu0 0.0
        %v2732 = vand.u32 %v2091, 4294901760
        %v2733 = vsub.f32 %v2091, %v2732
        %2734 = vmatpush1.msra.mxu0 %v2733
        %2735 = vmatprep.subr.mxu0 0.0
        %v2736 = vand.u32 %v2085, 4294901760
        %v2737 = vsub.f32 %v2085, %v2736
        %2738 = vmatpush1.msra.mxu0 %v2737
        %2739 = vmatprep.subr.mxu0 0.0
        %v2740 = vand.u32 %v2079, 4294901760
        %v2741 = vsub.f32 %v2079, %v2740
        %2742 = vmatpush1.msra.mxu0 %v2741
        %2743 = vmatprep.subr.mxu0 0.0
        %v2744 = vand.u32 %v2073, 4294901760
        %v2745 = vsub.f32 %v2073, %v2744
        %2746 = vmatpush1.msra.mxu0 %v2745
        %2747 = vmatprep.subr.mxu0 0.0
        %v2748 = vand.u32 %v2067, 4294901760
        %v2749 = vsub.f32 %v2067, %v2748
        %2750 = vmatpush1.msra.mxu0 %v2749
        %2751 = vmatprep.subr.mxu0 0.0
        %v2752 = vand.u32 %v2061, 4294901760
        %v2753 = vsub.f32 %v2061, %v2752
        %2754 = vmatpush1.msra.mxu0 %v2753
        %2755 = vmatprep.subr.mxu0 0.0
        %v2756 = vand.u32 %v2055, 4294901760
        %v2757 = vsub.f32 %v2055, %v2756
        %2758 = vmatpush1.msra.mxu0 %v2757
        %2759 = vmatprep.subr.mxu0 0.0
        %v2760 = vand.u32 %v2049, 4294901760
        %v2761 = vsub.f32 %v2049, %v2760
        %2762 = vmatpush1.msra.mxu0 %v2761
        %2763 = vmatprep.subr.mxu0 0.0
        %v2764 = vand.u32 %v2043, 4294901760
        %v2765 = vsub.f32 %v2043, %v2764
        %2766 = vmatpush1.msra.mxu0 %v2765
        %2767 = vmatprep.subr.mxu0 0.0
        %v2768 = vand.u32 %v2037, 4294901760
        %v2769 = vsub.f32 %v2037, %v2768
        %2770 = vmatpush1.msra.mxu0 %v2769
        %2771 = vmatprep.subr.mxu0 0.0
        %v2772 = vand.u32 %v2031, 4294901760
        %v2773 = vsub.f32 %v2031, %v2772
        %2774 = vmatpush1.msra.mxu0 %v2773
        %2775 = vmatprep.subr.mxu0 0.0
        %v2776 = vand.u32 %v2025, 4294901760
        %v2777 = vsub.f32 %v2025, %v2776
        %2778 = vmatpush1.msra.mxu0 %v2777
        %2779 = vmatprep.subr.mxu0 0.0
        %v2780 = vand.u32 %v2019, 4294901760
        %v2781 = vsub.f32 %v2019, %v2780
        %2782 = vmatpush1.msra.mxu0 %v2781
        %2783 = vmatprep.subr.mxu0 0.0
        %v2784 = vand.u32 %v2013, 4294901760
        %v2785 = vsub.f32 %v2013, %v2784
        %2786 = vmatpush1.msra.mxu0 %v2785
        %2787 = vmatprep.subr.mxu0 0.0
        %v2788 = vand.u32 %v2199, 4294901760
        %v2789 = vsub.f32 %v2199, %v2788
        %2790 = vmatpush2.msra.mxu0 %v2789
        %2791 = vmatprep.subr.mxu0 0.0
        %v2792 = vand.u32 %v2193, 4294901760
        %v2793 = vsub.f32 %v2193, %v2792
        %2794 = vmatpush2.msra.mxu0 %v2793
        %2795 = vmatprep.subr.mxu0 0.0
        %v2796 = vand.u32 %v2187, 4294901760
        %v2797 = vsub.f32 %v2187, %v2796
        %2798 = vmatpush2.msra.mxu0 %v2797
        %2799 = vmatprep.subr.mxu0 0.0
        %v2800 = vand.u32 %v2181, 4294901760
        %v2801 = vsub.f32 %v2181, %v2800
        %2802 = vmatpush2.msra.mxu0 %v2801
        %2803 = vmatprep.subr.mxu0 0.0
        %v2804 = vand.u32 %v2175, 4294901760
        %v2805 = vsub.f32 %v2175, %v2804
        %2806 = vmatpush2.msra.mxu0 %v2805
        %2807 = vmatprep.subr.mxu0 0.0
        %v2808 = vand.u32 %v2169, 4294901760
        %v2809 = vsub.f32 %v2169, %v2808
        %2810 = vmatpush2.msra.mxu0 %v2809
        %2811 = vmatprep.subr.mxu0 0.0
        %v2812 = vand.u32 %v2163, 4294901760
        %v2813 = vsub.f32 %v2163, %v2812
        %2814 = vmatpush2.msra.mxu0 %v2813
        %2815 = vmatprep.subr.mxu0 0.0
        %v2816 = vand.u32 %v2157, 4294901760
        %v2817 = vsub.f32 %v2157, %v2816
        %2818 = vmatpush2.msra.mxu0 %v2817
        %2819 = vmatprep.subr.mxu0 0.0
        %v2820 = vand.u32 %v2151, 4294901760
        %v2821 = vsub.f32 %v2151, %v2820
        %2822 = vmatpush2.msra.mxu0 %v2821
        %2823 = vmatprep.subr.mxu0 0.0
        %v2824 = vand.u32 %v2145, 4294901760
        %v2825 = vsub.f32 %v2145, %v2824
        %2826 = vmatpush2.msra.mxu0 %v2825
        %2827 = vmatprep.subr.mxu0 0.0
        %v2828 = vand.u32 %v2139, 4294901760
        %v2829 = vsub.f32 %v2139, %v2828
        %2830 = vmatpush2.msra.mxu0 %v2829
        %2831 = vmatprep.subr.mxu0 0.0
        %v2832 = vand.u32 %v2133, 4294901760
        %v2833 = vsub.f32 %v2133, %v2832
        %2834 = vmatpush2.msra.mxu0 %v2833
        %2835 = vmatprep.subr.mxu0 0.0
        %v2836 = vand.u32 %v2127, 4294901760
        %v2837 = vsub.f32 %v2127, %v2836
        %2838 = vmatpush2.msra.mxu0 %v2837
        %2839 = vmatprep.subr.mxu0 0.0
        %v2840 = vand.u32 %v2121, 4294901760
        %v2841 = vsub.f32 %v2121, %v2840
        %2842 = vmatpush2.msra.mxu0 %v2841
        %2843 = vmatprep.subr.mxu0 0.0
        %v2844 = vand.u32 %v2115, 4294901760
        %v2845 = vsub.f32 %v2115, %v2844
        %2846 = vmatpush2.msra.mxu0 %v2845
        %2847 = vmatprep.subr.mxu0 0.0
        %v2848 = vand.u32 %v2109, 4294901760
        %v2849 = vsub.f32 %v2109, %v2848
        %2850 = vmatpush2.msra.mxu0 %v2849
        %v2851 = vand.u32 %v2203, 4294901760
        %v2852 = vsub.f32 %v2203, %v2851
        %2853 = vmatprep.mubr.f32.mxu0 %v2852
        %v2854 = vand.u32 %v2202, 4294901760
        %v2855 = vsub.f32 %v2202, %v2854
        %2856 = vmatmul.mubr.f32.gmra.mxu0 %v2855
        %v2857 = vpop.f32.mrf.mxu0
        %v2858 = vadd.f32 %v2671, %v2857
        %v2859 = vpop.f32.mrf.mxu0
        %v2860 = vand.u32 %v2205, 4294901760
        %v2861 = vsub.f32 %v2205, %v2860
        %2862 = vmatprep.mubr.f32.mxu0 %v2861
        %v2863 = vand.u32 %v2204, 4294901760
        %v2864 = vsub.f32 %v2204, %v2863
        %2865 = vmatmul.mubr.f32.gmra.mxu0 %v2864
        %v2866 = vpop.f32.mrf.mxu0
        %v2867 = vadd.f32 %v2678, %v2866
        %v2868 = vpop.f32.mrf.mxu0
        %v2869 = vand.u32 %v2207, 4294901760
        %v2870 = vsub.f32 %v2207, %v2869
        %2871 = vmatprep.mubr.f32.mxu0 %v2870
        %v2872 = vand.u32 %v2206, 4294901760
        %v2873 = vsub.f32 %v2206, %v2872
        %2874 = vmatmul.mubr.f32.gmra.mxu0 %v2873
        %v2875 = vpop.f32.mrf.mxu0
        %v2876 = vadd.f32 %v2685, %v2875
        %v2877 = vpop.f32.mrf.mxu0
        %v2878 = vand.u32 %v2209, 4294901760
        %v2879 = vsub.f32 %v2209, %v2878
        %2880 = vmatprep.mubr.f32.mxu0 %v2879
        %v2881 = vand.u32 %v2208, 4294901760
        %v2882 = vsub.f32 %v2208, %v2881
        %2883 = vmatmul.mubr.f32.gmra.mxu0 %v2882
        %v2884 = vpop.f32.mrf.mxu0
        %v2885 = vadd.f32 %v2692, %v2884
        %v2886 = vpop.f32.mrf.mxu0
        %v2887 = vand.u32 %v2211, 4294901760
        %v2888 = vsub.f32 %v2211, %v2887
        %2889 = vmatprep.mubr.f32.mxu0 %v2888
        %v2890 = vand.u32 %v2210, 4294901760
        %v2891 = vsub.f32 %v2210, %v2890
        %2892 = vmatmul.mubr.f32.gmra.mxu0 %v2891
        %v2893 = vpop.f32.mrf.mxu0
        %v2894 = vadd.f32 %v2699, %v2893
        %v2895 = vpop.f32.mrf.mxu0
        %v2896 = vand.u32 %v2213, 4294901760
        %v2897 = vsub.f32 %v2213, %v2896
        %2898 = vmatprep.mubr.f32.mxu0 %v2897
        %v2899 = vand.u32 %v2212, 4294901760
        %v2900 = vsub.f32 %v2212, %v2899
        %2901 = vmatmul.mubr.f32.gmra.mxu0 %v2900
        %v2902 = vpop.f32.mrf.mxu0
        %v2903 = vadd.f32 %v2706, %v2902
        %v2904 = vpop.f32.mrf.mxu0
        %v2905 = vand.u32 %v2215, 4294901760
        %v2906 = vsub.f32 %v2215, %v2905
        %2907 = vmatprep.mubr.f32.mxu0 %v2906
        %v2908 = vand.u32 %v2214, 4294901760
        %v2909 = vsub.f32 %v2214, %v2908
        %2910 = vmatmul.mubr.f32.gmra.mxu0 %v2909
        %v2911 = vpop.f32.mrf.mxu0
        %v2912 = vadd.f32 %v2713, %v2911
        %v2913 = vpop.f32.mrf.mxu0
        %v2914 = vand.u32 %v2217, 4294901760
        %v2915 = vsub.f32 %v2217, %v2914
        %2916 = vmatprep.mubr.f32.mxu0 %v2915
        %v2917 = vand.u32 %v2216, 4294901760
        %v2918 = vsub.f32 %v2216, %v2917
        %2919 = vmatmul.mubr.f32.gmra.mxu0 %v2918
        %v2920 = vpop.f32.mrf.mxu0
        %v2921 = vadd.f32 %v2720, %v2920
        %v2922 = vpop.f32.mrf.mxu0
        %2923 = vdwg.mxu0
        %2924 = vmatprep.subr.mxu0 0.0
        %v2925 = vand.u32 %v2103, 4294901760
        %2926 = vmatpush1.msra.mxu0 %v2925
        %2927 = vmatprep.subr.mxu0 0.0
        %v2928 = vand.u32 %v2097, 4294901760
        %2929 = vmatpush1.msra.mxu0 %v2928
        %2930 = vmatprep.subr.mxu0 0.0
        %v2931 = vand.u32 %v2091, 4294901760
        %2932 = vmatpush1.msra.mxu0 %v2931
        %2933 = vmatprep.subr.mxu0 0.0
        %v2934 = vand.u32 %v2085, 4294901760
        %2935 = vmatpush1.msra.mxu0 %v2934
        %2936 = vmatprep.subr.mxu0 0.0
        %v2937 = vand.u32 %v2079, 4294901760
        %2938 = vmatpush1.msra.mxu0 %v2937
        %2939 = vmatprep.subr.mxu0 0.0
        %v2940 = vand.u32 %v2073, 4294901760
        %2941 = vmatpush1.msra.mxu0 %v2940
        %2942 = vmatprep.subr.mxu0 0.0
        %v2943 = vand.u32 %v2067, 4294901760
        %2944 = vmatpush1.msra.mxu0 %v2943
        %2945 = vmatprep.subr.mxu0 0.0
        %v2946 = vand.u32 %v2061, 4294901760
        %2947 = vmatpush1.msra.mxu0 %v2946
        %2948 = vmatprep.subr.mxu0 0.0
        %v2949 = vand.u32 %v2055, 4294901760
        %2950 = vmatpush1.msra.mxu0 %v2949
        %2951 = vmatprep.subr.mxu0 0.0
        %v2952 = vand.u32 %v2049, 4294901760
        %2953 = vmatpush1.msra.mxu0 %v2952
        %2954 = vmatprep.subr.mxu0 0.0
        %v2955 = vand.u32 %v2043, 4294901760
        %2956 = vmatpush1.msra.mxu0 %v2955
        %2957 = vmatprep.subr.mxu0 0.0
        %v2958 = vand.u32 %v2037, 4294901760
        %2959 = vmatpush1.msra.mxu0 %v2958
        %2960 = vmatprep.subr.mxu0 0.0
        %v2961 = vand.u32 %v2031, 4294901760
        %2962 = vmatpush1.msra.mxu0 %v2961
        %2963 = vmatprep.subr.mxu0 0.0
        %v2964 = vand.u32 %v2025, 4294901760
        %2965 = vmatpush1.msra.mxu0 %v2964
        %2966 = vmatprep.subr.mxu0 0.0
        %v2967 = vand.u32 %v2019, 4294901760
        %2968 = vmatpush1.msra.mxu0 %v2967
        %2969 = vmatprep.subr.mxu0 0.0
        %v2970 = vand.u32 %v2013, 4294901760
        %2971 = vmatpush1.msra.mxu0 %v2970
        %2972 = vmatprep.subr.mxu0 0.0
        %v2973 = vand.u32 %v2199, 4294901760
        %2974 = vmatpush2.msra.mxu0 %v2973
        %2975 = vmatprep.subr.mxu0 0.0
        %v2976 = vand.u32 %v2193, 4294901760
        %2977 = vmatpush2.msra.mxu0 %v2976
        %2978 = vmatprep.subr.mxu0 0.0
        %v2979 = vand.u32 %v2187, 4294901760
        %2980 = vmatpush2.msra.mxu0 %v2979
        %2981 = vmatprep.subr.mxu0 0.0
        %v2982 = vand.u32 %v2181, 4294901760
        %2983 = vmatpush2.msra.mxu0 %v2982
        %2984 = vmatprep.subr.mxu0 0.0
        %v2985 = vand.u32 %v2175, 4294901760
        %2986 = vmatpush2.msra.mxu0 %v2985
        %2987 = vmatprep.subr.mxu0 0.0
        %v2988 = vand.u32 %v2169, 4294901760
        %2989 = vmatpush2.msra.mxu0 %v2988
        %2990 = vmatprep.subr.mxu0 0.0
        %v2991 = vand.u32 %v2163, 4294901760
        %2992 = vmatpush2.msra.mxu0 %v2991
        %2993 = vmatprep.subr.mxu0 0.0
        %v2994 = vand.u32 %v2157, 4294901760
        %2995 = vmatpush2.msra.mxu0 %v2994
        %2996 = vmatprep.subr.mxu0 0.0
        %v2997 = vand.u32 %v2151, 4294901760
        %2998 = vmatpush2.msra.mxu0 %v2997
        %2999 = vmatprep.subr.mxu0 0.0
        %v3000 = vand.u32 %v2145, 4294901760
        %3001 = vmatpush2.msra.mxu0 %v3000
        %3002 = vmatprep.subr.mxu0 0.0
        %v3003 = vand.u32 %v2139, 4294901760
        %3004 = vmatpush2.msra.mxu0 %v3003
        %3005 = vmatprep.subr.mxu0 0.0
        %v3006 = vand.u32 %v2133, 4294901760
        %3007 = vmatpush2.msra.mxu0 %v3006
        %3008 = vmatprep.subr.mxu0 0.0
        %v3009 = vand.u32 %v2127, 4294901760
        %3010 = vmatpush2.msra.mxu0 %v3009
        %3011 = vmatprep.subr.mxu0 0.0
        %v3012 = vand.u32 %v2121, 4294901760
        %3013 = vmatpush2.msra.mxu0 %v3012
        %3014 = vmatprep.subr.mxu0 0.0
        %v3015 = vand.u32 %v2115, 4294901760
        %3016 = vmatpush2.msra.mxu0 %v3015
        %3017 = vmatprep.subr.mxu0 0.0
        %v3018 = vand.u32 %v2109, 4294901760
        %3019 = vmatpush2.msra.mxu0 %v3018
        %v3020 = vand.u32 %v2203, 4294901760
        %v3021 = vsub.f32 %v2203, %v3020
        %v3022 = vand.u32 %v3021, 4294901760
        %3023 = vmatprep.mubr.f32.mxu0 %v3022
        %v3024 = vand.u32 %v2202, 4294901760
        %v3025 = vsub.f32 %v2202, %v3024
        %v3026 = vand.u32 %v3025, 4294901760
        %3027 = vmatmul.mubr.f32.gmra.mxu0 %v3026
        %v3028 = vpop.f32.mrf.mxu0
        %v3029 = vadd.f32 %v2858, %v3028
        %v3030 = vpop.f32.mrf.mxu0
        %v3031 = vand.u32 %v2205, 4294901760
        %v3032 = vsub.f32 %v2205, %v3031
        %v3033 = vand.u32 %v3032, 4294901760
        %3034 = vmatprep.mubr.f32.mxu0 %v3033
        %v3035 = vand.u32 %v2204, 4294901760
        %v3036 = vsub.f32 %v2204, %v3035
        %v3037 = vand.u32 %v3036, 4294901760
        %3038 = vmatmul.mubr.f32.gmra.mxu0 %v3037
        %v3039 = vpop.f32.mrf.mxu0
        %v3040 = vadd.f32 %v2867, %v3039
        %v3041 = vpop.f32.mrf.mxu0
        %v3042 = vand.u32 %v2207, 4294901760
        %v3043 = vsub.f32 %v2207, %v3042
        %v3044 = vand.u32 %v3043, 4294901760
        %3045 = vmatprep.mubr.f32.mxu0 %v3044
        %v3046 = vand.u32 %v2206, 4294901760
        %v3047 = vsub.f32 %v2206, %v3046
        %v3048 = vand.u32 %v3047, 4294901760
        %3049 = vmatmul.mubr.f32.gmra.mxu0 %v3048
        %v3050 = vpop.f32.mrf.mxu0
        %v3051 = vadd.f32 %v2876, %v3050
        %v3052 = vpop.f32.mrf.mxu0
        %v3053 = vand.u32 %v2209, 4294901760
        %v3054 = vsub.f32 %v2209, %v3053
        %v3055 = vand.u32 %v3054, 4294901760
        %3056 = vmatprep.mubr.f32.mxu0 %v3055
        %v3057 = vand.u32 %v2208, 4294901760
        %v3058 = vsub.f32 %v2208, %v3057
        %v3059 = vand.u32 %v3058, 4294901760
        %3060 = vmatmul.mubr.f32.gmra.mxu0 %v3059
        %v3061 = vpop.f32.mrf.mxu0
        %v3062 = vadd.f32 %v2885, %v3061
        %v3063 = vpop.f32.mrf.mxu0
        %v3064 = vand.u32 %v2211, 4294901760
        %v3065 = vsub.f32 %v2211, %v3064
        %v3066 = vand.u32 %v3065, 4294901760
        %3067 = vmatprep.mubr.f32.mxu0 %v3066
        %v3068 = vand.u32 %v2210, 4294901760
        %v3069 = vsub.f32 %v2210, %v3068
        %v3070 = vand.u32 %v3069, 4294901760
        %3071 = vmatmul.mubr.f32.gmra.mxu0 %v3070
        %v3072 = vpop.f32.mrf.mxu0
        %v3073 = vadd.f32 %v2894, %v3072
        %v3074 = vpop.f32.mrf.mxu0
        %v3075 = vand.u32 %v2213, 4294901760
        %v3076 = vsub.f32 %v2213, %v3075
        %v3077 = vand.u32 %v3076, 4294901760
        %3078 = vmatprep.mubr.f32.mxu0 %v3077
        %v3079 = vand.u32 %v2212, 4294901760
        %v3080 = vsub.f32 %v2212, %v3079
        %v3081 = vand.u32 %v3080, 4294901760
        %3082 = vmatmul.mubr.f32.gmra.mxu0 %v3081
        %v3083 = vpop.f32.mrf.mxu0
        %v3084 = vadd.f32 %v2903, %v3083
        %v3085 = vpop.f32.mrf.mxu0
        %v3086 = vand.u32 %v2215, 4294901760
        %v3087 = vsub.f32 %v2215, %v3086
        %v3088 = vand.u32 %v3087, 4294901760
        %3089 = vmatprep.mubr.f32.mxu0 %v3088
        %v3090 = vand.u32 %v2214, 4294901760
        %v3091 = vsub.f32 %v2214, %v3090
        %v3092 = vand.u32 %v3091, 4294901760
        %3093 = vmatmul.mubr.f32.gmra.mxu0 %v3092
        %v3094 = vpop.f32.mrf.mxu0
        %v3095 = vadd.f32 %v2912, %v3094
        %v3096 = vpop.f32.mrf.mxu0
        %v3097 = vand.u32 %v2217, 4294901760
        %v3098 = vsub.f32 %v2217, %v3097
        %v3099 = vand.u32 %v3098, 4294901760
        %3100 = vmatprep.mubr.f32.mxu0 %v3099
        %v3101 = vand.u32 %v2216, 4294901760
        %v3102 = vsub.f32 %v2216, %v3101
        %v3103 = vand.u32 %v3102, 4294901760
        %3104 = vmatmul.mubr.f32.gmra.mxu0 %v3103
        %v3105 = vpop.f32.mrf.mxu0
        %v3106 = vadd.f32 %v2921, %v3105
        %v3107 = vpop.f32.mrf.mxu0
        %3108 = vdwg.mxu0
        %3109 = vmatprep.subr.mxu0 0.0
        %v3110 = vand.u32 %v2103, 4294901760
        %v3111 = vsub.f32 %v2103, %v3110
        %v3112 = vand.u32 %v3111, 4294901760
        %3113 = vmatpush1.msra.mxu0 %v3112
        %3114 = vmatprep.subr.mxu0 0.0
        %v3115 = vand.u32 %v2097, 4294901760
        %v3116 = vsub.f32 %v2097, %v3115
        %v3117 = vand.u32 %v3116, 4294901760
        %3118 = vmatpush1.msra.mxu0 %v3117
        %3119 = vmatprep.subr.mxu0 0.0
        %v3120 = vand.u32 %v2091, 4294901760
        %v3121 = vsub.f32 %v2091, %v3120
        %v3122 = vand.u32 %v3121, 4294901760
        %3123 = vmatpush1.msra.mxu0 %v3122
        %3124 = vmatprep.subr.mxu0 0.0
        %v3125 = vand.u32 %v2085, 4294901760
        %v3126 = vsub.f32 %v2085, %v3125
        %v3127 = vand.u32 %v3126, 4294901760
        %3128 = vmatpush1.msra.mxu0 %v3127
        %3129 = vmatprep.subr.mxu0 0.0
        %v3130 = vand.u32 %v2079, 4294901760
        %v3131 = vsub.f32 %v2079, %v3130
        %v3132 = vand.u32 %v3131, 4294901760
        %3133 = vmatpush1.msra.mxu0 %v3132
        %3134 = vmatprep.subr.mxu0 0.0
        %v3135 = vand.u32 %v2073, 4294901760
        %v3136 = vsub.f32 %v2073, %v3135
        %v3137 = vand.u32 %v3136, 4294901760
        %3138 = vmatpush1.msra.mxu0 %v3137
        %3139 = vmatprep.subr.mxu0 0.0
        %v3140 = vand.u32 %v2067, 4294901760
        %v3141 = vsub.f32 %v2067, %v3140
        %v3142 = vand.u32 %v3141, 4294901760
        %3143 = vmatpush1.msra.mxu0 %v3142
        %3144 = vmatprep.subr.mxu0 0.0
        %v3145 = vand.u32 %v2061, 4294901760
        %v3146 = vsub.f32 %v2061, %v3145
        %v3147 = vand.u32 %v3146, 4294901760
        %3148 = vmatpush1.msra.mxu0 %v3147
        %3149 = vmatprep.subr.mxu0 0.0
        %v3150 = vand.u32 %v2055, 4294901760
        %v3151 = vsub.f32 %v2055, %v3150
        %v3152 = vand.u32 %v3151, 4294901760
        %3153 = vmatpush1.msra.mxu0 %v3152
        %3154 = vmatprep.subr.mxu0 0.0
        %v3155 = vand.u32 %v2049, 4294901760
        %v3156 = vsub.f32 %v2049, %v3155
        %v3157 = vand.u32 %v3156, 4294901760
        %3158 = vmatpush1.msra.mxu0 %v3157
        %3159 = vmatprep.subr.mxu0 0.0
        %v3160 = vand.u32 %v2043, 4294901760
        %v3161 = vsub.f32 %v2043, %v3160
        %v3162 = vand.u32 %v3161, 4294901760
        %3163 = vmatpush1.msra.mxu0 %v3162
        %3164 = vmatprep.subr.mxu0 0.0
        %v3165 = vand.u32 %v2037, 4294901760
        %v3166 = vsub.f32 %v2037, %v3165
        %v3167 = vand.u32 %v3166, 4294901760
        %3168 = vmatpush1.msra.mxu0 %v3167
        %3169 = vmatprep.subr.mxu0 0.0
        %v3170 = vand.u32 %v2031, 4294901760
        %v3171 = vsub.f32 %v2031, %v3170
        %v3172 = vand.u32 %v3171, 4294901760
        %3173 = vmatpush1.msra.mxu0 %v3172
        %3174 = vmatprep.subr.mxu0 0.0
        %v3175 = vand.u32 %v2025, 4294901760
        %v3176 = vsub.f32 %v2025, %v3175
        %v3177 = vand.u32 %v3176, 4294901760
        %3178 = vmatpush1.msra.mxu0 %v3177
        %3179 = vmatprep.subr.mxu0 0.0
        %v3180 = vand.u32 %v2019, 4294901760
        %v3181 = vsub.f32 %v2019, %v3180
        %v3182 = vand.u32 %v3181, 4294901760
        %3183 = vmatpush1.msra.mxu0 %v3182
        %3184 = vmatprep.subr.mxu0 0.0
        %v3185 = vand.u32 %v2013, 4294901760
        %v3186 = vsub.f32 %v2013, %v3185
        %v3187 = vand.u32 %v3186, 4294901760
        %3188 = vmatpush1.msra.mxu0 %v3187
        %3189 = vmatprep.subr.mxu0 0.0
        %v3190 = vand.u32 %v2199, 4294901760
        %v3191 = vsub.f32 %v2199, %v3190
        %v3192 = vand.u32 %v3191, 4294901760
        %3193 = vmatpush2.msra.mxu0 %v3192
        %3194 = vmatprep.subr.mxu0 0.0
        %v3195 = vand.u32 %v2193, 4294901760
        %v3196 = vsub.f32 %v2193, %v3195
        %v3197 = vand.u32 %v3196, 4294901760
        %3198 = vmatpush2.msra.mxu0 %v3197
        %3199 = vmatprep.subr.mxu0 0.0
        %v3200 = vand.u32 %v2187, 4294901760
        %v3201 = vsub.f32 %v2187, %v3200
        %v3202 = vand.u32 %v3201, 4294901760
        %3203 = vmatpush2.msra.mxu0 %v3202
        %3204 = vmatprep.subr.mxu0 0.0
        %v3205 = vand.u32 %v2181, 4294901760
        %v3206 = vsub.f32 %v2181, %v3205
        %v3207 = vand.u32 %v3206, 4294901760
        %3208 = vmatpush2.msra.mxu0 %v3207
        %3209 = vmatprep.subr.mxu0 0.0
        %v3210 = vand.u32 %v2175, 4294901760
        %v3211 = vsub.f32 %v2175, %v3210
        %v3212 = vand.u32 %v3211, 4294901760
        %3213 = vmatpush2.msra.mxu0 %v3212
        %3214 = vmatprep.subr.mxu0 0.0
        %v3215 = vand.u32 %v2169, 4294901760
        %v3216 = vsub.f32 %v2169, %v3215
        %v3217 = vand.u32 %v3216, 4294901760
        %3218 = vmatpush2.msra.mxu0 %v3217
        %3219 = vmatprep.subr.mxu0 0.0
        %v3220 = vand.u32 %v2163, 4294901760
        %v3221 = vsub.f32 %v2163, %v3220
        %v3222 = vand.u32 %v3221, 4294901760
        %3223 = vmatpush2.msra.mxu0 %v3222
        %3224 = vmatprep.subr.mxu0 0.0
        %v3225 = vand.u32 %v2157, 4294901760
        %v3226 = vsub.f32 %v2157, %v3225
        %v3227 = vand.u32 %v3226, 4294901760
        %3228 = vmatpush2.msra.mxu0 %v3227
        %3229 = vmatprep.subr.mxu0 0.0
        %v3230 = vand.u32 %v2151, 4294901760
        %v3231 = vsub.f32 %v2151, %v3230
        %v3232 = vand.u32 %v3231, 4294901760
        %3233 = vmatpush2.msra.mxu0 %v3232
        %3234 = vmatprep.subr.mxu0 0.0
        %v3235 = vand.u32 %v2145, 4294901760
        %v3236 = vsub.f32 %v2145, %v3235
        %v3237 = vand.u32 %v3236, 4294901760
        %3238 = vmatpush2.msra.mxu0 %v3237
        %3239 = vmatprep.subr.mxu0 0.0
        %v3240 = vand.u32 %v2139, 4294901760
        %v3241 = vsub.f32 %v2139, %v3240
        %v3242 = vand.u32 %v3241, 4294901760
        %3243 = vmatpush2.msra.mxu0 %v3242
        %3244 = vmatprep.subr.mxu0 0.0
        %v3245 = vand.u32 %v2133, 4294901760
        %v3246 = vsub.f32 %v2133, %v3245
        %v3247 = vand.u32 %v3246, 4294901760
        %3248 = vmatpush2.msra.mxu0 %v3247
        %3249 = vmatprep.subr.mxu0 0.0
        %v3250 = vand.u32 %v2127, 4294901760
        %v3251 = vsub.f32 %v2127, %v3250
        %v3252 = vand.u32 %v3251, 4294901760
        %3253 = vmatpush2.msra.mxu0 %v3252
        %3254 = vmatprep.subr.mxu0 0.0
        %v3255 = vand.u32 %v2121, 4294901760
        %v3256 = vsub.f32 %v2121, %v3255
        %v3257 = vand.u32 %v3256, 4294901760
        %3258 = vmatpush2.msra.mxu0 %v3257
        %3259 = vmatprep.subr.mxu0 0.0
        %v3260 = vand.u32 %v2115, 4294901760
        %v3261 = vsub.f32 %v2115, %v3260
        %v3262 = vand.u32 %v3261, 4294901760
        %3263 = vmatpush2.msra.mxu0 %v3262
        %3264 = vmatprep.subr.mxu0 0.0
        %v3265 = vand.u32 %v2109, 4294901760
        %v3266 = vsub.f32 %v2109, %v3265
        %v3267 = vand.u32 %v3266, 4294901760
        %3268 = vmatpush2.msra.mxu0 %v3267
        %v3269 = vand.u32 %v2203, 4294901760
        %3270 = vmatprep.mubr.f32.mxu0 %v3269
        %v3271 = vand.u32 %v2202, 4294901760
        %3272 = vmatmul.mubr.f32.gmra.mxu0 %v3271
        %v3273 = vpop.f32.mrf.mxu0
        %v3274 = vadd.f32 %v3029, %v3273
        %v3275 = vpop.f32.mrf.mxu0
        %v3276 = vand.u32 %v2205, 4294901760
        %3277 = vmatprep.mubr.f32.mxu0 %v3276
        %v3278 = vand.u32 %v2204, 4294901760
        %3279 = vmatmul.mubr.f32.gmra.mxu0 %v3278
        %v3280 = vpop.f32.mrf.mxu0
        %v3281 = vadd.f32 %v3040, %v3280
        %v3282 = vpop.f32.mrf.mxu0
        %v3283 = vand.u32 %v2207, 4294901760
        %3284 = vmatprep.mubr.f32.mxu0 %v3283
        %v3285 = vand.u32 %v2206, 4294901760
        %3286 = vmatmul.mubr.f32.gmra.mxu0 %v3285
        %v3287 = vpop.f32.mrf.mxu0
        %v3288 = vadd.f32 %v3051, %v3287
        %v3289 = vpop.f32.mrf.mxu0
        %v3290 = vand.u32 %v2209, 4294901760
        %3291 = vmatprep.mubr.f32.mxu0 %v3290
        %v3292 = vand.u32 %v2208, 4294901760
        %3293 = vmatmul.mubr.f32.gmra.mxu0 %v3292
        %v3294 = vpop.f32.mrf.mxu0
        %v3295 = vadd.f32 %v3062, %v3294
        %v3296 = vpop.f32.mrf.mxu0
        %v3297 = vand.u32 %v2211, 4294901760
        %3298 = vmatprep.mubr.f32.mxu0 %v3297
        %v3299 = vand.u32 %v2210, 4294901760
        %3300 = vmatmul.mubr.f32.gmra.mxu0 %v3299
        %v3301 = vpop.f32.mrf.mxu0
        %v3302 = vadd.f32 %v3073, %v3301
        %v3303 = vpop.f32.mrf.mxu0
        %v3304 = vand.u32 %v2213, 4294901760
        %3305 = vmatprep.mubr.f32.mxu0 %v3304
        %v3306 = vand.u32 %v2212, 4294901760
        %3307 = vmatmul.mubr.f32.gmra.mxu0 %v3306
        %v3308 = vpop.f32.mrf.mxu0
        %v3309 = vadd.f32 %v3084, %v3308
        %v3310 = vpop.f32.mrf.mxu0
        %v3311 = vand.u32 %v2215, 4294901760
        %3312 = vmatprep.mubr.f32.mxu0 %v3311
        %v3313 = vand.u32 %v2214, 4294901760
        %3314 = vmatmul.mubr.f32.gmra.mxu0 %v3313
        %v3315 = vpop.f32.mrf.mxu0
        %v3316 = vadd.f32 %v3095, %v3315
        %v3317 = vpop.f32.mrf.mxu0
        %v3318 = vand.u32 %v2217, 4294901760
        %3319 = vmatprep.mubr.f32.mxu0 %v3318
        %v3320 = vand.u32 %v2216, 4294901760
        %3321 = vmatmul.mubr.f32.gmra.mxu0 %v3320
        %v3322 = vpop.f32.mrf.mxu0
        %v3323 = vadd.f32 %v3106, %v3322
        %v3324 = vpop.f32.mrf.mxu0
        %3325 = vdwg.mxu0
        %3326 = vmatprep.subr.mxu0 0.0
        %v3327 = vand.u32 %v2103, 4294901760
        %3328 = vmatpush1.msra.mxu0 %v3327
        %3329 = vmatprep.subr.mxu0 0.0
        %v3330 = vand.u32 %v2097, 4294901760
        %3331 = vmatpush1.msra.mxu0 %v3330
        %3332 = vmatprep.subr.mxu0 0.0
        %v3333 = vand.u32 %v2091, 4294901760
        %3334 = vmatpush1.msra.mxu0 %v3333
        %3335 = vmatprep.subr.mxu0 0.0
        %v3336 = vand.u32 %v2085, 4294901760
        %3337 = vmatpush1.msra.mxu0 %v3336
        %3338 = vmatprep.subr.mxu0 0.0
        %v3339 = vand.u32 %v2079, 4294901760
        %3340 = vmatpush1.msra.mxu0 %v3339
        %3341 = vmatprep.subr.mxu0 0.0
        %v3342 = vand.u32 %v2073, 4294901760
        %3343 = vmatpush1.msra.mxu0 %v3342
        %3344 = vmatprep.subr.mxu0 0.0
        %v3345 = vand.u32 %v2067, 4294901760
        %3346 = vmatpush1.msra.mxu0 %v3345
        %3347 = vmatprep.subr.mxu0 0.0
        %v3348 = vand.u32 %v2061, 4294901760
        %3349 = vmatpush1.msra.mxu0 %v3348
        %3350 = vmatprep.subr.mxu0 0.0
        %v3351 = vand.u32 %v2055, 4294901760
        %3352 = vmatpush1.msra.mxu0 %v3351
        %3353 = vmatprep.subr.mxu0 0.0
        %v3354 = vand.u32 %v2049, 4294901760
        %3355 = vmatpush1.msra.mxu0 %v3354
        %3356 = vmatprep.subr.mxu0 0.0
        %v3357 = vand.u32 %v2043, 4294901760
        %3358 = vmatpush1.msra.mxu0 %v3357
        %3359 = vmatprep.subr.mxu0 0.0
        %v3360 = vand.u32 %v2037, 4294901760
        %3361 = vmatpush1.msra.mxu0 %v3360
        %3362 = vmatprep.subr.mxu0 0.0
        %v3363 = vand.u32 %v2031, 4294901760
        %3364 = vmatpush1.msra.mxu0 %v3363
        %3365 = vmatprep.subr.mxu0 0.0
        %v3366 = vand.u32 %v2025, 4294901760
        %3367 = vmatpush1.msra.mxu0 %v3366
        %3368 = vmatprep.subr.mxu0 0.0
        %v3369 = vand.u32 %v2019, 4294901760
        %3370 = vmatpush1.msra.mxu0 %v3369
        %3371 = vmatprep.subr.mxu0 0.0
        %v3372 = vand.u32 %v2013, 4294901760
        %3373 = vmatpush1.msra.mxu0 %v3372
        %3374 = vmatprep.subr.mxu0 0.0
        %v3375 = vand.u32 %v2199, 4294901760
        %3376 = vmatpush2.msra.mxu0 %v3375
        %3377 = vmatprep.subr.mxu0 0.0
        %v3378 = vand.u32 %v2193, 4294901760
        %3379 = vmatpush2.msra.mxu0 %v3378
        %3380 = vmatprep.subr.mxu0 0.0
        %v3381 = vand.u32 %v2187, 4294901760
        %3382 = vmatpush2.msra.mxu0 %v3381
        %3383 = vmatprep.subr.mxu0 0.0
        %v3384 = vand.u32 %v2181, 4294901760
        %3385 = vmatpush2.msra.mxu0 %v3384
        %3386 = vmatprep.subr.mxu0 0.0
        %v3387 = vand.u32 %v2175, 4294901760
        %3388 = vmatpush2.msra.mxu0 %v3387
        %3389 = vmatprep.subr.mxu0 0.0
        %v3390 = vand.u32 %v2169, 4294901760
        %3391 = vmatpush2.msra.mxu0 %v3390
        %3392 = vmatprep.subr.mxu0 0.0
        %v3393 = vand.u32 %v2163, 4294901760
        %3394 = vmatpush2.msra.mxu0 %v3393
        %3395 = vmatprep.subr.mxu0 0.0
        %v3396 = vand.u32 %v2157, 4294901760
        %3397 = vmatpush2.msra.mxu0 %v3396
        %3398 = vmatprep.subr.mxu0 0.0
        %v3399 = vand.u32 %v2151, 4294901760
        %3400 = vmatpush2.msra.mxu0 %v3399
        %3401 = vmatprep.subr.mxu0 0.0
        %v3402 = vand.u32 %v2145, 4294901760
        %3403 = vmatpush2.msra.mxu0 %v3402
        %3404 = vmatprep.subr.mxu0 0.0
        %v3405 = vand.u32 %v2139, 4294901760
        %3406 = vmatpush2.msra.mxu0 %v3405
        %3407 = vmatprep.subr.mxu0 0.0
        %v3408 = vand.u32 %v2133, 4294901760
        %3409 = vmatpush2.msra.mxu0 %v3408
        %3410 = vmatprep.subr.mxu0 0.0
        %v3411 = vand.u32 %v2127, 4294901760
        %3412 = vmatpush2.msra.mxu0 %v3411
        %3413 = vmatprep.subr.mxu0 0.0
        %v3414 = vand.u32 %v2121, 4294901760
        %3415 = vmatpush2.msra.mxu0 %v3414
        %3416 = vmatprep.subr.mxu0 0.0
        %v3417 = vand.u32 %v2115, 4294901760
        %3418 = vmatpush2.msra.mxu0 %v3417
        %3419 = vmatprep.subr.mxu0 0.0
        %v3420 = vand.u32 %v2109, 4294901760
        %3421 = vmatpush2.msra.mxu0 %v3420
        %v3422 = vand.u32 %v2203, 4294901760
        %3423 = vmatprep.mubr.f32.mxu0 %v3422
        %v3424 = vand.u32 %v2202, 4294901760
        %3425 = vmatmul.mubr.f32.gmra.mxu0 %v3424
        %v3426 = vpop.f32.mrf.mxu0
        %v3427 = vadd.f32 %v3274, %v3426
        %v3428 = vpop.f32.mrf.mxu0
        %v3429 = vand.u32 %v2205, 4294901760
        %3430 = vmatprep.mubr.f32.mxu0 %v3429
        %v3431 = vand.u32 %v2204, 4294901760
        %3432 = vmatmul.mubr.f32.gmra.mxu0 %v3431
        %v3433 = vpop.f32.mrf.mxu0
        %v3434 = vadd.f32 %v3281, %v3433
        %v3435 = vpop.f32.mrf.mxu0
        %v3436 = vand.u32 %v2207, 4294901760
        %3437 = vmatprep.mubr.f32.mxu0 %v3436
        %v3438 = vand.u32 %v2206, 4294901760
        %3439 = vmatmul.mubr.f32.gmra.mxu0 %v3438
        %v3440 = vpop.f32.mrf.mxu0
        %v3441 = vadd.f32 %v3288, %v3440
        %v3442 = vpop.f32.mrf.mxu0
        %v3443 = vand.u32 %v2209, 4294901760
        %3444 = vmatprep.mubr.f32.mxu0 %v3443
        %v3445 = vand.u32 %v2208, 4294901760
        %3446 = vmatmul.mubr.f32.gmra.mxu0 %v3445
        %v3447 = vpop.f32.mrf.mxu0
        %v3448 = vadd.f32 %v3295, %v3447
        %v3449 = vpop.f32.mrf.mxu0
        %v3450 = vand.u32 %v2211, 4294901760
        %3451 = vmatprep.mubr.f32.mxu0 %v3450
        %v3452 = vand.u32 %v2210, 4294901760
        %3453 = vmatmul.mubr.f32.gmra.mxu0 %v3452
        %v3454 = vpop.f32.mrf.mxu0
        %v3455 = vadd.f32 %v3302, %v3454
        %v3456 = vpop.f32.mrf.mxu0
        %v3457 = vand.u32 %v2213, 4294901760
        %3458 = vmatprep.mubr.f32.mxu0 %v3457
        %v3459 = vand.u32 %v2212, 4294901760
        %3460 = vmatmul.mubr.f32.gmra.mxu0 %v3459
        %v3461 = vpop.f32.mrf.mxu0
        %v3462 = vadd.f32 %v3309, %v3461
        %v3463 = vpop.f32.mrf.mxu0
        %v3464 = vand.u32 %v2215, 4294901760
        %3465 = vmatprep.mubr.f32.mxu0 %v3464
        %v3466 = vand.u32 %v2214, 4294901760
        %3467 = vmatmul.mubr.f32.gmra.mxu0 %v3466
        %v3468 = vpop.f32.mrf.mxu0
        %v3469 = vadd.f32 %v3316, %v3468
        %v3470 = vpop.f32.mrf.mxu0
        %v3471 = vand.u32 %v2217, 4294901760
        %3472 = vmatprep.mubr.f32.mxu0 %v3471
        %v3473 = vand.u32 %v2216, 4294901760
        %3474 = vmatmul.mubr.f32.gmra.mxu0 %v3473
        %v3475 = vpop.f32.mrf.mxu0
        %v3476 = vadd.f32 %v3323, %v3475
        %v3477 = vpop.f32.mrf.mxu0
        %3478 = vdwg.mxu0
        %3479 = vmax.xlane.f32.xlu0 %v3427
        %v3480 = vpop.xlane.xlu0 %3479
        %3481 = vmax.xlane.f32.xlu0 %v3434
        %v3482 = vpop.xlane.xlu0 %3481
        %3483 = vmax.xlane.f32.xlu0 %v3441
        %v3484 = vpop.xlane.xlu0 %3483
        %3485 = vmax.xlane.f32.xlu0 %v3448
        %v3486 = vpop.xlane.xlu0 %3485
        %3487 = vmax.xlane.f32.xlu0 %v3455
        %v3488 = vpop.xlane.xlu0 %3487
        %3489 = vmax.xlane.f32.xlu0 %v3462
        %v3490 = vpop.xlane.xlu0 %3489
        %3491 = vmax.xlane.f32.xlu0 %v3469
        %v3492 = vpop.xlane.xlu0 %3491
        %3493 = vmax.xlane.f32.xlu0 %v3476
        %v3494 = vpop.xlane.xlu0 %3493
        %v3495 = vsub.f32 %v3427, %v3480
        %v3496 = vsub.f32 %v3434, %v3482
        %v3497 = vsub.f32 %v3441, %v3484
        %v3498 = vsub.f32 %v3448, %v3486
        %v3499 = vsub.f32 %v3455, %v3488
        %v3500 = vsub.f32 %v3462, %v3490
        %v3501 = vsub.f32 %v3469, %v3492
        %v3502 = vsub.f32 %v3476, %v3494
        %v3503 = vmul.f32 %v3495, 1.442695
        %v3504 = vpow.pop %v3503
        %v3505 = vmul.f32 %v3496, 1.442695
        %v3506 = vpow.pop %v3505
        %v3507 = vmul.f32 %v3497, 1.442695
        %v3508 = vpow.pop %v3507
        %v3509 = vmul.f32 %v3498, 1.442695
        %v3510 = vpow.pop %v3509
        %v3511 = vmul.f32 %v3499, 1.442695
        %v3512 = vpow.pop %v3511
        %v3513 = vmul.f32 %v3500, 1.442695
        %v3514 = vpow.pop %v3513
        %v3515 = vmul.f32 %v3501, 1.442695
        %v3516 = vpow.pop %v3515
        %v3517 = vmul.f32 %v3502, 1.442695
        %v3518 = vpow.pop %v3517
        %3519 = vadd.xlane.f32.xlu0 %v3504
        %v3520 = vpop.xlane.xlu0 %3519
        %3521 = vadd.xlane.f32.xlu0 %v3506
        %v3522 = vpop.xlane.xlu0 %3521
        %3523 = vadd.xlane.f32.xlu0 %v3508
        %v3524 = vpop.xlane.xlu0 %3523
        %3525 = vadd.xlane.f32.xlu0 %v3510
        %v3526 = vpop.xlane.xlu0 %3525
        %3527 = vadd.xlane.f32.xlu0 %v3512
        %v3528 = vpop.xlane.xlu0 %3527
        %3529 = vadd.xlane.f32.xlu0 %v3514
        %v3530 = vpop.xlane.xlu0 %3529
        %3531 = vadd.xlane.f32.xlu0 %v3516
        %v3532 = vpop.xlane.xlu0 %3531
        %3533 = vadd.xlane.f32.xlu0 %v3518
        %v3534 = vpop.xlane.xlu0 %3533
        %v3535 = vrcp.pop %v3520
        %v3536 = vrcp.pop %v3522
        %v3537 = vrcp.pop %v3524
        %v3538 = vrcp.pop %v3526
        %v3539 = vrcp.pop %v3528
        %v3540 = vrcp.pop %v3530
        %v3541 = vrcp.pop %v3532
        %v3542 = vrcp.pop %v3534
        %v3543 = vmul.f32 %v3504, %v3535
        %v3544 = vmul.f32 %v3506, %v3536
        %v3545 = vmul.f32 %v3508, %v3537
        %v3546 = vmul.f32 %v3510, %v3538
        %v3547 = vmul.f32 %v3512, %v3539
        %v3548 = vmul.f32 %v3514, %v3540
        %v3549 = vmul.f32 %v3516, %v3541
        %v3550 = vmul.f32 %v3518, %v3542
        %v3551 = vadd.f32 %v3543, %v3544
        %v3552 = vadd.f32 %v3551, %v3545
        %v3553 = vadd.f32 %v3552, %v3546
        %v3554 = vadd.f32 %v3553, %v3547
        %v3555 = vadd.f32 %v3554, %v3548
        %v3556 = vadd.f32 %v3555, %v3549
        %v3557 = vadd.f32 %v3556, %v3550
        %v3558 = vrot.slane %v3557, 4
        %v3559 = vadd.f32 %v3557, %v3558
        %v3560 = vrot.slane %v3559, 2
        %v3561 = vadd.f32 %v3559, %v3560
        %v3562 = vrot.slane %v3561, 1
        %v3563 = vadd.f32 %v3561, %v3562
        %v3564 = vmul.f32 %v3563, 0.015625
        %3565 = vst [vmem:[%s189] sm:$0x1] %v3564
        %s3566 = sand.u32 %s115, 1
        %s3567 = scalar_lea.sflag [#allocation3], %s3566
        %s3568 = sand.u32 %s115, 1
        %s3569 = scalar_lea.vmem [#allocation2], %s3568
        // Predicated region
        $region37: #{tpu_custom_call.1} parent=35 // pred_check
          %p3570 = pneg %p125
        $region38: #{tpu_custom_call.1} parent=35 // pred_check_branch
          %3572 = sbr.rel (%p3570) target = $region40
        $region39: #{tpu_custom_call.1} parent=35 // pred_region
          %s3574 = ssub.s32 16, 16
          %3575 = vsyncadd %s3567, %s3574
          %s3576 = smul.addr %s18, 16
          %s3577 = scalar_lea.hbm %s4, %s3576
          %s3579 = sshll.u32 %s3569, 4
          %s3580 = int_to_ptr.vmem [resolvable:$true] %s3579
          %3582 = dma.vmem_to_hbm [thread:$0]  %s3580, 16, %s3577, %s3567
        $region40: #{tpu_custom_call.1} parent=35 // pred_fallthru
          _
      $region36: #{tpu_custom_call.1} parent=5 // pred_fallthru
        _
      %p3583 = scmp.le.s32.totalorder 2, %s13
      // Predicated region
      $region41: #{tpu_custom_call.1} parent=5 // pred_check
        %p3584 = pneg %p3583
      $region42: #{tpu_custom_call.1} parent=5 // pred_check_branch
        %3586 = sbr.rel (%p3584) target = $region44
      $region43: #{tpu_custom_call.1} parent=5 // pred_region
        %s3587 = ssub.s32 %s13, 2
        // Predicated region
        $region45: #{tpu_custom_call.1} parent=43 // pred_check
          %p3588 = pneg %p131
        $region46: #{tpu_custom_call.1} parent=43 // pred_check_branch
          %3590 = sbr.rel (%p3588) target = $region48
        $region47: #{tpu_custom_call.1} parent=43 // pred_region
          %s3591 = sand.u32 %s116, 1
          %s3592 = scalar_lea.sflag [#allocation3], %s3591
          %s3593 = sand.u32 %s116, 1
          %s3594 = scalar_lea.vmem [#allocation2], %s3593
          %3595 = dma.done %s3592, 16
        $region48: #{tpu_custom_call.1} parent=43 // pred_fallthru
          _
      $region44: #{tpu_custom_call.1} parent=5 // pred_fallthru
        _
    $region6: #{tpu_custom_call.1} parent=1 // loop_footer
      %s17 = sadd.s32 1, %s13
    $region7: #{tpu_custom_call.1} parent=1 // loop_footer_branch
      %12 = sbr.rel target = $region3
    $region8: #{tpu_custom_call.1} parent=1 // loop_exit
      _
    %3596 = vsyncpa [#allocation3], 1
    %s3597 = scalar_lea.sflag [#allocation3], 1
    %3598 = vsyncpa %s3597, 1

</llo_original>
